<compile_context>
chip_gen: v7x
topology: tpu7x:2x2x1
jax: 0.10.0
libtpu: 0.0.40
codegen_flags: <defaults>
</compile_context>

<pallas_src>
import math
from functools import partial

import jax
import jax.numpy as jnp
from jax.experimental import pallas as pl
from jax.experimental.pallas import tpu as pltpu


# ----------------------------- helpers (used inside kernels) ------------------------

def _layernorm(x, w, b, eps=1e-5):
    # matches F.layer_norm over last dim (biased variance), eps=1e-5
    mu = jnp.mean(x, axis=-1, keepdims=True)
    var = jnp.mean((x - mu) ** 2, axis=-1, keepdims=True)
    return (x - mu) * jax.lax.rsqrt(var + eps) * w + b


def _gelu_exact(x):
    # nn.GELU() default = exact erf-based gelu
    return 0.5 * x * (1.0 + jax.lax.erf(x / math.sqrt(2.0)))


# ----------------------------- fused transformer-stack kernel -----------------------

def gpt_blocks_kernel(x_ref, mask_ref, lnf_w_ref, lnf_b_ref,
                      small_ref, bqkv_ref, bfc_ref,
                      wqkv_ref, wproj_ref, wfc_ref, wfp_ref,
                      out_ref, x_scr,
                      *, n_head, d_head, n_layer, block_T):
    l = pl.program_id(1)                 # layer index (inner, "arbitrary" axis)
    T = block_T
    H, dh = n_head, d_head
    D = H * dh
    N = x_scr.shape[0]                   # N = Bc * T (whole batch chunk, flattened)
    Bc = N // T
    bf16 = jnp.bfloat16

    @pl.when(l == 0)
    def _():
        x_scr[...] = x_ref[...].reshape(N, D)    # embeddings loaded once per batch chunk

    x = x_scr[...]                                # [N, D] f32, resident across layers

    small = small_ref[0]                          # [6, D]: ln1 w/b, ln2 w/b, b_proj, b_fp
    ln1_w, ln1_b = small[0:1], small[1:2]
    ln2_w, ln2_b = small[2:3], small[3:4]
    b_proj, b_fp = small[4:5], small[5:6]

    # ---- attention branch: x + attn(ln_1(x))  (branch_mult & 8/d_head folded on host) ----
    h = _layernorm(x, ln1_w, ln1_b).astype(bf16)
    qkv = jnp.dot(h, wqkv_ref[0], preferred_element_type=jnp.float32) + bqkv_ref[0]
    # TODO(synk): fold the (T,H) swaps into dot_general batch dims once rank-4
    #             two-batch-dim dot_general lowering is verified on Mosaic.
    q = qkv[:, :D].reshape(Bc, T, H, dh).transpose(0, 2, 1, 3).reshape(Bc * H, T, dh)
    k = qkv[:, D:2 * D].reshape(Bc, T, H, dh).transpose(0, 2, 1, 3).reshape(Bc * H, T, dh)
    v = qkv[:, 2 * D:].reshape(Bc, T, H, dh).transpose(0, 2, 1, 3).reshape(Bc * H, T, dh)

    # TODO(synk): flash-style query tiling for realistic T (full [Bc*H,T,T] tile here).
    s = jnp.einsum('bqd,bkd->bqk', q.astype(bf16), k.astype(bf16),
                   preferred_element_type=jnp.float32)
    s = s + mask_ref[...]                          # additive causal mask (precomputed)
    s = s - jnp.max(s, axis=-1, keepdims=True)
    p = jnp.exp(s)
    # NOTE: approx reciprocal (EUP slot) ~1e-3 rel. error vs exact softmax (intentional).
    p = p * pl.reciprocal(jnp.sum(p, axis=-1, keepdims=True), approx=True)
    y = jnp.einsum('bqk,bkd->bqd', p.astype(bf16), v.astype(bf16),
                   preferred_element_type=jnp.float32)
    y = y.reshape(Bc, H, T, dh).transpose(0, 2, 1, 3).reshape(N, D)   # (head, d_head) cols

    # head_btt '(n|d|n|d)' c_proj input permutation is folded into wproj rows on host.
    x = x + jnp.dot(y.astype(bf16), wproj_ref[0],
                    preferred_element_type=jnp.float32) + b_proj

    # ---- MLP branch: x + mlp(ln_2(x))  (branch_mult folded into w_fp / b_fp on host) ----
    h2 = _layernorm(x, ln2_w, ln2_b).astype(bf16)
    fc = jnp.dot(h2, wfc_ref[0], preferred_element_type=jnp.float32) + bfc_ref[0]
    g = _gelu_exact(fc).astype(bf16)
    # TODO(synk): tile the MLP over F (extra arbitrary grid axis / emit_pipeline) for
    #             realistic D/F on v7x's 64 MiB VMEM.
    x = x + jnp.dot(g, wfp_ref[0], preferred_element_type=jnp.float32) + b_fp

    x_scr[...] = x                        # carry to next layer

    @pl.when(l == n_layer - 1)
    def _():
        xl = x.reshape(Bc, T, D)[:, T - 1:T, :]                        # last token only
        out_ref[...] = _layernorm(xl, lnf_w_ref[...], lnf_b_ref[...])  # ln_f fused here


def _blocks_vmem_bytes(Bc, T, D, F, H):
    n = Bc * T
    w_bf16 = 2 * 2 * (D * 3 * D + D * D + D * F + F * D)          # double-buffered weights
    small = 2 * 4 * (6 * D + 3 * D + F)                            # packed small params
    x_io = 2 * 4 * n * D + 4 * n * D + 2 * 4 * Bc * D              # x blocks + scratch + out
    inter = 4 * (n * 3 * D + n * F + 2 * Bc * H * T * T + 3 * n * D) + 4 * T * T
    est = w_bf16 + small + x_io + 2 * inter + (2 << 20)
    return int(min(max(est, 16 << 20), 127 << 20))


def run_blocks(x, mask, lnf_w, lnf_b, sp, *, n_head, d_head, batch_chunk=None):
    B, T, D = x.shape
    L = sp['w_qkv'].shape[0]
    F = sp['w_fc'].shape[2]
    Bc = B if batch_chunk is None else batch_chunk
    assert B % Bc == 0
    # NOTE: Bc == B streams every weight exactly once (minimum HBM traffic).  Set a
    # smaller batch_chunk only to expose a >=2-extent parallel axis for v7x megacore.
    kernel = partial(gpt_blocks_kernel, n_head=n_head, d_head=d_head,
                     n_layer=L, block_T=T)

    def per_layer(*shape):
        # one layer's slice of a stacked [L, ...] array; re-DMA'd only when l changes
        return pl.BlockSpec((1,) + shape, lambda i, l: (l,) + (0,) * len(shape))

    in_specs = [
        pl.BlockSpec((Bc, T, D), lambda i, l: (i, 0, 0)),   # x: DMA'd once per chunk
        pl.BlockSpec((T, T), lambda i, l: (0, 0)),          # additive causal mask
        pl.BlockSpec((1, D), lambda i, l: (0, 0)),          # ln_f weight
        pl.BlockSpec((1, D), lambda i, l: (0, 0)),          # ln_f bias
        per_layer(6, D),                                    # ln1 w/b, ln2 w/b, b_proj, b_fp
        per_layer(1, 3 * D),                                # b_qkv (q part pre-scaled)
        per_layer(1, F),                                    # b_fc
        per_layer(D, 3 * D),                                # c_attn W (bf16, q cols scaled)
        per_layer(D, D),                                    # attn c_proj W (perm+bm folded)
        per_layer(D, F),                                    # mlp c_fc W
        per_layer(F, D),                                    # mlp c_proj W (bm folded)
    ]
    return pl.pallas_call(
        kernel,
        out_shape=jax.ShapeDtypeStruct((B, 1, D), jnp.float32),
        grid=(B // Bc, L),
        in_specs=in_specs,
        out_specs=pl.BlockSpec((Bc, 1, D), lambda i, l: (i, 0, 0)),
        scratch_shapes=[pltpu.VMEM((Bc * T, D), jnp.float32)],   # resident activation
        compiler_params=pltpu.CompilerParams(
            dimension_semantics=("parallel", "arbitrary"),
            vmem_limit_bytes=_blocks_vmem_bytes(Bc, T, D, F, n_head)),
    )(x, mask, lnf_w, lnf_b, sp['small'], sp['b_qkv'], sp['b_fc'],
      sp['w_qkv'], sp['w_proj'], sp['w_fc'], sp['w_fp'])


# ----------------------------- lm_head kernel (vocab-tiled, lane-dense) --------------

def lm_head_kernel(x_ref, w_ref, out_ref):
    out_ref[...] = jnp.dot(x_ref[...].astype(jnp.bfloat16), w_ref[...],
                           preferred_element_type=jnp.float32)


def _vocab_tiling(V, max_tile=2048):
    # lane-dense tile; V padded on the host so real vocabs (e.g. 50257) never fall back
    # to an untiled D x V block.  (4096-8192 is also fine on v5e/v6e's 128 MiB VMEM.)
    v128 = ((V + 127) // 128) * 128
    tv = min(max_tile, v128)
    v_pad = ((V + tv - 1) // tv) * tv
    return tv, v_pad


def run_lm_head(x_norm, w_lm_bf16, vocab_size, *, tile):
    B, D = x_norm.shape
    Vp = w_lm_bf16.shape[1]
    assert Vp % tile == 0
    vmem = int(min(max(2 * 2 * D * tile + 2 * 4 * B * tile + 2 * 4 * B * D + (2 << 20),
                       8 << 20), 127 << 20))
    out = pl.pallas_call(
        lm_head_kernel,
        out_shape=jax.ShapeDtypeStruct((B, Vp), jnp.float32),
        grid=(Vp // tile,),
        in_specs=[pl.BlockSpec((B, D), lambda j: (0, 0)),
                  pl.BlockSpec((D, tile), lambda j: (0, j))],
        out_specs=pl.BlockSpec((B, tile), lambda j: (0, j)),
        compiler_params=pltpu.CompilerParams(
            dimension_semantics=("parallel",), vmem_limit_bytes=vmem),
    )(x_norm, w_lm_bf16)
    return out[:, :vocab_size]


# ----------------------------- full model (Pallas path) ------------------------------

def structgpt_forward(idx, params, cfg):
    B, T = idx.shape
    # token + positional embedding (glue; dropout=0.0 identity, d_embd==d_model -> Identity)
    # TODO(synk): embedding gather stays host-side (jnp.take).
    x = jnp.take(params['wte'], idx, axis=0) + params['wpe'][:T][None, :, :]
    row = jnp.arange(T, dtype=jnp.int32)[:, None]
    col = jnp.arange(T, dtype=jnp.int32)[None, :]
    mask = jnp.where(col <= row, 0.0, -1e30).astype(jnp.float32)   # finite, NaN-safe
    x_last = run_blocks(x, mask, params['lnf_w'], params['lnf_b'], params['stacked'],
                        n_head=cfg['n_head'], d_head=cfg['d_head'])
    logits = run_lm_head(x_last[:, 0, :], params['w_lm_bf16'], cfg['vocab_size'],
                         tile=params['vocab_tile'])
    return logits[:, None, :]             # [B, 1, vocab] == lm_head(ln_f(x)[:, [-1], :])


# ----------------------------- pure-JAX reference ------------------------------------

def structgpt_reference(idx, params, cfg, matmul_dtype=jnp.float32):
    B, T = idx.shape
    D, nh, dh = cfg['d_model'], cfg['n_head'], cfg['d_head']
    bm = cfg['branch_mult']
    c = lambda a: a.astype(matmul_dtype)
    x = jnp.take(params['wte'], idx, axis=0) + params['wpe'][:T][None, :, :]
    for lp in params['blocks']:
        h = _layernorm(x, lp['ln1_w'], lp['ln1_b'])
        qkv = jnp.dot(c(h), c(lp['w_qkv']), preferred_element_type=jnp.float32) + lp['b_qkv']
        q, k, v = jnp.split(qkv, 3, axis=-1)
        q = q.reshape(B, T, nh, dh).transpose(0, 2, 1, 3)
        k = k.reshape(B, T, nh, dh).transpose(0, 2, 1, 3) * (8.0 / math.sqrt(dh))
        v = v.reshape(B, T, nh, dh).transpose(0, 2, 1, 3)
        att = jnp.einsum('bhqd,bhkd->bhqk', c(q), c(k),
                         preferred_element_type=jnp.float32) / math.sqrt(dh)
        msk = jnp.tril(jnp.ones((T, T), dtype=bool))
        att = jnp.where(msk, att, -jnp.inf)
        p = jax.nn.softmax(att, axis=-1)
        y = jnp.einsum('bhqk,bhkd->bhqd', c(p), c(v), preferred_element_type=jnp.float32)
        y = y.transpose(0, 2, 1, 3)                            # [B,T,nh,dh]
        y = y.transpose(0, 1, 3, 2).reshape(B, T, dh * nh)     # head_btt '(n|d|n|d)' proj
        x = x + (jnp.dot(c(y), c(lp['w_proj_raw']),
                         preferred_element_type=jnp.float32) + lp['b_proj']) * bm
        h2 = _layernorm(x, lp['ln2_w'], lp['ln2_b'])
        fc = jnp.dot(c(h2), c(lp['w_fc']), preferred_element_type=jnp.float32) + lp['b_fc']
        g = _gelu_exact(fc)
        x = x + (jnp.dot(c(g), c(lp['w_fp']),
                         preferred_element_type=jnp.float32) + lp['b_fp']) * bm
    xf = _layernorm(x, params['lnf_w'], params['lnf_b'])
    return jnp.einsum('bd,dv->bv', c(xf[:, -1, :]), c(params['w_lm']),
                      preferred_element_type=jnp.float32)[:, None, :]


# ----------------------------- param init / device prep ------------------------------

def init_params(key, cfg):
    # Deterministic synthetic init.  Original code zero-inits c_proj / lm_head; we use
    # small random values (including biases) so the kernel and the host-side folds do
    # non-trivial, checkable work.
    D, nh, dh = cfg['d_model'], cfg['n_head'], cfg['d_head']
    F = cfg['ffn_expansion'] * D
    V, BS, L = cfg['vocab_size'], cfg['block_size'], cfg['n_layer']

    def nrm(k, shape, std=0.02):
        return (std * jax.random.normal(k, shape)).astype(jnp.float32)

    keys = iter(jax.random.split(key, 8 * L + 8))
    params = {
        'wte': nrm(next(keys), (V, D)),
        'wpe': nrm(next(keys), (BS, D)),
        'lnf_w': jnp.ones((1, D), jnp.float32),
        'lnf_b': jnp.zeros((1, D), jnp.float32),
        'w_lm': nrm(next(keys), (D, V)),
        'blocks': [],
    }
    for _ in range(L):
        params['blocks'].append({
            'ln1_w': jnp.ones((1, D), jnp.float32),
            'ln1_b': jnp.zeros((1, D), jnp.float32),
            'w_qkv': nrm(next(keys), (D, 3 * D)),
            'b_qkv': nrm(next(keys), (1, 3 * D), std=0.01),
            'w_proj_raw': nrm(next(keys), (D, D)),
            'b_proj': nrm(next(keys), (1, D), std=0.01),
            'ln2_w': jnp.ones((1, D), jnp.float32),
            'ln2_b': jnp.zeros((1, D), jnp.float32),
            'w_fc': nrm(next(keys), (D, F)),
            'b_fc': nrm(next(keys), (1, F), std=0.01),
            'w_fp': nrm(next(keys), (F, D)),
            'b_fp': nrm(next(keys), (1, D), std=0.01),
        })
    return params


def prepare_device_params(params, cfg):
    # Stack per-layer weights into [L, ...] arrays (bf16 for matmul weights), pack the
    # small per-layer tensors, and fold all exact host-side rescalings/permutations.
    blocks = params['blocks']
    D, nh, dh = cfg['d_model'], cfg['n_head'], cfg['d_head']
    bm = cfg['branch_mult']
    qk_scale = 8.0 / dh          # (8/sqrt(dh)) k-scale * (1/sqrt(dh)) sdpa scale -> on q

    def scale_q_cols(a):         # [*, 3D]: fold the combined qk scale into the q third
        return jnp.concatenate([a[..., :D] * qk_scale, a[..., D:]], axis=-1)

    def permute_proj(w):         # fold '(n|d|n|d)' head_btt input perm into c_proj rows
        return w.reshape(dh, nh, D).transpose(1, 0, 2).reshape(nh * dh, D)

    small = jnp.stack([jnp.concatenate(
        [lp['ln1_w'], lp['ln1_b'], lp['ln2_w'], lp['ln2_b'],
         lp['b_proj'] * bm, lp['b_fp'] * bm], axis=0) for lp in blocks])   # [L, 6, D]

    stacked = {
        'small': small,
        'b_qkv': jnp.stack([scale_q_cols(lp['b_qkv']) for lp in blocks]),
        'b_fc': jnp.stack([lp['b_fc'] for lp in blocks]),
        'w_qkv': jnp.stack([scale_q_cols(lp['w_qkv'])
                            for lp in blocks]).astype(jnp.bfloat16),
        'w_proj': jnp.stack([permute_proj(lp['w_proj_raw']) * bm
                             for lp in blocks]).astype(jnp.bfloat16),
        'w_fc': jnp.stack([lp['w_fc'] for lp in blocks]).astype(jnp.bfloat16),
        'w_fp': jnp.stack([lp['w_fp'] * bm for lp in blocks]).astype(jnp.bfloat16),
    }
    out = dict(params)
    out['stacked'] = stacked
    V = params['w_lm'].shape[1]
    tv, v_pad = _vocab_tiling(V)
    out['w_lm_bf16'] = jnp.pad(params['w_lm'],
                               ((0, 0), (0, v_pad - V))).astype(jnp.bfloat16)
    out['vocab_tile'] = tv
    return out


# ----------------------------- main ---------------------------------------------------

if __name__ == "__main__":
    cfg = dict(
        vocab_size=128, block_size=16, n_layer=2, n_head=4,
        d_model=32, d_head=8, ffn_expansion=4,
    )
    cfg['branch_mult'] = (3.0 / cfg['n_layer']) ** 0.5

    key = jax.random.PRNGKey(0)
    kp, ki = jax.random.split(key)
    params = prepare_device_params(init_params(kp, cfg), cfg)

    B, T = 2, 8
    idx = jax.random.randint(ki, (B, T), 0, cfg['vocab_size'], dtype=jnp.int32)

    logits = jax.block_until_ready(structgpt_forward(idx, params, cfg))

    ref_bf16 = structgpt_reference(idx, params, cfg, matmul_dtype=jnp.bfloat16)
    ref_f32 = structgpt_reference(idx, params, cfg, matmul_dtype=jnp.float32)

    assert logits.shape == (B, 1, cfg['vocab_size'])
    assert bool(jnp.all(jnp.isfinite(logits)))
    assert jnp.allclose(logits, ref_bf16, atol=1e-2, rtol=2e-2), \
        f"max abs diff vs bf16 ref {jnp.max(jnp.abs(logits - ref_bf16))}"
    assert jnp.allclose(logits, ref_f32, atol=5e-2, rtol=5e-2), \
        f"max abs diff vs f32 ref {jnp.max(jnp.abs(logits - ref_f32))}"

    print("KERNEL_OK")
</pallas_src>

<mosaic_0001>
module attributes {stable_mosaic.version = 11 : i64} {
  func.func @gpt_blocks_kernel(%arg0: i32, %arg1: i32, %arg2: memref<2x8x32xf32, #tpu.memory_space<vmem>>, %arg3: memref<8x8xf32, #tpu.memory_space<vmem>>, %arg4: memref<1x32xf32, #tpu.memory_space<vmem>>, %arg5: memref<1x32xf32, #tpu.memory_space<vmem>>, %arg6: memref<1x6x32xf32, #tpu.memory_space<vmem>>, %arg7: memref<1x1x96xf32, #tpu.memory_space<vmem>>, %arg8: memref<1x1x128xf32, #tpu.memory_space<vmem>>, %arg9: memref<1x32x96xbf16, #tpu.memory_space<vmem>>, %arg10: memref<1x32x32xbf16, #tpu.memory_space<vmem>>, %arg11: memref<1x32x128xbf16, #tpu.memory_space<vmem>>, %arg12: memref<1x128x32xbf16, #tpu.memory_space<vmem>>, %arg13: memref<2x1x32xf32, #tpu.memory_space<vmem>>, %arg14: memref<16x32xf32, #tpu.memory_space<vmem>>) attributes {dimension_semantics = [#tpu.dimension_semantics<parallel>, #tpu.dimension_semantics<arbitrary>], iteration_bounds = array<i64: 1, 2>, scalar_prefetch = 0 : i64, scratch_operands = 1 : i64, tpu.core_type = #tpu.core_type<tc>, window_params = [{transform_indices = @transform_0, window_bounds = array<i64: 2, 8, 32>}, {pipeline_mode = #tpu.pipeline_mode<synchronous>, transform_indices = @transform_1, window_bounds = array<i64: 8, 8>}, {pipeline_mode = #tpu.pipeline_mode<synchronous>, transform_indices = @transform_2, window_bounds = array<i64: 1, 32>}, {pipeline_mode = #tpu.pipeline_mode<synchronous>, transform_indices = @transform_3, window_bounds = array<i64: 1, 32>}, {transform_indices = @transform_4, window_bounds = array<i64: 1, 6, 32>}, {transform_indices = @transform_5, window_bounds = array<i64: 1, 1, 96>}, {transform_indices = @transform_6, window_bounds = array<i64: 1, 1, 128>}, {transform_indices = @transform_7, window_bounds = array<i64: 1, 32, 96>}, {transform_indices = @transform_8, window_bounds = array<i64: 1, 32, 32>}, {transform_indices = @transform_9, window_bounds = array<i64: 1, 32, 128>}, {transform_indices = @transform_10, window_bounds = array<i64: 1, 128, 32>}, {transform_indices = @transform_11, window_bounds = array<i64: 2, 1, 32>}]} {
    %c0_i32 = arith.constant 0 : i32
    %0 = arith.cmpi eq, %arg1, %c0_i32 : i32
    %1 = arith.extui %0 : i1 to i32
    %c0_i32_0 = arith.constant 0 : i32
    %2 = arith.cmpi ne, %1, %c0_i32_0 : i32
    scf.if %2 {
      %c0_48 = arith.constant 0 : index
      %c0_49 = arith.constant 0 : index
      %c0_50 = arith.constant 0 : index
      %133 = vector.load %arg2[%c0_48, %c0_49, %c0_50] : memref<2x8x32xf32, #tpu.memory_space<vmem>>, vector<2x8x32xf32>
      %134 = vector.shape_cast %133 : vector<2x8x32xf32> to vector<16x32xf32>
      %c0_51 = arith.constant 0 : index
      %c0_52 = arith.constant 0 : index
      %135 = vector.load %arg14[%c0_51, %c0_52] : memref<16x32xf32, #tpu.memory_space<vmem>>, vector<16x32xf32>
      tpu.vector_store %arg14[%c0_51, %c0_52], %134 {strides = array<i32>} : memref<16x32xf32, #tpu.memory_space<vmem>>, vector<16x32xf32>,
    } else {
    }
    %c0 = arith.constant 0 : index
    %c0_1 = arith.constant 0 : index
    %3 = vector.load %arg14[%c0, %c0_1] : memref<16x32xf32, #tpu.memory_space<vmem>>, vector<16x32xf32>
    %c0_2 = arith.constant 0 : index
    %c0_3 = arith.constant 0 : index
    %c0_4 = arith.constant 0 : index
    %4 = vector.load %arg6[%c0_2, %c0_3, %c0_4] : memref<1x6x32xf32, #tpu.memory_space<vmem>>, vector<1x6x32xf32>
    %5 = vector.shape_cast %4 : vector<1x6x32xf32> to vector<6x32xf32>
    %6 = vector.extract_strided_slice %5 {offsets = [0, 0], sizes = [1, 32], strides = [1, 1]} : vector<6x32xf32> to vector<1x32xf32>
    %7 = vector.extract_strided_slice %5 {offsets = [1, 0], sizes = [1, 32], strides = [1, 1]} : vector<6x32xf32> to vector<1x32xf32>
    %8 = vector.extract_strided_slice %5 {offsets = [2, 0], sizes = [1, 32], strides = [1, 1]} : vector<6x32xf32> to vector<1x32xf32>
    %9 = vector.extract_strided_slice %5 {offsets = [3, 0], sizes = [1, 32], strides = [1, 1]} : vector<6x32xf32> to vector<1x32xf32>
    %10 = vector.extract_strided_slice %5 {offsets = [4, 0], sizes = [1, 32], strides = [1, 1]} : vector<6x32xf32> to vector<1x32xf32>
    %11 = vector.extract_strided_slice %5 {offsets = [5, 0], sizes = [1, 32], strides = [1, 1]} : vector<6x32xf32> to vector<1x32xf32>
    %cst = arith.constant dense<0.000000e+00> : vector<16xf32>
    %12 = vector.multi_reduction <add>, %3, %cst [1] : vector<16x32xf32> to vector<16xf32>
    %13 = vector.shape_cast %12 : vector<16xf32> to vector<16x1xf32>
    %cst_5 = arith.constant 3.200000e+01 : f32
    %14 = vector.broadcast %cst_5 : f32 to vector<16x1xf32>
    %15 = arith.divf %13, %14 : vector<16x1xf32>
    %16 = vector.broadcast %15 : vector<16x1xf32> to vector<16x32xf32>
    %17 = arith.subf %3, %16 : vector<16x32xf32>
    %18 = arith.mulf %17, %17 : vector<16x32xf32>
    %cst_6 = arith.constant dense<0.000000e+00> : vector<16xf32>
    %19 = vector.multi_reduction <add>, %18, %cst_6 [1] : vector<16x32xf32> to vector<16xf32>
    %20 = vector.shape_cast %19 : vector<16xf32> to vector<16x1xf32>
    %cst_7 = arith.constant 3.200000e+01 : f32
    %21 = vector.broadcast %cst_7 : f32 to vector<16x1xf32>
    %22 = arith.divf %20, %21 : vector<16x1xf32>
    %23 = vector.broadcast %15 : vector<16x1xf32> to vector<16x32xf32>
    %24 = arith.subf %3, %23 : vector<16x32xf32>
    %cst_8 = arith.constant 9.99999974E-6 : f32
    %25 = vector.broadcast %cst_8 : f32 to vector<16x1xf32>
    %26 = arith.addf %22, %25 : vector<16x1xf32>
    %27 = math.rsqrt %26 : vector<16x1xf32>
    %28 = vector.broadcast %27 : vector<16x1xf32> to vector<16x32xf32>
    %29 = arith.mulf %24, %28 : vector<16x32xf32>
    %30 = vector.broadcast %6 : vector<1x32xf32> to vector<16x32xf32>
    %31 = arith.mulf %29, %30 : vector<16x32xf32>
    %32 = vector.broadcast %7 : vector<1x32xf32> to vector<16x32xf32>
    %33 = arith.addf %31, %32 : vector<16x32xf32>
    %34 = arith.truncf %33 : vector<16x32xf32> to vector<16x32xbf16>
    %c0_9 = arith.constant 0 : index
    %c0_10 = arith.constant 0 : index
    %c0_11 = arith.constant 0 : index
    %35 = vector.load %arg9[%c0_9, %c0_10, %c0_11] : memref<1x32x96xbf16, #tpu.memory_space<vmem>>, vector<1x32x96xbf16>
    %36 = vector.shape_cast %35 : vector<1x32x96xbf16> to vector<32x96xbf16>
    %cst_12 = arith.constant dense<0.000000e+00> : vector<16x96xf32>
    %37 = tpu.matmul %34, %36, %cst_12 {dimension_numbers = #tpu.dot_dimension_numbers<[1], [0], [0], [1], [0, 0, 1, 1], [], []>} : vector<16x32xbf16>, vector<32x96xbf16>, vector<16x96xf32> -> vector<16x96xf32>
    %c0_13 = arith.constant 0 : index
    %c0_14 = arith.constant 0 : index
    %c0_15 = arith.constant 0 : index
    %38 = vector.load %arg7[%c0_13, %c0_14, %c0_15] : memref<1x1x96xf32, #tpu.memory_space<vmem>>, vector<1x1x96xf32>
    %39 = vector.shape_cast %38 : vector<1x1x96xf32> to vector<1x96xf32>
    %40 = vector.broadcast %39 : vector<1x96xf32> to vector<16x96xf32>
    %41 = arith.addf %37, %40 : vector<16x96xf32>
    %42 = vector.extract_strided_slice %41 {offsets = [0, 0], sizes = [16, 32], strides = [1, 1]} : vector<16x96xf32> to vector<16x32xf32>
    %43 = vector.shape_cast %42 : vector<16x32xf32> to vector<2x8x4x8xf32>
    %44 = tpu.transpose %43, [0, 2, 1, 3] : vector<2x8x4x8xf32> -> vector<2x4x8x8xf32>
    %45 = vector.shape_cast %44 : vector<2x4x8x8xf32> to vector<8x8x8xf32>
    %46 = vector.extract_strided_slice %41 {offsets = [0, 32], sizes = [16, 32], strides = [1, 1]} : vector<16x96xf32> to vector<16x32xf32>
    %47 = vector.shape_cast %46 : vector<16x32xf32> to vector<2x8x4x8xf32>
    %48 = tpu.transpose %47, [0, 2, 1, 3] : vector<2x8x4x8xf32> -> vector<2x4x8x8xf32>
    %49 = vector.shape_cast %48 : vector<2x4x8x8xf32> to vector<8x8x8xf32>
    %50 = vector.extract_strided_slice %41 {offsets = [0, 64], sizes = [16, 32], strides = [1, 1]} : vector<16x96xf32> to vector<16x32xf32>
    %51 = vector.shape_cast %50 : vector<16x32xf32> to vector<2x8x4x8xf32>
    %52 = tpu.transpose %51, [0, 2, 1, 3] : vector<2x8x4x8xf32> -> vector<2x4x8x8xf32>
    %53 = vector.shape_cast %52 : vector<2x4x8x8xf32> to vector<8x8x8xf32>
    %54 = arith.truncf %45 : vector<8x8x8xf32> to vector<8x8x8xbf16>
    %55 = arith.truncf %49 : vector<8x8x8xf32> to vector<8x8x8xbf16>
    "tpu.trace_start"() <{level = 10 : i32, message = "bqd,bkd->bqk"}> : () -> ()
    %cst_16 = arith.constant dense<0.000000e+00> : vector<8x8x8xf32>
    %56 = tpu.matmul %54, %55, %cst_16 {dimension_numbers = #tpu.dot_dimension_numbers<[2], [2], [1], [1], [0, 0, 0, 1, 1, 1], [0], [0]>} : vector<8x8x8xbf16>, vector<8x8x8xbf16>, vector<8x8x8xf32> -> vector<8x8x8xf32>
    "tpu.trace_stop"() : () -> ()
    %c0_17 = arith.constant 0 : index
    %c0_18 = arith.constant 0 : index
    %57 = vector.load %arg3[%c0_17, %c0_18] : memref<8x8xf32, #tpu.memory_space<vmem>>, vector<8x8xf32>
    %58 = vector.shape_cast %57 : vector<8x8xf32> to vector<1x8x8xf32>
    %59 = vector.broadcast %58 : vector<1x8x8xf32> to vector<8x8x8xf32>
    %60 = arith.addf %56, %59 : vector<8x8x8xf32>
    %cst_19 = arith.constant dense<0xFF800000> : vector<8x8xf32>
    %61 = vector.multi_reduction <maximumf>, %60, %cst_19 [2] : vector<8x8x8xf32> to vector<8x8xf32>
    %62 = vector.shape_cast %61 : vector<8x8xf32> to vector<8x8x1xf32>
    %63 = vector.broadcast %62 : vector<8x8x1xf32> to vector<8x8x8xf32>
    %64 = arith.subf %60, %63 : vector<8x8x8xf32>
    %65 = math.exp %64 : vector<8x8x8xf32>
    %cst_20 = arith.constant dense<0.000000e+00> : vector<8x8xf32>
    %66 = vector.multi_reduction <add>, %65, %cst_20 [2] : vector<8x8x8xf32> to vector<8x8xf32>
    %67 = vector.shape_cast %66 : vector<8x8xf32> to vector<8x8x1xf32>
    %68 = tpu.reciprocal %67 {approx = true} : vector<8x8x1xf32> -> vector<8x8x1xf32>
    %69 = vector.broadcast %68 : vector<8x8x1xf32> to vector<8x8x8xf32>
    %70 = arith.mulf %65, %69 : vector<8x8x8xf32>
    %71 = arith.truncf %70 : vector<8x8x8xf32> to vector<8x8x8xbf16>
    %72 = arith.truncf %53 : vector<8x8x8xf32> to vector<8x8x8xbf16>
    "tpu.trace_start"() <{level = 10 : i32, message = "bqk,bkd->bqd"}> : () -> ()
    %cst_21 = arith.constant dense<0.000000e+00> : vector<8x8x8xf32>
    %73 = tpu.matmul %71, %72, %cst_21 {dimension_numbers = #tpu.dot_dimension_numbers<[2], [1], [1], [2], [0, 0, 0, 1, 1, 2], [0], [0]>} : vector<8x8x8xbf16>, vector<8x8x8xbf16>, vector<8x8x8xf32> -> vector<8x8x8xf32>
    "tpu.trace_stop"() : () -> ()
    %74 = vector.shape_cast %73 : vector<8x8x8xf32> to vector<2x4x8x8xf32>
    %75 = tpu.transpose %74, [0, 2, 1, 3] : vector<2x4x8x8xf32> -> vector<2x8x4x8xf32>
    %76 = vector.shape_cast %75 : vector<2x8x4x8xf32> to vector<16x32xf32>
    %77 = arith.truncf %76 : vector<16x32xf32> to vector<16x32xbf16>
    %c0_22 = arith.constant 0 : index
    %c0_23 = arith.constant 0 : index
    %c0_24 = arith.constant 0 : index
    %78 = vector.load %arg10[%c0_22, %c0_23, %c0_24] : memref<1x32x32xbf16, #tpu.memory_space<vmem>>, vector<1x32x32xbf16>
    %79 = vector.shape_cast %78 : vector<1x32x32xbf16> to vector<32x32xbf16>
    %cst_25 = arith.constant dense<0.000000e+00> : vector<16x32xf32>
    %80 = tpu.matmul %77, %79, %cst_25 {dimension_numbers = #tpu.dot_dimension_numbers<[1], [0], [0], [1], [0, 0, 1, 1], [], []>} : vector<16x32xbf16>, vector<32x32xbf16>, vector<16x32xf32> -> vector<16x32xf32>
    %81 = arith.addf %3, %80 : vector<16x32xf32>
    %82 = vector.broadcast %10 : vector<1x32xf32> to vector<16x32xf32>
    %83 = arith.addf %81, %82 : vector<16x32xf32>
    %cst_26 = arith.constant dense<0.000000e+00> : vector<16xf32>
    %84 = vector.multi_reduction <add>, %83, %cst_26 [1] : vector<16x32xf32> to vector<16xf32>
    %85 = vector.shape_cast %84 : vector<16xf32> to vector<16x1xf32>
    %cst_27 = arith.constant 3.200000e+01 : f32
    %86 = vector.broadcast %cst_27 : f32 to vector<16x1xf32>
    %87 = arith.divf %85, %86 : vector<16x1xf32>
    %88 = vector.broadcast %87 : vector<16x1xf32> to vector<16x32xf32>
    %89 = arith.subf %83, %88 : vector<16x32xf32>
    %90 = arith.mulf %89, %89 : vector<16x32xf32>
    %cst_28 = arith.constant dense<0.000000e+00> : vector<16xf32>
    %91 = vector.multi_reduction <add>, %90, %cst_28 [1] : vector<16x32xf32> to vector<16xf32>
    %92 = vector.shape_cast %91 : vector<16xf32> to vector<16x1xf32>
    %cst_29 = arith.constant 3.200000e+01 : f32
    %93 = vector.broadcast %cst_29 : f32 to vector<16x1xf32>
    %94 = arith.divf %92, %93 : vector<16x1xf32>
    %95 = vector.broadcast %87 : vector<16x1xf32> to vector<16x32xf32>
    %96 = arith.subf %83, %95 : vector<16x32xf32>
    %cst_30 = arith.constant 9.99999974E-6 : f32
    %97 = vector.broadcast %cst_30 : f32 to vector<16x1xf32>
    %98 = arith.addf %94, %97 : vector<16x1xf32>
    %99 = math.rsqrt %98 : vector<16x1xf32>
    %100 = vector.broadcast %99 : vector<16x1xf32> to vector<16x32xf32>
    %101 = arith.mulf %96, %100 : vector<16x32xf32>
    %102 = vector.broadcast %8 : vector<1x32xf32> to vector<16x32xf32>
    %103 = arith.mulf %101, %102 : vector<16x32xf32>
    %104 = vector.broadcast %9 : vector<1x32xf32> to vector<16x32xf32>
    %105 = arith.addf %103, %104 : vector<16x32xf32>
    %106 = arith.truncf %105 : vector<16x32xf32> to vector<16x32xbf16>
    %c0_31 = arith.constant 0 : index
    %c0_32 = arith.constant 0 : index
    %c0_33 = arith.constant 0 : index
    %107 = vector.load %arg11[%c0_31, %c0_32, %c0_33] : memref<1x32x128xbf16, #tpu.memory_space<vmem>>, vector<1x32x128xbf16>
    %108 = vector.shape_cast %107 : vector<1x32x128xbf16> to vector<32x128xbf16>
    %cst_34 = arith.constant dense<0.000000e+00> : vector<16x128xf32>
    %109 = tpu.matmul %106, %108, %cst_34 {dimension_numbers = #tpu.dot_dimension_numbers<[1], [0], [0], [1], [0, 0, 1, 1], [], []>} : vector<16x32xbf16>, vector<32x128xbf16>, vector<16x128xf32> -> vector<16x128xf32>
    %c0_35 = arith.constant 0 : index
    %c0_36 = arith.constant 0 : index
    %c0_37 = arith.constant 0 : index
    %110 = vector.load %arg8[%c0_35, %c0_36, %c0_37] : memref<1x1x128xf32, #tpu.memory_space<vmem>>, vector<1x1x128xf32>
    %111 = vector.shape_cast %110 : vector<1x1x128xf32> to vector<1x128xf32>
    %112 = vector.broadcast %111 : vector<1x128xf32> to vector<16x128xf32>
    %113 = arith.addf %109, %112 : vector<16x128xf32>
    %cst_38 = arith.constant 5.000000e-01 : f32
    %114 = vector.broadcast %cst_38 : f32 to vector<16x128xf32>
    %115 = arith.mulf %114, %113 : vector<16x128xf32>
    %cst_39 = arith.constant 1.41421354 : f32
    %116 = vector.broadcast %cst_39 : f32 to vector<16x128xf32>
    %117 = arith.divf %113, %116 : vector<16x128xf32>
    %118 = math.erf %117 : vector<16x128xf32>
    %cst_40 = arith.constant 1.000000e+00 : f32
    %119 = vector.broadcast %cst_40 : f32 to vector<16x128xf32>
    %120 = arith.addf %119, %118 : vector<16x128xf32>
    %121 = arith.mulf %115, %120 : vector<16x128xf32>
    %122 = arith.truncf %121 : vector<16x128xf32> to vector<16x128xbf16>
    %c0_41 = arith.constant 0 : index
    %c0_42 = arith.constant 0 : index
    %c0_43 = arith.constant 0 : index
    %123 = vector.load %arg12[%c0_41, %c0_42, %c0_43] : memref<1x128x32xbf16, #tpu.memory_space<vmem>>, vector<1x128x32xbf16>
    %124 = vector.shape_cast %123 : vector<1x128x32xbf16> to vector<128x32xbf16>
    %cst_44 = arith.constant dense<0.000000e+00> : vector<16x32xf32>
    %125 = tpu.matmul %122, %124, %cst_44 {dimension_numbers = #tpu.dot_dimension_numbers<[1], [0], [0], [1], [0, 0, 1, 1], [], []>} : vector<16x128xbf16>, vector<128x32xbf16>, vector<16x32xf32> -> vector<16x32xf32>
    %126 = arith.addf %83, %125 : vector<16x32xf32>
    %127 = vector.broadcast %11 : vector<1x32xf32> to vector<16x32xf32>
    %128 = arith.addf %126, %127 : vector<16x32xf32>
    %c0_45 = arith.constant 0 : index
    %c0_46 = arith.constant 0 : index
    %129 = vector.load %arg14[%c0_45, %c0_46] : memref<16x32xf32, #tpu.memory_space<vmem>>, vector<16x32xf32>
    tpu.vector_store %arg14[%c0_45, %c0_46], %128 {strides = array<i32>} : memref<16x32xf32, #tpu.memory_space<vmem>>, vector<16x32xf32>,
    %c1_i32 = arith.constant 1 : i32
    %130 = arith.cmpi eq, %arg1, %c1_i32 : i32
    %131 = arith.extui %130 : i1 to i32
    %c0_i32_47 = arith.constant 0 : i32
    %132 = arith.cmpi ne, %131, %c0_i32_47 : i32
    scf.if %132 {
      %133 = vector.shape_cast %128 : vector<16x32xf32> to vector<2x8x32xf32>
      %134 = vector.extract_strided_slice %133 {offsets = [0, 7, 0], sizes = [2, 1, 32], strides = [1, 1, 1]} : vector<2x8x32xf32> to vector<2x1x32xf32>
      %c0_48 = arith.constant 0 : index
      %c0_49 = arith.constant 0 : index
      %135 = vector.load %arg4[%c0_48, %c0_49] : memref<1x32xf32, #tpu.memory_space<vmem>>, vector<1x32xf32>
      %c0_50 = arith.constant 0 : index
      %c0_51 = arith.constant 0 : index
      %136 = vector.load %arg5[%c0_50, %c0_51] : memref<1x32xf32, #tpu.memory_space<vmem>>, vector<1x32xf32>
      %cst_52 = arith.constant dense<0.000000e+00> : vector<2x1xf32>
      %137 = vector.multi_reduction <add>, %134, %cst_52 [2] : vector<2x1x32xf32> to vector<2x1xf32>
      %138 = vector.shape_cast %137 : vector<2x1xf32> to vector<2x1x1xf32>
      %cst_53 = arith.constant 3.200000e+01 : f32
      %139 = vector.broadcast %cst_53 : f32 to vector<2x1x1xf32>
      %140 = arith.divf %138, %139 : vector<2x1x1xf32>
      %141 = vector.broadcast %140 : vector<2x1x1xf32> to vector<2x1x32xf32>
      %142 = arith.subf %134, %141 : vector<2x1x32xf32>
      %143 = arith.mulf %142, %142 : vector<2x1x32xf32>
      %cst_54 = arith.constant dense<0.000000e+00> : vector<2x1xf32>
      %144 = vector.multi_reduction <add>, %143, %cst_54 [2] : vector<2x1x32xf32> to vector<2x1xf32>
      %145 = vector.shape_cast %144 : vector<2x1xf32> to vector<2x1x1xf32>
      %cst_55 = arith.constant 3.200000e+01 : f32
      %146 = vector.broadcast %cst_55 : f32 to vector<2x1x1xf32>
      %147 = arith.divf %145, %146 : vector<2x1x1xf32>
      %148 = vector.broadcast %140 : vector<2x1x1xf32> to vector<2x1x32xf32>
      %149 = arith.subf %134, %148 : vector<2x1x32xf32>
      %cst_56 = arith.constant 9.99999974E-6 : f32
      %150 = vector.broadcast %cst_56 : f32 to vector<2x1x1xf32>
      %151 = arith.addf %147, %150 : vector<2x1x1xf32>
      %152 = math.rsqrt %151 : vector<2x1x1xf32>
      %153 = vector.broadcast %152 : vector<2x1x1xf32> to vector<2x1x32xf32>
      %154 = arith.mulf %149, %153 : vector<2x1x32xf32>
      %155 = vector.shape_cast %135 : vector<1x32xf32> to vector<1x1x32xf32>
      %156 = vector.broadcast %155 : vector<1x1x32xf32> to vector<2x1x32xf32>
      %157 = arith.mulf %154, %156 : vector<2x1x32xf32>
      %158 = vector.shape_cast %136 : vector<1x32xf32> to vector<1x1x32xf32>
      %159 = vector.broadcast %158 : vector<1x1x32xf32> to vector<2x1x32xf32>
      %160 = arith.addf %157, %159 : vector<2x1x32xf32>
      %c0_57 = arith.constant 0 : index
      %c0_58 = arith.constant 0 : index
      %c0_59 = arith.constant 0 : index
      %161 = vector.load %arg13[%c0_57, %c0_58, %c0_59] : memref<2x1x32xf32, #tpu.memory_space<vmem>>, vector<2x1x32xf32>
      tpu.vector_store %arg13[%c0_57, %c0_58, %c0_59], %160 {strides = array<i32>} : memref<2x1x32xf32, #tpu.memory_space<vmem>>, vector<2x1x32xf32>,
    } else {
    }
    return
  }
  func.func @transform_0(%arg0: i32, %arg1: i32) -> (i32, i32, i32) {
    %c0_i32 = arith.constant 0 : i32
    %c0_i32_0 = arith.constant 0 : i32
    %c0_i32_1 = arith.constant 0 : i32
    return %arg0, %c0_i32, %c0_i32_0 : i32, i32, i32
  }
  func.func @transform_1(%arg0: i32, %arg1: i32) -> (i32, i32) {
    %c0_i32 = arith.constant 0 : i32
    %c0_i32_0 = arith.constant 0 : i32
    %c0_i32_1 = arith.constant 0 : i32
    return %c0_i32, %c0_i32_0 : i32, i32
  }
  func.func @transform_2(%arg0: i32, %arg1: i32) -> (i32, i32) {
    %c0_i32 = arith.constant 0 : i32
    %c0_i32_0 = arith.constant 0 : i32
    %c0_i32_1 = arith.constant 0 : i32
    return %c0_i32, %c0_i32_0 : i32, i32
  }
  func.func @transform_3(%arg0: i32, %arg1: i32) -> (i32, i32) {
    %c0_i32 = arith.constant 0 : i32
    %c0_i32_0 = arith.constant 0 : i32
    %c0_i32_1 = arith.constant 0 : i32
    return %c0_i32, %c0_i32_0 : i32, i32
  }
  func.func @transform_4(%arg0: i32, %arg1: i32) -> (i32, i32, i32) {
    %c0_i32 = arith.constant 0 : i32
    %c0_i32_0 = arith.constant 0 : i32
    %c0_i32_1 = arith.constant 0 : i32
    return %arg1, %c0_i32, %c0_i32_0 : i32, i32, i32
  }
  func.func @transform_5(%arg0: i32, %arg1: i32) -> (i32, i32, i32) {
    %c0_i32 = arith.constant 0 : i32
    %c0_i32_0 = arith.constant 0 : i32
    %c0_i32_1 = arith.constant 0 : i32
    return %arg1, %c0_i32, %c0_i32_0 : i32, i32, i32
  }
  func.func @transform_6(%arg0: i32, %arg1: i32) -> (i32, i32, i32) {
    %c0_i32 = arith.constant 0 : i32
    %c0_i32_0 = arith.constant 0 : i32
    %c0_i32_1 = arith.constant 0 : i32
    return %arg1, %c0_i32, %c0_i32_0 : i32, i32, i32
  }
  func.func @transform_7(%arg0: i32, %arg1: i32) -> (i32, i32, i32) {
    %c0_i32 = arith.constant 0 : i32
    %c0_i32_0 = arith.constant 0 : i32
    %c0_i32_1 = arith.constant 0 : i32
    return %arg1, %c0_i32, %c0_i32_0 : i32, i32, i32
  }
  func.func @transform_8(%arg0: i32, %arg1: i32) -> (i32, i32, i32) {
    %c0_i32 = arith.constant 0 : i32
    %c0_i32_0 = arith.constant 0 : i32
    %c0_i32_1 = arith.constant 0 : i32
    return %arg1, %c0_i32, %c0_i32_0 : i32, i32, i32
  }
  func.func @transform_9(%arg0: i32, %arg1: i32) -> (i32, i32, i32) {
    %c0_i32 = arith.constant 0 : i32
    %c0_i32_0 = arith.constant 0 : i32
    %c0_i32_1 = arith.constant 0 : i32
    return %arg1, %c0_i32, %c0_i32_0 : i32, i32, i32
  }
  func.func @transform_10(%arg0: i32, %arg1: i32) -> (i32, i32, i32) {
    %c0_i32 = arith.constant 0 : i32
    %c0_i32_0 = arith.constant 0 : i32
    %c0_i32_1 = arith.constant 0 : i32
    return %arg1, %c0_i32, %c0_i32_0 : i32, i32, i32
  }
  func.func @transform_11(%arg0: i32, %arg1: i32) -> (i32, i32, i32) {
    %c0_i32 = arith.constant 0 : i32
    %c0_i32_0 = arith.constant 0 : i32
    %c0_i32_1 = arith.constant 0 : i32
    return %arg0, %c0_i32, %c0_i32_0 : i32, i32, i32
  }
}

</mosaic_0001>

<llo_original>
// kernel: tpu_custom_call.1
$region0: #{tpu_custom_call.1}
  #allocation0 [shape = 'u32[]', space=smem, size = 0x4, offset = 0x4, fixed_abs, tag = 'smem constant byte address 0x4 - core index']
  #allocation1 [shape = 'u32[144,128]{1,0:T(1,128)}', space=vmem, size = 0x12000, scoped, tag = 'internal scratch']
  #allocation2 [shape = 'f32[16,32]{1,0:T(8,128)}', space=vmem, size = 0x2000, scoped, tag = 'scratch operand']
  %s0 = inlined_call_operand.vmem [shape: f32[2,8,32], index: 0, kind: input, shape index: {}]
  %s1 = inlined_call_operand.vmem [shape: f32[8,8], index: 1, kind: input, shape index: {}]
  %s2 = inlined_call_operand.vmem [shape: f32[1,32], index: 2, kind: input, shape index: {}]
  %s3 = inlined_call_operand.vmem [shape: f32[1,32], index: 3, kind: input, shape index: {}]
  %s4 = inlined_call_operand.vmem [shape: f32[2,6,32], index: 4, kind: input, shape index: {}]
  %s5 = inlined_call_operand.vmem [shape: f32[2,1,96], index: 5, kind: input, shape index: {}]
  %s6 = inlined_call_operand.vmem [shape: f32[2,1,128], index: 6, kind: input, shape index: {}]
  %s7 = inlined_call_operand.vmem [shape: bf16[2,32,96], index: 7, kind: input, shape index: {}]
  %s8 = inlined_call_operand.vmem [shape: bf16[2,32,32], index: 8, kind: input, shape index: {}]
  %s9 = inlined_call_operand.vmem [shape: bf16[2,32,128], index: 9, kind: input, shape index: {}]
  %s10 = inlined_call_operand.vmem [shape: bf16[2,128,32], index: 10, kind: input, shape index: {}]
  %s11 = inlined_call_operand.hbm [shape: f32[2,1,32], index: 11, kind: output, shape index: {}]
  %s12 = sld [smem:[#allocation0]]
  $region85: #{tpu_custom_call.1} parent=0
    _
  %s14 = ssub.s32 1, %s12
  %s15 = scalar_select 0, %s14, %s12
  $region1: #{tpu_custom_call.1} parent=0
    #allocation3 [shape = 'u8[1024]{0}', space=vmem, size = 0x400, scoped, tag = 'output window, operand 0, single buffered']
    #allocation4 [shape = 's32[2]{0}', space=sflag, size = 0x8, scoped, tag = 'scoped memory for tpu_custom_call.1']
    %16 = vsyncpa [#allocation4], 0
    loop: start=0, step=1, limit=4
    $region2: #{tpu_custom_call.1} parent=1 // loop_pre_header
      _
    $region3: #{tpu_custom_call.1} parent=1 // loop_header
      %s18 = sphi 0, %s22
      %p19 = scmp.ge.s32.totalorder %s18, 4
      %s25 = sphi 0, %s37
      %s26 = sphi 0, %s33
      %s27 = sphi 0, %s25
      %s28 = sphi 0, %s26
      %s29 = sphi 0, %s27
      %s30 = sphi 0, %s28
      %s40 = sphi 0, %s42
      %s43 = sphi 0, %s40
      %s44 = sphi 0, %s43
      %s60 = sphi 0, %s44
      %s64 = sphi 0, %s64
      %s66 = sphi 0, %s64
      %s67 = sphi 0, %s66
      %s81 = sphi 0, %s67
      %s85 = sphi 0, %s85
      %s87 = sphi 0, %s85
      %s88 = sphi 0, %s87
      %s102 = sphi 0, %s88
      %s106 = sphi 0, %s106
      %s108 = sphi 0, %s106
      %s109 = sphi 0, %s108
      %s123 = sphi 0, %s109
      %s129 = sphi 0, %s131
      %s132 = sphi 0, %s129
      %s133 = sphi 0, %s132
      %s149 = sphi 0, %s133
      %s155 = sphi 0, %s157
      %s158 = sphi 0, %s155
      %s159 = sphi 0, %s158
      %s175 = sphi 0, %s159
      %s181 = sphi 0, %s183
      %s184 = sphi 0, %s181
      %s185 = sphi 0, %s184
      %s201 = sphi 0, %s185
      %s207 = sphi 0, %s209
      %s210 = sphi 0, %s207
      %s211 = sphi 0, %s210
      %s227 = sphi 0, %s211
      %s233 = sphi 0, %s235
      %s236 = sphi 0, %s233
      %s237 = sphi 0, %s236
      %s253 = sphi 0, %s237
      %s259 = sphi 0, %s261
      %s262 = sphi 0, %s259
      %s263 = sphi 0, %s262
      %s279 = sphi 0, %s263
      %s285 = sphi 0, %s287
      %s288 = sphi 0, %s285
      %s289 = sphi 0, %s288
      %s305 = sphi 0, %s289
      %s311 = sphi 0, %s313
      %s314 = sphi 0, %s311
      %s315 = sphi 0, %s314
      %s331 = sphi 0, %s315
    $region4: #{tpu_custom_call.1} parent=1 // loop_header_branch
      %21 = sbr.rel (%p19) target = $region8
    $region5: #{tpu_custom_call.1} parent=1 // loop_body
      %s23 = ssub.s32 %s18, 1
      %s24 = ssub.s32 %s18, 2
      %s31 = sadd.s32 1, %s26
      %p32 = scmp.ge.s32.totalorder %s31, 2
      %s33 = scalar_select %p32, 0, %s31
      %s34 = sadd.s32 1, %s25
      %s35 = scalar_select %p32, %s34, %s25
      %p36 = scmp.ge.s32.totalorder %s35, 1
      %s37 = scalar_select %p36, 0, %s35
      %s38 = ssub.s32 %s25, %s37
      %p39 = scmp.eq.s32.totalorder %s38, 0
      %s41 = sadd.s32 %s40, 1
      %s42 = scalar_select %p39, %s40, %s41
      %p45 = pneg %p39
      %p46 = scmp.eq.s32.totalorder %s18, 1
      %p47 = por %p45, %p46
      %p48 = scmp.ne.s32.totalorder %s40, %s43
      %p49 = scmp.eq.s32.totalorder %s18, 0
      %p50 = por %p48, %p49
      %p51 = scmp.ne.s32.totalorder %s40, %s43
      %p52 = scmp.eq.s32.totalorder %s23, 1
      %p53 = por %p51, %p52
      %p54 = scmp.ne.s32.totalorder %s43, %s44
      %p55 = scmp.eq.s32.totalorder %s23, 0
      %p56 = por %p54, %p55
      %p57 = scmp.ne.s32.totalorder %s43, %s44
      %p58 = scmp.eq.s32.totalorder %s24, 1
      %p59 = por %p57, %p58
      %p61 = scmp.ne.s32.totalorder %s44, %s60
      %p62 = scmp.eq.s32.totalorder %s24, 0
      %p63 = por %p61, %p62
      %s65 = sadd.s32 %s64, 1
      %p68 = scmp.eq.s32.totalorder %s18, 1
      %p69 = scmp.ne.s32.totalorder %s64, %s66
      %p70 = scmp.eq.s32.totalorder %s18, 0
      %p71 = por %p69, %p70
      %p72 = scmp.ne.s32.totalorder %s64, %s66
      %p73 = scmp.eq.s32.totalorder %s23, 1
      %p74 = por %p72, %p73
      %p75 = scmp.ne.s32.totalorder %s66, %s67
      %p76 = scmp.eq.s32.totalorder %s23, 0
      %p77 = por %p75, %p76
      %p78 = scmp.ne.s32.totalorder %s66, %s67
      %p79 = scmp.eq.s32.totalorder %s24, 1
      %p80 = por %p78, %p79
      %p82 = scmp.ne.s32.totalorder %s67, %s81
      %p83 = scmp.eq.s32.totalorder %s24, 0
      %p84 = por %p82, %p83
      %s86 = sadd.s32 %s85, 1
      %p89 = scmp.eq.s32.totalorder %s18, 1
      %p90 = scmp.ne.s32.totalorder %s85, %s87
      %p91 = scmp.eq.s32.totalorder %s18, 0
      %p92 = por %p90, %p91
      %p93 = scmp.ne.s32.totalorder %s85, %s87
      %p94 = scmp.eq.s32.totalorder %s23, 1
      %p95 = por %p93, %p94
      %p96 = scmp.ne.s32.totalorder %s87, %s88
      %p97 = scmp.eq.s32.totalorder %s23, 0
      %p98 = por %p96, %p97
      %p99 = scmp.ne.s32.totalorder %s87, %s88
      %p100 = scmp.eq.s32.totalorder %s24, 1
      %p101 = por %p99, %p100
      %p103 = scmp.ne.s32.totalorder %s88, %s102
      %p104 = scmp.eq.s32.totalorder %s24, 0
      %p105 = por %p103, %p104
      %s107 = sadd.s32 %s106, 1
      %p110 = scmp.eq.s32.totalorder %s18, 1
      %p111 = scmp.ne.s32.totalorder %s106, %s108
      %p112 = scmp.eq.s32.totalorder %s18, 0
      %p113 = por %p111, %p112
      %p114 = scmp.ne.s32.totalorder %s106, %s108
      %p115 = scmp.eq.s32.totalorder %s23, 1
      %p116 = por %p114, %p115
      %p117 = scmp.ne.s32.totalorder %s108, %s109
      %p118 = scmp.eq.s32.totalorder %s23, 0
      %p119 = por %p117, %p118
      %p120 = scmp.ne.s32.totalorder %s108, %s109
      %p121 = scmp.eq.s32.totalorder %s24, 1
      %p122 = por %p120, %p121
      %p124 = scmp.ne.s32.totalorder %s109, %s123
      %p125 = scmp.eq.s32.totalorder %s24, 0
      %p126 = por %p124, %p125
      %s127 = ssub.s32 %s26, %s33
      %p128 = scmp.eq.s32.totalorder %s127, 0
      %s130 = sadd.s32 %s129, 1
      %s131 = scalar_select %p128, %s129, %s130
      %p134 = pneg %p128
      %p135 = scmp.eq.s32.totalorder %s18, 1
      %p136 = por %p134, %p135
      %p137 = scmp.ne.s32.totalorder %s129, %s132
      %p138 = scmp.eq.s32.totalorder %s18, 0
      %p139 = por %p137, %p138
      %p140 = scmp.ne.s32.totalorder %s129, %s132
      %p141 = scmp.eq.s32.totalorder %s23, 1
      %p142 = por %p140, %p141
      %p143 = scmp.ne.s32.totalorder %s132, %s133
      %p144 = scmp.eq.s32.totalorder %s23, 0
      %p145 = por %p143, %p144
      %p146 = scmp.ne.s32.totalorder %s132, %s133
      %p147 = scmp.eq.s32.totalorder %s24, 1
      %p148 = por %p146, %p147
      %p150 = scmp.ne.s32.totalorder %s133, %s149
      %p151 = scmp.eq.s32.totalorder %s24, 0
      %p152 = por %p150, %p151
      %s153 = ssub.s32 %s26, %s33
      %p154 = scmp.eq.s32.totalorder %s153, 0
      %s156 = sadd.s32 %s155, 1
      %s157 = scalar_select %p154, %s155, %s156
      %p160 = pneg %p154
      %p161 = scmp.eq.s32.totalorder %s18, 1
      %p162 = por %p160, %p161
      %p163 = scmp.ne.s32.totalorder %s155, %s158
      %p164 = scmp.eq.s32.totalorder %s18, 0
      %p165 = por %p163, %p164
      %p166 = scmp.ne.s32.totalorder %s155, %s158
      %p167 = scmp.eq.s32.totalorder %s23, 1
      %p168 = por %p166, %p167
      %p169 = scmp.ne.s32.totalorder %s158, %s159
      %p170 = scmp.eq.s32.totalorder %s23, 0
      %p171 = por %p169, %p170
      %p172 = scmp.ne.s32.totalorder %s158, %s159
      %p173 = scmp.eq.s32.totalorder %s24, 1
      %p174 = por %p172, %p173
      %p176 = scmp.ne.s32.totalorder %s159, %s175
      %p177 = scmp.eq.s32.totalorder %s24, 0
      %p178 = por %p176, %p177
      %s179 = ssub.s32 %s26, %s33
      %p180 = scmp.eq.s32.totalorder %s179, 0
      %s182 = sadd.s32 %s181, 1
      %s183 = scalar_select %p180, %s181, %s182
      %p186 = pneg %p180
      %p187 = scmp.eq.s32.totalorder %s18, 1
      %p188 = por %p186, %p187
      %p189 = scmp.ne.s32.totalorder %s181, %s184
      %p190 = scmp.eq.s32.totalorder %s18, 0
      %p191 = por %p189, %p190
      %p192 = scmp.ne.s32.totalorder %s181, %s184
      %p193 = scmp.eq.s32.totalorder %s23, 1
      %p194 = por %p192, %p193
      %p195 = scmp.ne.s32.totalorder %s184, %s185
      %p196 = scmp.eq.s32.totalorder %s23, 0
      %p197 = por %p195, %p196
      %p198 = scmp.ne.s32.totalorder %s184, %s185
      %p199 = scmp.eq.s32.totalorder %s24, 1
      %p200 = por %p198, %p199
      %p202 = scmp.ne.s32.totalorder %s185, %s201
      %p203 = scmp.eq.s32.totalorder %s24, 0
      %p204 = por %p202, %p203
      %s205 = ssub.s32 %s26, %s33
      %p206 = scmp.eq.s32.totalorder %s205, 0
      %s208 = sadd.s32 %s207, 1
      %s209 = scalar_select %p206, %s207, %s208
      %p212 = pneg %p206
      %p213 = scmp.eq.s32.totalorder %s18, 1
      %p214 = por %p212, %p213
      %p215 = scmp.ne.s32.totalorder %s207, %s210
      %p216 = scmp.eq.s32.totalorder %s18, 0
      %p217 = por %p215, %p216
      %p218 = scmp.ne.s32.totalorder %s207, %s210
      %p219 = scmp.eq.s32.totalorder %s23, 1
      %p220 = por %p218, %p219
      %p221 = scmp.ne.s32.totalorder %s210, %s211
      %p222 = scmp.eq.s32.totalorder %s23, 0
      %p223 = por %p221, %p222
      %p224 = scmp.ne.s32.totalorder %s210, %s211
      %p225 = scmp.eq.s32.totalorder %s24, 1
      %p226 = por %p224, %p225
      %p228 = scmp.ne.s32.totalorder %s211, %s227
      %p229 = scmp.eq.s32.totalorder %s24, 0
      %p230 = por %p228, %p229
      %s231 = ssub.s32 %s26, %s33
      %p232 = scmp.eq.s32.totalorder %s231, 0
      %s234 = sadd.s32 %s233, 1
      %s235 = scalar_select %p232, %s233, %s234
      %p238 = pneg %p232
      %p239 = scmp.eq.s32.totalorder %s18, 1
      %p240 = por %p238, %p239
      %p241 = scmp.ne.s32.totalorder %s233, %s236
      %p242 = scmp.eq.s32.totalorder %s18, 0
      %p243 = por %p241, %p242
      %p244 = scmp.ne.s32.totalorder %s233, %s236
      %p245 = scmp.eq.s32.totalorder %s23, 1
      %p246 = por %p244, %p245
      %p247 = scmp.ne.s32.totalorder %s236, %s237
      %p248 = scmp.eq.s32.totalorder %s23, 0
      %p249 = por %p247, %p248
      %p250 = scmp.ne.s32.totalorder %s236, %s237
      %p251 = scmp.eq.s32.totalorder %s24, 1
      %p252 = por %p250, %p251
      %p254 = scmp.ne.s32.totalorder %s237, %s253
      %p255 = scmp.eq.s32.totalorder %s24, 0
      %p256 = por %p254, %p255
      %s257 = ssub.s32 %s26, %s33
      %p258 = scmp.eq.s32.totalorder %s257, 0
      %s260 = sadd.s32 %s259, 1
      %s261 = scalar_select %p258, %s259, %s260
      %p264 = pneg %p258
      %p265 = scmp.eq.s32.totalorder %s18, 1
      %p266 = por %p264, %p265
      %p267 = scmp.ne.s32.totalorder %s259, %s262
      %p268 = scmp.eq.s32.totalorder %s18, 0
      %p269 = por %p267, %p268
      %p270 = scmp.ne.s32.totalorder %s259, %s262
      %p271 = scmp.eq.s32.totalorder %s23, 1
      %p272 = por %p270, %p271
      %p273 = scmp.ne.s32.totalorder %s262, %s263
      %p274 = scmp.eq.s32.totalorder %s23, 0
      %p275 = por %p273, %p274
      %p276 = scmp.ne.s32.totalorder %s262, %s263
      %p277 = scmp.eq.s32.totalorder %s24, 1
      %p278 = por %p276, %p277
      %p280 = scmp.ne.s32.totalorder %s263, %s279
      %p281 = scmp.eq.s32.totalorder %s24, 0
      %p282 = por %p280, %p281
      %s283 = ssub.s32 %s26, %s33
      %p284 = scmp.eq.s32.totalorder %s283, 0
      %s286 = sadd.s32 %s285, 1
      %s287 = scalar_select %p284, %s285, %s286
      %p290 = pneg %p284
      %p291 = scmp.eq.s32.totalorder %s18, 1
      %p292 = por %p290, %p291
      %p293 = scmp.ne.s32.totalorder %s285, %s288
      %p294 = scmp.eq.s32.totalorder %s18, 0
      %p295 = por %p293, %p294
      %p296 = scmp.ne.s32.totalorder %s285, %s288
      %p297 = scmp.eq.s32.totalorder %s23, 1
      %p298 = por %p296, %p297
      %p299 = scmp.ne.s32.totalorder %s288, %s289
      %p300 = scmp.eq.s32.totalorder %s23, 0
      %p301 = por %p299, %p300
      %p302 = scmp.ne.s32.totalorder %s288, %s289
      %p303 = scmp.eq.s32.totalorder %s24, 1
      %p304 = por %p302, %p303
      %p306 = scmp.ne.s32.totalorder %s289, %s305
      %p307 = scmp.eq.s32.totalorder %s24, 0
      %p308 = por %p306, %p307
      %s309 = ssub.s32 %s25, %s37
      %p310 = scmp.eq.s32.totalorder %s309, 0
      %s312 = sadd.s32 %s311, 1
      %s313 = scalar_select %p310, %s311, %s312
      %p316 = pneg %p310
      %p317 = scmp.eq.s32.totalorder %s18, 1
      %p318 = por %p316, %p317
      %p319 = scmp.ne.s32.totalorder %s311, %s314
      %p320 = scmp.eq.s32.totalorder %s18, 0
      %p321 = por %p319, %p320
      %p322 = scmp.ne.s32.totalorder %s311, %s314
      %p323 = scmp.eq.s32.totalorder %s23, 1
      %p324 = por %p322, %p323
      %p325 = scmp.ne.s32.totalorder %s314, %s315
      %p326 = scmp.eq.s32.totalorder %s23, 0
      %p327 = por %p325, %p326
      %p328 = scmp.ne.s32.totalorder %s314, %s315
      %p329 = scmp.eq.s32.totalorder %s24, 1
      %p330 = por %p328, %p329
      %p332 = scmp.ne.s32.totalorder %s315, %s331
      %p333 = scmp.eq.s32.totalorder %s24, 0
      %p334 = por %p332, %p333
      %p335 = scmp.le.s32.totalorder 1, %s18
      %p336 = scmp.lt.s32.totalorder %s18, 3
      %p337 = pnand %p335, %p336
      %p338 = pneg %p337
      // Predicated region
      $region9: #{tpu_custom_call.1} parent=5 // pred_check
        _
      $region10: #{tpu_custom_call.1} parent=5 // pred_check_branch
        %340 = sbr.rel (%p337) target = $region12
      $region11: #{tpu_custom_call.1} parent=5 // pred_region
        %s341 = ssub.s32 %s18, 1
        // Predicated region
        $region13: #{tpu_custom_call.1} parent=11 // pred_check
          %p342 = pneg %p56
        $region14: #{tpu_custom_call.1} parent=11 // pred_check_branch
          %344 = sbr.rel (%p342) target = $region16
        $region15: #{tpu_custom_call.1} parent=11 // pred_region
          %s345 = smul.u32 2, %s27
          %p346 = scmp.lt.s32.totalorder %s345, 1
          %s347 = scalar_select %p346, %s345, 1
          %s348 = smul.addr %s347, 8
          %s349 = scalar_lea.vmem %s0, %s348
          %s350 = smul.u32 2, %s27
        $region16: #{tpu_custom_call.1} parent=11 // pred_fallthru
          _
        // Predicated region
        $region17: #{tpu_custom_call.1} parent=11 // pred_check
          %p351 = pneg %p77
        $region18: #{tpu_custom_call.1} parent=11 // pred_check_branch
          %353 = sbr.rel (%p351) target = $region20
        $region19: #{tpu_custom_call.1} parent=11 // pred_region
          _
        $region20: #{tpu_custom_call.1} parent=11 // pred_fallthru
          _
        // Predicated region
        $region21: #{tpu_custom_call.1} parent=11 // pred_check
          %p354 = pneg %p98
        $region22: #{tpu_custom_call.1} parent=11 // pred_check_branch
          %356 = sbr.rel (%p354) target = $region24
        $region23: #{tpu_custom_call.1} parent=11 // pred_region
          _
        $region24: #{tpu_custom_call.1} parent=11 // pred_fallthru
          _
        // Predicated region
        $region25: #{tpu_custom_call.1} parent=11 // pred_check
          %p357 = pneg %p119
        $region26: #{tpu_custom_call.1} parent=11 // pred_check_branch
          %359 = sbr.rel (%p357) target = $region28
        $region27: #{tpu_custom_call.1} parent=11 // pred_region
          _
        $region28: #{tpu_custom_call.1} parent=11 // pred_fallthru
          _
      $region12: #{tpu_custom_call.1} parent=5 // pred_fallthru
        _
      %p360 = scmp.lt.s32.totalorder %s18, 2
      // Predicated region
      $region29: #{tpu_custom_call.1} parent=5 // pred_check
        %p361 = pneg %p360
      $region30: #{tpu_custom_call.1} parent=5 // pred_check_branch
        %363 = sbr.rel (%p361) target = $region32
      $region31: #{tpu_custom_call.1} parent=5 // pred_region
        // Predicated region
        $region33: #{tpu_custom_call.1} parent=31 // pred_check
          %p364 = pneg %p139
        $region34: #{tpu_custom_call.1} parent=31 // pred_check_branch
          %366 = sbr.rel (%p364) target = $region36
        $region35: #{tpu_custom_call.1} parent=31 // pred_region
          %p367 = scmp.lt.s32.totalorder %s26, 1
          %s368 = scalar_select %p367, %s26, 1
          %s369 = smul.addr %s368, 8
          %s370 = scalar_lea.vmem %s4, %s369
        $region36: #{tpu_custom_call.1} parent=31 // pred_fallthru
          _
        // Predicated region
        $region37: #{tpu_custom_call.1} parent=31 // pred_check
          %p371 = pneg %p165
        $region38: #{tpu_custom_call.1} parent=31 // pred_check_branch
          %373 = sbr.rel (%p371) target = $region40
        $region39: #{tpu_custom_call.1} parent=31 // pred_region
          %p374 = scmp.lt.s32.totalorder %s26, 1
          %s375 = scalar_select %p374, %s26, 1
          %s376 = scalar_lea.vmem %s5, %s375
        $region40: #{tpu_custom_call.1} parent=31 // pred_fallthru
          _
        // Predicated region
        $region41: #{tpu_custom_call.1} parent=31 // pred_check
          %p377 = pneg %p191
        $region42: #{tpu_custom_call.1} parent=31 // pred_check_branch
          %379 = sbr.rel (%p377) target = $region44
        $region43: #{tpu_custom_call.1} parent=31 // pred_region
          %p380 = scmp.lt.s32.totalorder %s26, 1
          %s381 = scalar_select %p380, %s26, 1
          %s382 = scalar_lea.vmem %s6, %s381
        $region44: #{tpu_custom_call.1} parent=31 // pred_fallthru
          _
        // Predicated region
        $region45: #{tpu_custom_call.1} parent=31 // pred_check
          %p383 = pneg %p217
        $region46: #{tpu_custom_call.1} parent=31 // pred_check_branch
          %385 = sbr.rel (%p383) target = $region48
        $region47: #{tpu_custom_call.1} parent=31 // pred_region
          %p386 = scmp.lt.s32.totalorder %s26, 1
          %s387 = scalar_select %p386, %s26, 1
          %s388 = smul.addr %s387, 4
          %s389 = smul.addr %s388, 4
          %s390 = scalar_lea.vmem %s7, %s389
        $region48: #{tpu_custom_call.1} parent=31 // pred_fallthru
          _
        // Predicated region
        $region49: #{tpu_custom_call.1} parent=31 // pred_check
          %p391 = pneg %p243
        $region50: #{tpu_custom_call.1} parent=31 // pred_check_branch
          %393 = sbr.rel (%p391) target = $region52
        $region51: #{tpu_custom_call.1} parent=31 // pred_region
          %p394 = scmp.lt.s32.totalorder %s26, 1
          %s395 = scalar_select %p394, %s26, 1
          %s396 = smul.addr %s395, 4
          %s397 = smul.addr %s396, 4
          %s398 = scalar_lea.vmem %s8, %s397
        $region52: #{tpu_custom_call.1} parent=31 // pred_fallthru
          _
        // Predicated region
        $region53: #{tpu_custom_call.1} parent=31 // pred_check
          %p399 = pneg %p269
        $region54: #{tpu_custom_call.1} parent=31 // pred_check_branch
          %401 = sbr.rel (%p399) target = $region56
        $region55: #{tpu_custom_call.1} parent=31 // pred_region
          %p402 = scmp.lt.s32.totalorder %s26, 1
          %s403 = scalar_select %p402, %s26, 1
          %s404 = smul.addr %s403, 4
          %s405 = smul.addr %s404, 4
          %s406 = scalar_lea.vmem %s9, %s405
        $region56: #{tpu_custom_call.1} parent=31 // pred_fallthru
          _
        // Predicated region
        $region57: #{tpu_custom_call.1} parent=31 // pred_check
          %p407 = pneg %p295
        $region58: #{tpu_custom_call.1} parent=31 // pred_check_branch
          %409 = sbr.rel (%p407) target = $region60
        $region59: #{tpu_custom_call.1} parent=31 // pred_region
          %p410 = scmp.lt.s32.totalorder %s26, 1
          %s411 = scalar_select %p410, %s26, 1
          %s412 = smul.addr %s411, 16
          %s413 = smul.addr %s412, 4
          %s414 = scalar_lea.vmem %s10, %s413
        $region60: #{tpu_custom_call.1} parent=31 // pred_fallthru
          _
      $region32: #{tpu_custom_call.1} parent=5 // pred_fallthru
        _
      %p415 = scmp.le.s32.totalorder 1, %s18
      %p416 = scmp.lt.s32.totalorder %s18, 3
      %p417 = pnand %p415, %p416
      %p418 = pneg %p417
      // Predicated region
      $region61: #{tpu_custom_call.1} parent=5 // pred_check
        _
      $region62: #{tpu_custom_call.1} parent=5 // pred_check_branch
        %420 = sbr.rel (%p417) target = $region64
      $region63: #{tpu_custom_call.1} parent=5 // pred_region
        %s421 = ssub.s32 %s18, 1
        %s422 = smul.u32 2, %s27
        %p423 = scmp.lt.s32.totalorder %s422, 1
        %s424 = scalar_select %p423, %s422, 1
        %s425 = smul.addr %s424, 8
        %s426 = scalar_lea.vmem %s0, %s425
        %p427 = pneg %p56
        %p428 = pneg %p53
        %p429 = pneg %p77
        %p430 = pneg %p74
        %p431 = pneg %p98
        %p432 = pneg %p95
        %p433 = pneg %p119
        %p434 = pneg %p116
        %p435 = scmp.lt.s32.totalorder %s28, 1
        %s436 = scalar_select %p435, %s28, 1
        %s437 = smul.addr %s436, 8
        %s438 = scalar_lea.vmem %s4, %s437
        %p439 = pneg %p145
        %p440 = pneg %p142
        %p441 = scmp.lt.s32.totalorder %s28, 1
        %s442 = scalar_select %p441, %s28, 1
        %s443 = scalar_lea.vmem %s5, %s442
        %p444 = pneg %p171
        %p445 = pneg %p168
        %p446 = scmp.lt.s32.totalorder %s28, 1
        %s447 = scalar_select %p446, %s28, 1
        %s448 = scalar_lea.vmem %s6, %s447
        %p449 = pneg %p197
        %p450 = pneg %p194
        %p451 = scmp.lt.s32.totalorder %s28, 1
        %s452 = scalar_select %p451, %s28, 1
        %s453 = smul.addr %s452, 4
        %s454 = smul.addr %s453, 4
        %s455 = scalar_lea.vmem %s7, %s454
        %p456 = pneg %p223
        %p457 = pneg %p220
        %p458 = scmp.lt.s32.totalorder %s28, 1
        %s459 = scalar_select %p458, %s28, 1
        %s460 = smul.addr %s459, 4
        %s461 = smul.addr %s460, 4
        %s462 = scalar_lea.vmem %s8, %s461
        %p463 = pneg %p249
        %p464 = pneg %p246
        %p465 = scmp.lt.s32.totalorder %s28, 1
        %s466 = scalar_select %p465, %s28, 1
        %s467 = smul.addr %s466, 4
        %s468 = smul.addr %s467, 4
        %s469 = scalar_lea.vmem %s9, %s468
        %p470 = pneg %p275
        %p471 = pneg %p272
        %p472 = scmp.lt.s32.totalorder %s28, 1
        %s473 = scalar_select %p472, %s28, 1
        %s474 = smul.addr %s473, 16
        %s475 = smul.addr %s474, 4
        %s476 = scalar_lea.vmem %s10, %s475
        %p477 = pneg %p301
        %p478 = pneg %p298
        %p479 = pneg %p327
        %p480 = pneg %p324
        %s481 = smul.u32 2, %s27
        %p482 = scmp.lt.s32.totalorder %s481, 1
        %s483 = scalar_select %p482, %s481, 1
        %s484 = smul.addr %s483, 8
        %s485 = scalar_lea.vmem %s0, %s484
        %s486 = smul.u32 2, %s27
        %p487 = scmp.lt.s32.totalorder %s28, 1
        %s488 = scalar_select %p487, %s28, 1
        %s489 = smul.addr %s488, 8
        %s490 = scalar_lea.vmem %s4, %s489
        %p491 = scmp.lt.s32.totalorder %s28, 1
        %s492 = scalar_select %p491, %s28, 1
        %s493 = scalar_lea.vmem %s5, %s492
        %p494 = scmp.lt.s32.totalorder %s28, 1
        %s495 = scalar_select %p494, %s28, 1
        %s496 = scalar_lea.vmem %s6, %s495
        %p497 = scmp.lt.s32.totalorder %s28, 1
        %s498 = scalar_select %p497, %s28, 1
        %s499 = smul.addr %s498, 4
        %s500 = smul.addr %s499, 4
        %s501 = scalar_lea.vmem %s7, %s500
        %p502 = scmp.lt.s32.totalorder %s28, 1
        %s503 = scalar_select %p502, %s28, 1
        %s504 = smul.addr %s503, 4
        %s505 = smul.addr %s504, 4
        %s506 = scalar_lea.vmem %s8, %s505
        %p507 = scmp.lt.s32.totalorder %s28, 1
        %s508 = scalar_select %p507, %s28, 1
        %s509 = smul.addr %s508, 4
        %s510 = smul.addr %s509, 4
        %s511 = scalar_lea.vmem %s9, %s510
        %p512 = scmp.lt.s32.totalorder %s28, 1
        %s513 = scalar_select %p512, %s28, 1
        %s514 = smul.addr %s513, 16
        %s515 = smul.addr %s514, 4
        %s516 = scalar_lea.vmem %s10, %s515
        %s517 = smul.u32 2, %s27
        %p519 = scmp.eq.s32.totalorder %s28, 0
        // Predicated region
        $region65: #{tpu_custom_call.1} parent=63 // pred_check
          %p520 = pneg %p519
        $region66: #{tpu_custom_call.1} parent=63 // pred_check_branch
          %522 = sbr.rel (%p520) target = $region68
        $region67: #{tpu_custom_call.1} parent=63 // pred_region
          %v523 = vld [vmem:[%s485] sm:$0xff]
          %v524 = vld [vmem:[%s485 + $0x8] sm:$0xff]
          %vm525 = vcmask 261120
          %526 = vst.msk [vmem:[#allocation2] sm:$0xff] %vm525, %v523
          %527 = vst.msk [vmem:[#allocation2 + $0x8] sm:$0xff] %vm525, %v524
        $region68: #{tpu_custom_call.1} parent=63 // pred_fallthru
          _
        %v528 = vld [vmem:[#allocation2] sm:$0xff]
        %v529 = vld [vmem:[#allocation2 + $0x8] sm:$0xff]
        %v530 = vld [vmem:[%s490] sm:$0x3f]
        %vm531 = vcmask 261120
        %v532 = vsel %vm531, %v528, 0.0
        %533 = vadd.xlane.f32.xlu0 %v532
        %v534 = vpop.xlane.xlu0 %533
        %v535 = vsel %vm531, %v529, 0.0
        %536 = vadd.xlane.f32.xlu0 %v535
        %v537 = vpop.xlane.xlu0 %536
        %v538 = vrcp.pop 32.0
        %v539 = vmul.f32 %v534, %v538
        %v540 = vmul.f32 %v537, %v538
        %v541 = vsub.f32 %v528, %v539
        %v542 = vsub.f32 %v529, %v540
        %v543 = vmul.f32 %v541, %v541
        %v544 = vmul.f32 %v542, %v542
        %v545 = vsel %vm531, %v543, 0.0
        %546 = vadd.xlane.f32.xlu0 %v545
        %v547 = vpop.xlane.xlu0 %546
        %v548 = vsel %vm531, %v544, 0.0
        %549 = vadd.xlane.f32.xlu0 %v548
        %v550 = vpop.xlane.xlu0 %549
        %v551 = vmul.f32 %v547, %v538
        %v552 = vmul.f32 %v550, %v538
        %v553 = vadd.f32 %v551, 1e-05
        %v554 = vadd.f32 %v552, 1e-05
        %v555 = vrsqrt.pop %v553
        %v556 = vrsqrt.pop %v554
        %v557 = vmul.f32 %v541, %v555
        %v558 = vmul.f32 %v542, %v556
        %v559 = vlaneseq
        %v560 = vshrl.u32 %v559, 7
        %v561 = vsub.s32 0, %v560
        %v562 = vrot.slane %v530, %v561
        %v563 = vmul.f32 %v557, %v562
        %v564 = vmul.f32 %v558, %v562
        %v565 = vlaneseq
        %v566 = vshrl.u32 %v565, 7
        %v567 = vsub.s32 1, %v566
        %v568 = vrot.slane %v530, %v567
        %v569 = vadd.f32 %v563, %v568
        %v570 = vadd.f32 %v564, %v568
        %v571 = vpack.c.bf16 %v570, %v569
        %v572 = vld [vmem:[%s501] sm:$0xf]
        %v573 = vld [vmem:[%s501 + $0x4] sm:$0xf]
        %v574 = vld [vmem:[%s501 + $0x8] sm:$0xf]
        %v575 = vld [vmem:[%s501 + $0xc] sm:$0xf]
        %v576 = vld [vmem:[%s493] sm:$0x1]
        %v578 = vlaneseq
        %v579 = vshrl.u32 %v578, 7
        %v580 = vsub.s32 0, %v579
        %v581 = vrot.slane %v576, %v580
        %v587 = vunpack.c.l.b16 %v572
        %v588 = vunpack.c.l.b16 %v573
        %v589 = vunpack.c.l.b16 %v574
        %v590 = vunpack.c.l.b16 %v575
        %v591 = vpack.c.b16 %v588, %v587
        %v592 = vpack.c.b16 %v590, %v589
        %v596 = vsel %vm531, %v571, 0
        %598 = vmatprep.subr.bf16.mxu0 0
        %599 = vmatpush1.bf16.msra.mxu0 %v591
        %600 = vmatprep.subr.bf16.mxu0 0
        %601 = vmatpush1.bf16.msra.mxu0 %v592
        %602 = vmatprep.subr.bf16.mxu0 0
        %603 = vmatpush1.bf16.msra.mxu0 0
        %604 = vmatprep.subr.bf16.mxu0 0
        %605 = vmatpush1.bf16.msra.mxu0 0
        %606 = vmatprep.subr.bf16.mxu0 0
        %607 = vmatpush1.bf16.msra.mxu0 0
        %608 = vmatprep.subr.bf16.mxu0 0
        %609 = vmatpush1.bf16.msra.mxu0 0
        %610 = vmatprep.subr.bf16.mxu0 0
        %611 = vmatpush1.bf16.msra.mxu0 0
        %612 = vmatprep.subr.bf16.mxu0 0
        %613 = vmatpush1.bf16.msra.mxu0 0
        %614 = vmatprep.subr.bf16.mxu0 0
        %615 = vmatpush1.bf16.msra.mxu0 0
        %616 = vmatprep.subr.bf16.mxu0 0
        %617 = vmatpush1.bf16.msra.mxu0 0
        %618 = vmatprep.subr.bf16.mxu0 0
        %619 = vmatpush1.bf16.msra.mxu0 0
        %620 = vmatprep.subr.bf16.mxu0 0
        %621 = vmatpush1.bf16.msra.mxu0 0
        %622 = vmatprep.subr.bf16.mxu0 0
        %623 = vmatpush1.bf16.msra.mxu0 0
        %624 = vmatprep.subr.bf16.mxu0 0
        %625 = vmatpush1.bf16.msra.mxu0 0
        %626 = vmatprep.subr.bf16.mxu0 0
        %627 = vmatpush1.bf16.msra.mxu0 0
        %628 = vmatprep.subr.bf16.mxu0 0
        %629 = vmatpush1.bf16.msra.mxu0 0
        %630 = vmatprep.mubr.bf16.mxu0 0
        %631 = vmatmul.mubr.bf16.gmra.mrb[0].mxu0 %v596
        %v632 = vpop.f32.mrb[0].mxu0
        %v633 = vadd.f32 %v581, %v632
        %v634 = vpop.f32.mrb[0].mxu0
        %v635 = vpop.f32.mrb[0].mxu0
        %v636 = vadd.f32 %v581, %v635
        %v637 = vpop.f32.mrb[0].mxu0
        %638 = vdwg.mxu0
        %641 = vrot.lane.b32.xlu0 %v633, 120
        %v642 = vpop.permute.xlu0 %641
        %643 = vrot.lane.b32.xlu0 %v636, 120
        %v644 = vpop.permute.xlu0 %643
        %647 = vrot.lane.b32.xlu0 %v633, 112
        %v648 = vpop.permute.xlu0 %647
        %649 = vrot.lane.b32.xlu0 %v636, 112
        %v650 = vpop.permute.xlu0 %649
        %653 = vrot.lane.b32.xlu0 %v633, 104
        %v654 = vpop.permute.xlu0 %653
        %655 = vrot.lane.b32.xlu0 %v636, 104
        %v656 = vpop.permute.xlu0 %655
        %v659 = vcombine.low %v633, %v648
        %v660 = vcombine.high %v633, %v648
        %v662 = vunpack.c.l.s4 1983009808
        %v663 = vunpack.c.0.s8 %v662
        %v664 = vlaneseq
        %v665 = vshrl.u32 %v664, 7
        %v666 = vsub.s32 %v663, %v665
        %v667 = vrot.slane %v659, %v666
        %v669 = vunpack.c.l.s4 1983009808
        %v670 = vunpack.c.0.s8 %v669
        %v671 = vlaneseq
        %v672 = vshrl.u32 %v671, 7
        %v673 = vsub.s32 %v670, %v672
        %v674 = vrot.slane %v660, %v673
        %v675 = vcombine.low %v642, %v654
        %v676 = vcombine.high %v642, %v654
        %v678 = vunpack.c.l.s4 1983009808
        %v679 = vunpack.c.0.s8 %v678
        %v680 = vlaneseq
        %v681 = vshrl.u32 %v680, 7
        %v682 = vsub.s32 %v679, %v681
        %v683 = vrot.slane %v675, %v682
        %v685 = vunpack.c.l.s4 1983009808
        %v686 = vunpack.c.0.s8 %v685
        %v687 = vlaneseq
        %v688 = vshrl.u32 %v687, 7
        %v689 = vsub.s32 %v686, %v688
        %v690 = vrot.slane %v676, %v689
        %v691 = vcombine.low %v667, %v683
        %v692 = vcombine.high %v667, %v683
        %v694 = vunpack.c.l.s4 1934713408
        %v695 = vunpack.c.0.s8 %v694
        %v696 = vlaneseq
        %v697 = vshrl.u32 %v696, 7
        %v698 = vsub.s32 %v695, %v697
        %v699 = vrot.slane %v691, %v698
        %v701 = vunpack.c.l.s4 1934713408
        %v702 = vunpack.c.0.s8 %v701
        %v703 = vlaneseq
        %v704 = vshrl.u32 %v703, 7
        %v705 = vsub.s32 %v702, %v704
        %v706 = vrot.slane %v692, %v705
        %v707 = vcombine.low %v674, %v690
        %v708 = vcombine.high %v674, %v690
        %v710 = vunpack.c.l.s4 1934713408
        %v711 = vunpack.c.0.s8 %v710
        %v712 = vlaneseq
        %v713 = vshrl.u32 %v712, 7
        %v714 = vsub.s32 %v711, %v713
        %v715 = vrot.slane %v707, %v714
        %v717 = vunpack.c.l.s4 1934713408
        %v718 = vunpack.c.0.s8 %v717
        %v719 = vlaneseq
        %v720 = vshrl.u32 %v719, 7
        %v721 = vsub.s32 %v718, %v720
        %v722 = vrot.slane %v708, %v721
        %v723 = vcombine.high %v699, 0.0
        %v724 = vcombine.high %v706, 0.0
        %v725 = vcombine.high %v715, 0.0
        %v726 = vcombine.high %v722, 0.0
        %v727 = vcombine.low %v636, %v650
        %v728 = vcombine.high %v636, %v650
        %v730 = vunpack.c.l.s4 1983009808
        %v731 = vunpack.c.0.s8 %v730
        %v732 = vlaneseq
        %v733 = vshrl.u32 %v732, 7
        %v734 = vsub.s32 %v731, %v733
        %v735 = vrot.slane %v727, %v734
        %v737 = vunpack.c.l.s4 1983009808
        %v738 = vunpack.c.0.s8 %v737
        %v739 = vlaneseq
        %v740 = vshrl.u32 %v739, 7
        %v741 = vsub.s32 %v738, %v740
        %v742 = vrot.slane %v728, %v741
        %v743 = vcombine.low %v644, %v656
        %v744 = vcombine.high %v644, %v656
        %v746 = vunpack.c.l.s4 1983009808
        %v747 = vunpack.c.0.s8 %v746
        %v748 = vlaneseq
        %v749 = vshrl.u32 %v748, 7
        %v750 = vsub.s32 %v747, %v749
        %v751 = vrot.slane %v743, %v750
        %v753 = vunpack.c.l.s4 1983009808
        %v754 = vunpack.c.0.s8 %v753
        %v755 = vlaneseq
        %v756 = vshrl.u32 %v755, 7
        %v757 = vsub.s32 %v754, %v756
        %v758 = vrot.slane %v744, %v757
        %v759 = vcombine.low %v735, %v751
        %v760 = vcombine.high %v735, %v751
        %v762 = vunpack.c.l.s4 1934713408
        %v763 = vunpack.c.0.s8 %v762
        %v764 = vlaneseq
        %v765 = vshrl.u32 %v764, 7
        %v766 = vsub.s32 %v763, %v765
        %v767 = vrot.slane %v759, %v766
        %v769 = vunpack.c.l.s4 1934713408
        %v770 = vunpack.c.0.s8 %v769
        %v771 = vlaneseq
        %v772 = vshrl.u32 %v771, 7
        %v773 = vsub.s32 %v770, %v772
        %v774 = vrot.slane %v760, %v773
        %v775 = vcombine.low %v742, %v758
        %v776 = vcombine.high %v742, %v758
        %v778 = vunpack.c.l.s4 1934713408
        %v779 = vunpack.c.0.s8 %v778
        %v780 = vlaneseq
        %v781 = vshrl.u32 %v780, 7
        %v782 = vsub.s32 %v779, %v781
        %v783 = vrot.slane %v775, %v782
        %v785 = vunpack.c.l.s4 1934713408
        %v786 = vunpack.c.0.s8 %v785
        %v787 = vlaneseq
        %v788 = vshrl.u32 %v787, 7
        %v789 = vsub.s32 %v786, %v788
        %v790 = vrot.slane %v776, %v789
        %v791 = vcombine.high %v767, 0.0
        %v792 = vcombine.high %v774, 0.0
        %v793 = vcombine.high %v783, 0.0
        %v794 = vcombine.high %v790, 0.0
        %v795 = vcombine.low %v699, %v706
        %v797 = vunpack.c.l.s4 1983009808
        %v798 = vunpack.c.0.s8 %v797
        %v799 = vlaneseq
        %v800 = vshrl.u32 %v799, 7
        %v801 = vsub.s32 %v798, %v800
        %v802 = vrot.slane %v795, %v801
        %v803 = vcombine.low %v723, %v724
        %v805 = vunpack.c.l.s4 1983009808
        %v806 = vunpack.c.0.s8 %v805
        %v807 = vlaneseq
        %v808 = vshrl.u32 %v807, 7
        %v809 = vsub.s32 %v806, %v808
        %v810 = vrot.slane %v803, %v809
        %v811 = vcombine.low %v715, %v722
        %v813 = vunpack.c.l.s4 1983009808
        %v814 = vunpack.c.0.s8 %v813
        %v815 = vlaneseq
        %v816 = vshrl.u32 %v815, 7
        %v817 = vsub.s32 %v814, %v816
        %v818 = vrot.slane %v811, %v817
        %v819 = vcombine.low %v725, %v726
        %v821 = vunpack.c.l.s4 1983009808
        %v822 = vunpack.c.0.s8 %v821
        %v823 = vlaneseq
        %v824 = vshrl.u32 %v823, 7
        %v825 = vsub.s32 %v822, %v824
        %v826 = vrot.slane %v819, %v825
        %v827 = vcombine.low %v802, %v810
        %v828 = vcombine.high %v802, %v810
        %v830 = vunpack.c.l.s4 1934713408
        %v831 = vunpack.c.0.s8 %v830
        %v832 = vlaneseq
        %v833 = vshrl.u32 %v832, 7
        %v834 = vsub.s32 %v831, %v833
        %v835 = vrot.slane %v827, %v834
        %v837 = vunpack.c.l.s4 1934713408
        %v838 = vunpack.c.0.s8 %v837
        %v839 = vlaneseq
        %v840 = vshrl.u32 %v839, 7
        %v841 = vsub.s32 %v838, %v840
        %v842 = vrot.slane %v828, %v841
        %v843 = vcombine.low %v818, %v826
        %v844 = vcombine.high %v818, %v826
        %v846 = vunpack.c.l.s4 1934713408
        %v847 = vunpack.c.0.s8 %v846
        %v848 = vlaneseq
        %v849 = vshrl.u32 %v848, 7
        %v850 = vsub.s32 %v847, %v849
        %v851 = vrot.slane %v843, %v850
        %v853 = vunpack.c.l.s4 1934713408
        %v854 = vunpack.c.0.s8 %v853
        %v855 = vlaneseq
        %v856 = vshrl.u32 %v855, 7
        %v857 = vsub.s32 %v854, %v856
        %v858 = vrot.slane %v844, %v857
        %v859 = vcombine.low %v835, %v851
        %v860 = vcombine.high %v835, %v851
        %v861 = vcombine.low %v842, %v858
        %v862 = vcombine.high %v842, %v858
        %v863 = vcombine.low %v767, %v774
        %v865 = vunpack.c.l.s4 1983009808
        %v866 = vunpack.c.0.s8 %v865
        %v867 = vlaneseq
        %v868 = vshrl.u32 %v867, 7
        %v869 = vsub.s32 %v866, %v868
        %v870 = vrot.slane %v863, %v869
        %v871 = vcombine.low %v791, %v792
        %v873 = vunpack.c.l.s4 1983009808
        %v874 = vunpack.c.0.s8 %v873
        %v875 = vlaneseq
        %v876 = vshrl.u32 %v875, 7
        %v877 = vsub.s32 %v874, %v876
        %v878 = vrot.slane %v871, %v877
        %v879 = vcombine.low %v783, %v790
        %v881 = vunpack.c.l.s4 1983009808
        %v882 = vunpack.c.0.s8 %v881
        %v883 = vlaneseq
        %v884 = vshrl.u32 %v883, 7
        %v885 = vsub.s32 %v882, %v884
        %v886 = vrot.slane %v879, %v885
        %v887 = vcombine.low %v793, %v794
        %v889 = vunpack.c.l.s4 1983009808
        %v890 = vunpack.c.0.s8 %v889
        %v891 = vlaneseq
        %v892 = vshrl.u32 %v891, 7
        %v893 = vsub.s32 %v890, %v892
        %v894 = vrot.slane %v887, %v893
        %v895 = vcombine.low %v870, %v878
        %v896 = vcombine.high %v870, %v878
        %v898 = vunpack.c.l.s4 1934713408
        %v899 = vunpack.c.0.s8 %v898
        %v900 = vlaneseq
        %v901 = vshrl.u32 %v900, 7
        %v902 = vsub.s32 %v899, %v901
        %v903 = vrot.slane %v895, %v902
        %v905 = vunpack.c.l.s4 1934713408
        %v906 = vunpack.c.0.s8 %v905
        %v907 = vlaneseq
        %v908 = vshrl.u32 %v907, 7
        %v909 = vsub.s32 %v906, %v908
        %v910 = vrot.slane %v896, %v909
        %v911 = vcombine.low %v886, %v894
        %v912 = vcombine.high %v886, %v894
        %v914 = vunpack.c.l.s4 1934713408
        %v915 = vunpack.c.0.s8 %v914
        %v916 = vlaneseq
        %v917 = vshrl.u32 %v916, 7
        %v918 = vsub.s32 %v915, %v917
        %v919 = vrot.slane %v911, %v918
        %v921 = vunpack.c.l.s4 1934713408
        %v922 = vunpack.c.0.s8 %v921
        %v923 = vlaneseq
        %v924 = vshrl.u32 %v923, 7
        %v925 = vsub.s32 %v922, %v924
        %v926 = vrot.slane %v912, %v925
        %v927 = vcombine.low %v903, %v919
        %v928 = vcombine.high %v903, %v919
        %v929 = vcombine.low %v910, %v926
        %v930 = vcombine.high %v910, %v926
        %931 = vrot.lane.b32.xlu0 %v633, 96
        %v932 = vpop.permute.xlu0 %931
        %933 = vrot.lane.b32.xlu0 %v636, 96
        %v934 = vpop.permute.xlu0 %933
        %935 = vrot.lane.b32.xlu0 %v642, 96
        %v936 = vpop.permute.xlu0 %935
        %937 = vrot.lane.b32.xlu0 %v644, 96
        %v938 = vpop.permute.xlu0 %937
        %939 = vrot.lane.b32.xlu0 %v648, 96
        %v940 = vpop.permute.xlu0 %939
        %941 = vrot.lane.b32.xlu0 %v650, 96
        %v942 = vpop.permute.xlu0 %941
        %943 = vrot.lane.b32.xlu0 %v654, 96
        %v944 = vpop.permute.xlu0 %943
        %945 = vrot.lane.b32.xlu0 %v656, 96
        %v946 = vpop.permute.xlu0 %945
        %v955 = vcombine.low %v932, %v940
        %v956 = vcombine.high %v932, %v940
        %v958 = vunpack.c.l.s4 1983009808
        %v959 = vunpack.c.0.s8 %v958
        %v960 = vlaneseq
        %v961 = vshrl.u32 %v960, 7
        %v962 = vsub.s32 %v959, %v961
        %v963 = vrot.slane %v955, %v962
        %v965 = vunpack.c.l.s4 1983009808
        %v966 = vunpack.c.0.s8 %v965
        %v967 = vlaneseq
        %v968 = vshrl.u32 %v967, 7
        %v969 = vsub.s32 %v966, %v968
        %v970 = vrot.slane %v956, %v969
        %v971 = vcombine.low %v936, %v944
        %v972 = vcombine.high %v936, %v944
        %v974 = vunpack.c.l.s4 1983009808
        %v975 = vunpack.c.0.s8 %v974
        %v976 = vlaneseq
        %v977 = vshrl.u32 %v976, 7
        %v978 = vsub.s32 %v975, %v977
        %v979 = vrot.slane %v971, %v978
        %v981 = vunpack.c.l.s4 1983009808
        %v982 = vunpack.c.0.s8 %v981
        %v983 = vlaneseq
        %v984 = vshrl.u32 %v983, 7
        %v985 = vsub.s32 %v982, %v984
        %v986 = vrot.slane %v972, %v985
        %v987 = vcombine.low %v963, %v979
        %v988 = vcombine.high %v963, %v979
        %v990 = vunpack.c.l.s4 1934713408
        %v991 = vunpack.c.0.s8 %v990
        %v992 = vlaneseq
        %v993 = vshrl.u32 %v992, 7
        %v994 = vsub.s32 %v991, %v993
        %v995 = vrot.slane %v987, %v994
        %v997 = vunpack.c.l.s4 1934713408
        %v998 = vunpack.c.0.s8 %v997
        %v999 = vlaneseq
        %v1000 = vshrl.u32 %v999, 7
        %v1001 = vsub.s32 %v998, %v1000
        %v1002 = vrot.slane %v988, %v1001
        %v1003 = vcombine.low %v970, %v986
        %v1004 = vcombine.high %v970, %v986
        %v1006 = vunpack.c.l.s4 1934713408
        %v1007 = vunpack.c.0.s8 %v1006
        %v1008 = vlaneseq
        %v1009 = vshrl.u32 %v1008, 7
        %v1010 = vsub.s32 %v1007, %v1009
        %v1011 = vrot.slane %v1003, %v1010
        %v1013 = vunpack.c.l.s4 1934713408
        %v1014 = vunpack.c.0.s8 %v1013
        %v1015 = vlaneseq
        %v1016 = vshrl.u32 %v1015, 7
        %v1017 = vsub.s32 %v1014, %v1016
        %v1018 = vrot.slane %v1004, %v1017
        %v1019 = vcombine.high %v995, 0.0
        %v1020 = vcombine.high %v1002, 0.0
        %v1021 = vcombine.high %v1011, 0.0
        %v1022 = vcombine.high %v1018, 0.0
        %v1023 = vcombine.low %v934, %v942
        %v1024 = vcombine.high %v934, %v942
        %v1026 = vunpack.c.l.s4 1983009808
        %v1027 = vunpack.c.0.s8 %v1026
        %v1028 = vlaneseq
        %v1029 = vshrl.u32 %v1028, 7
        %v1030 = vsub.s32 %v1027, %v1029
        %v1031 = vrot.slane %v1023, %v1030
        %v1033 = vunpack.c.l.s4 1983009808
        %v1034 = vunpack.c.0.s8 %v1033
        %v1035 = vlaneseq
        %v1036 = vshrl.u32 %v1035, 7
        %v1037 = vsub.s32 %v1034, %v1036
        %v1038 = vrot.slane %v1024, %v1037
        %v1039 = vcombine.low %v938, %v946
        %v1040 = vcombine.high %v938, %v946
        %v1042 = vunpack.c.l.s4 1983009808
        %v1043 = vunpack.c.0.s8 %v1042
        %v1044 = vlaneseq
        %v1045 = vshrl.u32 %v1044, 7
        %v1046 = vsub.s32 %v1043, %v1045
        %v1047 = vrot.slane %v1039, %v1046
        %v1049 = vunpack.c.l.s4 1983009808
        %v1050 = vunpack.c.0.s8 %v1049
        %v1051 = vlaneseq
        %v1052 = vshrl.u32 %v1051, 7
        %v1053 = vsub.s32 %v1050, %v1052
        %v1054 = vrot.slane %v1040, %v1053
        %v1055 = vcombine.low %v1031, %v1047
        %v1056 = vcombine.high %v1031, %v1047
        %v1058 = vunpack.c.l.s4 1934713408
        %v1059 = vunpack.c.0.s8 %v1058
        %v1060 = vlaneseq
        %v1061 = vshrl.u32 %v1060, 7
        %v1062 = vsub.s32 %v1059, %v1061
        %v1063 = vrot.slane %v1055, %v1062
        %v1065 = vunpack.c.l.s4 1934713408
        %v1066 = vunpack.c.0.s8 %v1065
        %v1067 = vlaneseq
        %v1068 = vshrl.u32 %v1067, 7
        %v1069 = vsub.s32 %v1066, %v1068
        %v1070 = vrot.slane %v1056, %v1069
        %v1071 = vcombine.low %v1038, %v1054
        %v1072 = vcombine.high %v1038, %v1054
        %v1074 = vunpack.c.l.s4 1934713408
        %v1075 = vunpack.c.0.s8 %v1074
        %v1076 = vlaneseq
        %v1077 = vshrl.u32 %v1076, 7
        %v1078 = vsub.s32 %v1075, %v1077
        %v1079 = vrot.slane %v1071, %v1078
        %v1081 = vunpack.c.l.s4 1934713408
        %v1082 = vunpack.c.0.s8 %v1081
        %v1083 = vlaneseq
        %v1084 = vshrl.u32 %v1083, 7
        %v1085 = vsub.s32 %v1082, %v1084
        %v1086 = vrot.slane %v1072, %v1085
        %v1087 = vcombine.high %v1063, 0.0
        %v1088 = vcombine.high %v1070, 0.0
        %v1089 = vcombine.high %v1079, 0.0
        %v1090 = vcombine.high %v1086, 0.0
        %v1091 = vcombine.low %v995, %v1002
        %v1093 = vunpack.c.l.s4 1983009808
        %v1094 = vunpack.c.0.s8 %v1093
        %v1095 = vlaneseq
        %v1096 = vshrl.u32 %v1095, 7
        %v1097 = vsub.s32 %v1094, %v1096
        %v1098 = vrot.slane %v1091, %v1097
        %v1099 = vcombine.low %v1019, %v1020
        %v1101 = vunpack.c.l.s4 1983009808
        %v1102 = vunpack.c.0.s8 %v1101
        %v1103 = vlaneseq
        %v1104 = vshrl.u32 %v1103, 7
        %v1105 = vsub.s32 %v1102, %v1104
        %v1106 = vrot.slane %v1099, %v1105
        %v1107 = vcombine.low %v1011, %v1018
        %v1109 = vunpack.c.l.s4 1983009808
        %v1110 = vunpack.c.0.s8 %v1109
        %v1111 = vlaneseq
        %v1112 = vshrl.u32 %v1111, 7
        %v1113 = vsub.s32 %v1110, %v1112
        %v1114 = vrot.slane %v1107, %v1113
        %v1115 = vcombine.low %v1021, %v1022
        %v1117 = vunpack.c.l.s4 1983009808
        %v1118 = vunpack.c.0.s8 %v1117
        %v1119 = vlaneseq
        %v1120 = vshrl.u32 %v1119, 7
        %v1121 = vsub.s32 %v1118, %v1120
        %v1122 = vrot.slane %v1115, %v1121
        %v1123 = vcombine.low %v1098, %v1106
        %v1124 = vcombine.high %v1098, %v1106
        %v1126 = vunpack.c.l.s4 1934713408
        %v1127 = vunpack.c.0.s8 %v1126
        %v1128 = vlaneseq
        %v1129 = vshrl.u32 %v1128, 7
        %v1130 = vsub.s32 %v1127, %v1129
        %v1131 = vrot.slane %v1123, %v1130
        %v1133 = vunpack.c.l.s4 1934713408
        %v1134 = vunpack.c.0.s8 %v1133
        %v1135 = vlaneseq
        %v1136 = vshrl.u32 %v1135, 7
        %v1137 = vsub.s32 %v1134, %v1136
        %v1138 = vrot.slane %v1124, %v1137
        %v1139 = vcombine.low %v1114, %v1122
        %v1140 = vcombine.high %v1114, %v1122
        %v1142 = vunpack.c.l.s4 1934713408
        %v1143 = vunpack.c.0.s8 %v1142
        %v1144 = vlaneseq
        %v1145 = vshrl.u32 %v1144, 7
        %v1146 = vsub.s32 %v1143, %v1145
        %v1147 = vrot.slane %v1139, %v1146
        %v1149 = vunpack.c.l.s4 1934713408
        %v1150 = vunpack.c.0.s8 %v1149
        %v1151 = vlaneseq
        %v1152 = vshrl.u32 %v1151, 7
        %v1153 = vsub.s32 %v1150, %v1152
        %v1154 = vrot.slane %v1140, %v1153
        %v1155 = vcombine.low %v1131, %v1147
        %v1156 = vcombine.high %v1131, %v1147
        %v1157 = vcombine.low %v1138, %v1154
        %v1158 = vcombine.high %v1138, %v1154
        %v1159 = vcombine.low %v1063, %v1070
        %v1161 = vunpack.c.l.s4 1983009808
        %v1162 = vunpack.c.0.s8 %v1161
        %v1163 = vlaneseq
        %v1164 = vshrl.u32 %v1163, 7
        %v1165 = vsub.s32 %v1162, %v1164
        %v1166 = vrot.slane %v1159, %v1165
        %v1167 = vcombine.low %v1087, %v1088
        %v1169 = vunpack.c.l.s4 1983009808
        %v1170 = vunpack.c.0.s8 %v1169
        %v1171 = vlaneseq
        %v1172 = vshrl.u32 %v1171, 7
        %v1173 = vsub.s32 %v1170, %v1172
        %v1174 = vrot.slane %v1167, %v1173
        %v1175 = vcombine.low %v1079, %v1086
        %v1177 = vunpack.c.l.s4 1983009808
        %v1178 = vunpack.c.0.s8 %v1177
        %v1179 = vlaneseq
        %v1180 = vshrl.u32 %v1179, 7
        %v1181 = vsub.s32 %v1178, %v1180
        %v1182 = vrot.slane %v1175, %v1181
        %v1183 = vcombine.low %v1089, %v1090
        %v1185 = vunpack.c.l.s4 1983009808
        %v1186 = vunpack.c.0.s8 %v1185
        %v1187 = vlaneseq
        %v1188 = vshrl.u32 %v1187, 7
        %v1189 = vsub.s32 %v1186, %v1188
        %v1190 = vrot.slane %v1183, %v1189
        %v1191 = vcombine.low %v1166, %v1174
        %v1192 = vcombine.high %v1166, %v1174
        %v1194 = vunpack.c.l.s4 1934713408
        %v1195 = vunpack.c.0.s8 %v1194
        %v1196 = vlaneseq
        %v1197 = vshrl.u32 %v1196, 7
        %v1198 = vsub.s32 %v1195, %v1197
        %v1199 = vrot.slane %v1191, %v1198
        %v1201 = vunpack.c.l.s4 1934713408
        %v1202 = vunpack.c.0.s8 %v1201
        %v1203 = vlaneseq
        %v1204 = vshrl.u32 %v1203, 7
        %v1205 = vsub.s32 %v1202, %v1204
        %v1206 = vrot.slane %v1192, %v1205
        %v1207 = vcombine.low %v1182, %v1190
        %v1208 = vcombine.high %v1182, %v1190
        %v1210 = vunpack.c.l.s4 1934713408
        %v1211 = vunpack.c.0.s8 %v1210
        %v1212 = vlaneseq
        %v1213 = vshrl.u32 %v1212, 7
        %v1214 = vsub.s32 %v1211, %v1213
        %v1215 = vrot.slane %v1207, %v1214
        %v1217 = vunpack.c.l.s4 1934713408
        %v1218 = vunpack.c.0.s8 %v1217
        %v1219 = vlaneseq
        %v1220 = vshrl.u32 %v1219, 7
        %v1221 = vsub.s32 %v1218, %v1220
        %v1222 = vrot.slane %v1208, %v1221
        %v1223 = vcombine.low %v1199, %v1215
        %v1224 = vcombine.high %v1199, %v1215
        %v1225 = vcombine.low %v1206, %v1222
        %v1226 = vcombine.high %v1206, %v1222
        %1227 = vrot.lane.b32.xlu0 %v633, 64
        %v1228 = vpop.permute.xlu0 %1227
        %1229 = vrot.lane.b32.xlu0 %v636, 64
        %v1230 = vpop.permute.xlu0 %1229
        %1231 = vrot.lane.b32.xlu0 %v642, 64
        %v1232 = vpop.permute.xlu0 %1231
        %1233 = vrot.lane.b32.xlu0 %v644, 64
        %v1234 = vpop.permute.xlu0 %1233
        %1235 = vrot.lane.b32.xlu0 %v648, 64
        %v1236 = vpop.permute.xlu0 %1235
        %1237 = vrot.lane.b32.xlu0 %v650, 64
        %v1238 = vpop.permute.xlu0 %1237
        %1239 = vrot.lane.b32.xlu0 %v654, 64
        %v1240 = vpop.permute.xlu0 %1239
        %1241 = vrot.lane.b32.xlu0 %v656, 64
        %v1242 = vpop.permute.xlu0 %1241
        %v1251 = vcombine.low %v1228, %v1236
        %v1252 = vcombine.high %v1228, %v1236
        %v1254 = vunpack.c.l.s4 1983009808
        %v1255 = vunpack.c.0.s8 %v1254
        %v1256 = vlaneseq
        %v1257 = vshrl.u32 %v1256, 7
        %v1258 = vsub.s32 %v1255, %v1257
        %v1259 = vrot.slane %v1251, %v1258
        %v1261 = vunpack.c.l.s4 1983009808
        %v1262 = vunpack.c.0.s8 %v1261
        %v1263 = vlaneseq
        %v1264 = vshrl.u32 %v1263, 7
        %v1265 = vsub.s32 %v1262, %v1264
        %v1266 = vrot.slane %v1252, %v1265
        %v1267 = vcombine.low %v1232, %v1240
        %v1268 = vcombine.high %v1232, %v1240
        %v1270 = vunpack.c.l.s4 1983009808
        %v1271 = vunpack.c.0.s8 %v1270
        %v1272 = vlaneseq
        %v1273 = vshrl.u32 %v1272, 7
        %v1274 = vsub.s32 %v1271, %v1273
        %v1275 = vrot.slane %v1267, %v1274
        %v1277 = vunpack.c.l.s4 1983009808
        %v1278 = vunpack.c.0.s8 %v1277
        %v1279 = vlaneseq
        %v1280 = vshrl.u32 %v1279, 7
        %v1281 = vsub.s32 %v1278, %v1280
        %v1282 = vrot.slane %v1268, %v1281
        %v1283 = vcombine.low %v1259, %v1275
        %v1284 = vcombine.high %v1259, %v1275
        %v1286 = vunpack.c.l.s4 1934713408
        %v1287 = vunpack.c.0.s8 %v1286
        %v1288 = vlaneseq
        %v1289 = vshrl.u32 %v1288, 7
        %v1290 = vsub.s32 %v1287, %v1289
        %v1291 = vrot.slane %v1283, %v1290
        %v1293 = vunpack.c.l.s4 1934713408
        %v1294 = vunpack.c.0.s8 %v1293
        %v1295 = vlaneseq
        %v1296 = vshrl.u32 %v1295, 7
        %v1297 = vsub.s32 %v1294, %v1296
        %v1298 = vrot.slane %v1284, %v1297
        %v1299 = vcombine.low %v1266, %v1282
        %v1300 = vcombine.high %v1266, %v1282
        %v1302 = vunpack.c.l.s4 1934713408
        %v1303 = vunpack.c.0.s8 %v1302
        %v1304 = vlaneseq
        %v1305 = vshrl.u32 %v1304, 7
        %v1306 = vsub.s32 %v1303, %v1305
        %v1307 = vrot.slane %v1299, %v1306
        %v1309 = vunpack.c.l.s4 1934713408
        %v1310 = vunpack.c.0.s8 %v1309
        %v1311 = vlaneseq
        %v1312 = vshrl.u32 %v1311, 7
        %v1313 = vsub.s32 %v1310, %v1312
        %v1314 = vrot.slane %v1300, %v1313
        %v1315 = vcombine.high %v1291, 0.0
        %v1316 = vcombine.high %v1298, 0.0
        %v1317 = vcombine.high %v1307, 0.0
        %v1318 = vcombine.high %v1314, 0.0
        %v1319 = vcombine.low %v1230, %v1238
        %v1320 = vcombine.high %v1230, %v1238
        %v1322 = vunpack.c.l.s4 1983009808
        %v1323 = vunpack.c.0.s8 %v1322
        %v1324 = vlaneseq
        %v1325 = vshrl.u32 %v1324, 7
        %v1326 = vsub.s32 %v1323, %v1325
        %v1327 = vrot.slane %v1319, %v1326
        %v1329 = vunpack.c.l.s4 1983009808
        %v1330 = vunpack.c.0.s8 %v1329
        %v1331 = vlaneseq
        %v1332 = vshrl.u32 %v1331, 7
        %v1333 = vsub.s32 %v1330, %v1332
        %v1334 = vrot.slane %v1320, %v1333
        %v1335 = vcombine.low %v1234, %v1242
        %v1336 = vcombine.high %v1234, %v1242
        %v1338 = vunpack.c.l.s4 1983009808
        %v1339 = vunpack.c.0.s8 %v1338
        %v1340 = vlaneseq
        %v1341 = vshrl.u32 %v1340, 7
        %v1342 = vsub.s32 %v1339, %v1341
        %v1343 = vrot.slane %v1335, %v1342
        %v1345 = vunpack.c.l.s4 1983009808
        %v1346 = vunpack.c.0.s8 %v1345
        %v1347 = vlaneseq
        %v1348 = vshrl.u32 %v1347, 7
        %v1349 = vsub.s32 %v1346, %v1348
        %v1350 = vrot.slane %v1336, %v1349
        %v1351 = vcombine.low %v1327, %v1343
        %v1352 = vcombine.high %v1327, %v1343
        %v1354 = vunpack.c.l.s4 1934713408
        %v1355 = vunpack.c.0.s8 %v1354
        %v1356 = vlaneseq
        %v1357 = vshrl.u32 %v1356, 7
        %v1358 = vsub.s32 %v1355, %v1357
        %v1359 = vrot.slane %v1351, %v1358
        %v1361 = vunpack.c.l.s4 1934713408
        %v1362 = vunpack.c.0.s8 %v1361
        %v1363 = vlaneseq
        %v1364 = vshrl.u32 %v1363, 7
        %v1365 = vsub.s32 %v1362, %v1364
        %v1366 = vrot.slane %v1352, %v1365
        %v1367 = vcombine.low %v1334, %v1350
        %v1368 = vcombine.high %v1334, %v1350
        %v1370 = vunpack.c.l.s4 1934713408
        %v1371 = vunpack.c.0.s8 %v1370
        %v1372 = vlaneseq
        %v1373 = vshrl.u32 %v1372, 7
        %v1374 = vsub.s32 %v1371, %v1373
        %v1375 = vrot.slane %v1367, %v1374
        %v1377 = vunpack.c.l.s4 1934713408
        %v1378 = vunpack.c.0.s8 %v1377
        %v1379 = vlaneseq
        %v1380 = vshrl.u32 %v1379, 7
        %v1381 = vsub.s32 %v1378, %v1380
        %v1382 = vrot.slane %v1368, %v1381
        %v1383 = vcombine.high %v1359, 0.0
        %v1384 = vcombine.high %v1366, 0.0
        %v1385 = vcombine.high %v1375, 0.0
        %v1386 = vcombine.high %v1382, 0.0
        %v1387 = vcombine.low %v1291, %v1298
        %v1389 = vunpack.c.l.s4 1983009808
        %v1390 = vunpack.c.0.s8 %v1389
        %v1391 = vlaneseq
        %v1392 = vshrl.u32 %v1391, 7
        %v1393 = vsub.s32 %v1390, %v1392
        %v1394 = vrot.slane %v1387, %v1393
        %v1395 = vcombine.low %v1315, %v1316
        %v1397 = vunpack.c.l.s4 1983009808
        %v1398 = vunpack.c.0.s8 %v1397
        %v1399 = vlaneseq
        %v1400 = vshrl.u32 %v1399, 7
        %v1401 = vsub.s32 %v1398, %v1400
        %v1402 = vrot.slane %v1395, %v1401
        %v1403 = vcombine.low %v1307, %v1314
        %v1405 = vunpack.c.l.s4 1983009808
        %v1406 = vunpack.c.0.s8 %v1405
        %v1407 = vlaneseq
        %v1408 = vshrl.u32 %v1407, 7
        %v1409 = vsub.s32 %v1406, %v1408
        %v1410 = vrot.slane %v1403, %v1409
        %v1411 = vcombine.low %v1317, %v1318
        %v1413 = vunpack.c.l.s4 1983009808
        %v1414 = vunpack.c.0.s8 %v1413
        %v1415 = vlaneseq
        %v1416 = vshrl.u32 %v1415, 7
        %v1417 = vsub.s32 %v1414, %v1416
        %v1418 = vrot.slane %v1411, %v1417
        %v1419 = vcombine.low %v1394, %v1402
        %v1420 = vcombine.high %v1394, %v1402
        %v1422 = vunpack.c.l.s4 1934713408
        %v1423 = vunpack.c.0.s8 %v1422
        %v1424 = vlaneseq
        %v1425 = vshrl.u32 %v1424, 7
        %v1426 = vsub.s32 %v1423, %v1425
        %v1427 = vrot.slane %v1419, %v1426
        %v1429 = vunpack.c.l.s4 1934713408
        %v1430 = vunpack.c.0.s8 %v1429
        %v1431 = vlaneseq
        %v1432 = vshrl.u32 %v1431, 7
        %v1433 = vsub.s32 %v1430, %v1432
        %v1434 = vrot.slane %v1420, %v1433
        %v1435 = vcombine.low %v1410, %v1418
        %v1436 = vcombine.high %v1410, %v1418
        %v1438 = vunpack.c.l.s4 1934713408
        %v1439 = vunpack.c.0.s8 %v1438
        %v1440 = vlaneseq
        %v1441 = vshrl.u32 %v1440, 7
        %v1442 = vsub.s32 %v1439, %v1441
        %v1443 = vrot.slane %v1435, %v1442
        %v1445 = vunpack.c.l.s4 1934713408
        %v1446 = vunpack.c.0.s8 %v1445
        %v1447 = vlaneseq
        %v1448 = vshrl.u32 %v1447, 7
        %v1449 = vsub.s32 %v1446, %v1448
        %v1450 = vrot.slane %v1436, %v1449
        %v1451 = vcombine.low %v1427, %v1443
        %v1452 = vcombine.high %v1427, %v1443
        %v1453 = vcombine.low %v1434, %v1450
        %v1454 = vcombine.high %v1434, %v1450
        %v1455 = vcombine.low %v1359, %v1366
        %v1457 = vunpack.c.l.s4 1983009808
        %v1458 = vunpack.c.0.s8 %v1457
        %v1459 = vlaneseq
        %v1460 = vshrl.u32 %v1459, 7
        %v1461 = vsub.s32 %v1458, %v1460
        %v1462 = vrot.slane %v1455, %v1461
        %v1463 = vcombine.low %v1383, %v1384
        %v1465 = vunpack.c.l.s4 1983009808
        %v1466 = vunpack.c.0.s8 %v1465
        %v1467 = vlaneseq
        %v1468 = vshrl.u32 %v1467, 7
        %v1469 = vsub.s32 %v1466, %v1468
        %v1470 = vrot.slane %v1463, %v1469
        %v1471 = vcombine.low %v1375, %v1382
        %v1473 = vunpack.c.l.s4 1983009808
        %v1474 = vunpack.c.0.s8 %v1473
        %v1475 = vlaneseq
        %v1476 = vshrl.u32 %v1475, 7
        %v1477 = vsub.s32 %v1474, %v1476
        %v1478 = vrot.slane %v1471, %v1477
        %v1479 = vcombine.low %v1385, %v1386
        %v1481 = vunpack.c.l.s4 1983009808
        %v1482 = vunpack.c.0.s8 %v1481
        %v1483 = vlaneseq
        %v1484 = vshrl.u32 %v1483, 7
        %v1485 = vsub.s32 %v1482, %v1484
        %v1486 = vrot.slane %v1479, %v1485
        %v1487 = vcombine.low %v1462, %v1470
        %v1488 = vcombine.high %v1462, %v1470
        %v1490 = vunpack.c.l.s4 1934713408
        %v1491 = vunpack.c.0.s8 %v1490
        %v1492 = vlaneseq
        %v1493 = vshrl.u32 %v1492, 7
        %v1494 = vsub.s32 %v1491, %v1493
        %v1495 = vrot.slane %v1487, %v1494
        %v1497 = vunpack.c.l.s4 1934713408
        %v1498 = vunpack.c.0.s8 %v1497
        %v1499 = vlaneseq
        %v1500 = vshrl.u32 %v1499, 7
        %v1501 = vsub.s32 %v1498, %v1500
        %v1502 = vrot.slane %v1488, %v1501
        %v1503 = vcombine.low %v1478, %v1486
        %v1504 = vcombine.high %v1478, %v1486
        %v1506 = vunpack.c.l.s4 1934713408
        %v1507 = vunpack.c.0.s8 %v1506
        %v1508 = vlaneseq
        %v1509 = vshrl.u32 %v1508, 7
        %v1510 = vsub.s32 %v1507, %v1509
        %v1511 = vrot.slane %v1503, %v1510
        %v1513 = vunpack.c.l.s4 1934713408
        %v1514 = vunpack.c.0.s8 %v1513
        %v1515 = vlaneseq
        %v1516 = vshrl.u32 %v1515, 7
        %v1517 = vsub.s32 %v1514, %v1516
        %v1518 = vrot.slane %v1504, %v1517
        %v1519 = vcombine.low %v1495, %v1511
        %v1520 = vcombine.high %v1495, %v1511
        %v1521 = vcombine.low %v1502, %v1518
        %v1522 = vcombine.high %v1502, %v1518
        %v1523 = vpack.c.bf16 %v859, %v859
        %v1524 = vpack.c.bf16 %v860, %v860
        %v1525 = vpack.c.bf16 %v861, %v861
        %v1526 = vpack.c.bf16 %v862, %v862
        %v1527 = vpack.c.bf16 %v927, %v927
        %v1528 = vpack.c.bf16 %v928, %v928
        %v1529 = vpack.c.bf16 %v929, %v929
        %v1530 = vpack.c.bf16 %v930, %v930
        %v1531 = vpack.c.bf16 %v1155, %v1155
        %v1532 = vpack.c.bf16 %v1156, %v1156
        %v1533 = vpack.c.bf16 %v1157, %v1157
        %v1534 = vpack.c.bf16 %v1158, %v1158
        %v1535 = vpack.c.bf16 %v1223, %v1223
        %v1536 = vpack.c.bf16 %v1224, %v1224
        %v1537 = vpack.c.bf16 %v1225, %v1225
        %v1538 = vpack.c.bf16 %v1226, %v1226
        %v1539 = vld [vmem:[%s1] sm:$0xff]
        %vm1540 = vcmask 64512
        %v1542 = vsel %vm1540, %v1523, 0
        %v1545 = vsel %vm1540, %v1531, 0
        %1547 = vmatprep.subr.bf16.mxu0 0
        %1548 = vmatpush1.bf16.xpose.msra.mxu0 %v1545
        %1549 = vmatprep.subr.bf16.mxu0 0
        %1550 = vmatpush1.bf16.xpose.msra.mxu0 0
        %1551 = vmatprep.subr.bf16.mxu0 0
        %1552 = vmatpush1.bf16.xpose.msra.mxu0 0
        %1553 = vmatprep.subr.bf16.mxu0 0
        %1554 = vmatpush1.bf16.xpose.msra.mxu0 0
        %1555 = vmatprep.subr.bf16.mxu0 0
        %1556 = vmatpush1.bf16.xpose.msra.mxu0 0
        %1557 = vmatprep.subr.bf16.mxu0 0
        %1558 = vmatpush1.bf16.xpose.msra.mxu0 0
        %1559 = vmatprep.subr.bf16.mxu0 0
        %1560 = vmatpush1.bf16.xpose.msra.mxu0 0
        %1561 = vmatprep.subr.bf16.mxu0 0
        %1562 = vmatpush1.bf16.xpose.msra.mxu0 0
        %1563 = vmatprep.subr.bf16.mxu0 0
        %1564 = vmatpush1.bf16.xpose.msra.mxu0 0
        %1565 = vmatprep.subr.bf16.mxu0 0
        %1566 = vmatpush1.bf16.xpose.msra.mxu0 0
        %1567 = vmatprep.subr.bf16.mxu0 0
        %1568 = vmatpush1.bf16.xpose.msra.mxu0 0
        %1569 = vmatprep.subr.bf16.mxu0 0
        %1570 = vmatpush1.bf16.xpose.msra.mxu0 0
        %1571 = vmatprep.subr.bf16.mxu0 0
        %1572 = vmatpush1.bf16.xpose.msra.mxu0 0
        %1573 = vmatprep.subr.bf16.mxu0 0
        %1574 = vmatpush1.bf16.xpose.msra.mxu0 0
        %1575 = vmatprep.subr.bf16.mxu0 0
        %1576 = vmatpush1.bf16.xpose.msra.mxu0 0
        %1577 = vmatprep.subr.bf16.mxu0 0
        %1578 = vmatpush1.bf16.xpose.msra.mxu0 0
        %1579 = vmatprep.mubr.bf16.mxu0 0
        %1580 = vmatmul.mubr.bf16.gmra.mrb[0].mxu0 %v1542
        %v1581 = vpop.f32.mrb[0].mxu0
        %v1582 = vadd.f32 %v1539, %v1581
        %v1583 = vpop.f32.mrb[0].mxu0
        %v1584 = vpop.f32.mrb[0].mxu0
        %v1585 = vpop.f32.mrb[0].mxu0
        %1586 = vdwg.mxu0
        %v1588 = vsel %vm1540, %v1524, 0
        %v1591 = vsel %vm1540, %v1532, 0
        %1593 = vmatprep.subr.bf16.mxu0 0
        %1594 = vmatpush1.bf16.xpose.msra.mxu0 %v1591
        %1595 = vmatprep.subr.bf16.mxu0 0
        %1596 = vmatpush1.bf16.xpose.msra.mxu0 0
        %1597 = vmatprep.subr.bf16.mxu0 0
        %1598 = vmatpush1.bf16.xpose.msra.mxu0 0
        %1599 = vmatprep.subr.bf16.mxu0 0
        %1600 = vmatpush1.bf16.xpose.msra.mxu0 0
        %1601 = vmatprep.subr.bf16.mxu0 0
        %1602 = vmatpush1.bf16.xpose.msra.mxu0 0
        %1603 = vmatprep.subr.bf16.mxu0 0
        %1604 = vmatpush1.bf16.xpose.msra.mxu0 0
        %1605 = vmatprep.subr.bf16.mxu0 0
        %1606 = vmatpush1.bf16.xpose.msra.mxu0 0
        %1607 = vmatprep.subr.bf16.mxu0 0
        %1608 = vmatpush1.bf16.xpose.msra.mxu0 0
        %1609 = vmatprep.subr.bf16.mxu0 0
        %1610 = vmatpush1.bf16.xpose.msra.mxu0 0
        %1611 = vmatprep.subr.bf16.mxu0 0
        %1612 = vmatpush1.bf16.xpose.msra.mxu0 0
        %1613 = vmatprep.subr.bf16.mxu0 0
        %1614 = vmatpush1.bf16.xpose.msra.mxu0 0
        %1615 = vmatprep.subr.bf16.mxu0 0
        %1616 = vmatpush1.bf16.xpose.msra.mxu0 0
        %1617 = vmatprep.subr.bf16.mxu0 0
        %1618 = vmatpush1.bf16.xpose.msra.mxu0 0
        %1619 = vmatprep.subr.bf16.mxu0 0
        %1620 = vmatpush1.bf16.xpose.msra.mxu0 0
        %1621 = vmatprep.subr.bf16.mxu0 0
        %1622 = vmatpush1.bf16.xpose.msra.mxu0 0
        %1623 = vmatprep.subr.bf16.mxu0 0
        %1624 = vmatpush1.bf16.xpose.msra.mxu0 0
        %1625 = vmatprep.mubr.bf16.mxu0 0
        %1626 = vmatmul.mubr.bf16.gmra.mrb[0].mxu0 %v1588
        %v1627 = vpop.f32.mrb[0].mxu0
        %v1628 = vadd.f32 %v1539, %v1627
        %v1629 = vpop.f32.mrb[0].mxu0
        %v1630 = vpop.f32.mrb[0].mxu0
        %v1631 = vpop.f32.mrb[0].mxu0
        %1632 = vdwg.mxu0
        %v1634 = vsel %vm1540, %v1525, 0
        %v1637 = vsel %vm1540, %v1533, 0
        %1639 = vmatprep.subr.bf16.mxu0 0
        %1640 = vmatpush1.bf16.xpose.msra.mxu0 %v1637
        %1641 = vmatprep.subr.bf16.mxu0 0
        %1642 = vmatpush1.bf16.xpose.msra.mxu0 0
        %1643 = vmatprep.subr.bf16.mxu0 0
        %1644 = vmatpush1.bf16.xpose.msra.mxu0 0
        %1645 = vmatprep.subr.bf16.mxu0 0
        %1646 = vmatpush1.bf16.xpose.msra.mxu0 0
        %1647 = vmatprep.subr.bf16.mxu0 0
        %1648 = vmatpush1.bf16.xpose.msra.mxu0 0
        %1649 = vmatprep.subr.bf16.mxu0 0
        %1650 = vmatpush1.bf16.xpose.msra.mxu0 0
        %1651 = vmatprep.subr.bf16.mxu0 0
        %1652 = vmatpush1.bf16.xpose.msra.mxu0 0
        %1653 = vmatprep.subr.bf16.mxu0 0
        %1654 = vmatpush1.bf16.xpose.msra.mxu0 0
        %1655 = vmatprep.subr.bf16.mxu0 0
        %1656 = vmatpush1.bf16.xpose.msra.mxu0 0
        %1657 = vmatprep.subr.bf16.mxu0 0
        %1658 = vmatpush1.bf16.xpose.msra.mxu0 0
        %1659 = vmatprep.subr.bf16.mxu0 0
        %1660 = vmatpush1.bf16.xpose.msra.mxu0 0
        %1661 = vmatprep.subr.bf16.mxu0 0
        %1662 = vmatpush1.bf16.xpose.msra.mxu0 0
        %1663 = vmatprep.subr.bf16.mxu0 0
        %1664 = vmatpush1.bf16.xpose.msra.mxu0 0
        %1665 = vmatprep.subr.bf16.mxu0 0
        %1666 = vmatpush1.bf16.xpose.msra.mxu0 0
        %1667 = vmatprep.subr.bf16.mxu0 0
        %1668 = vmatpush1.bf16.xpose.msra.mxu0 0
        %1669 = vmatprep.subr.bf16.mxu0 0
        %1670 = vmatpush1.bf16.xpose.msra.mxu0 0
        %1671 = vmatprep.mubr.bf16.mxu0 0
        %1672 = vmatmul.mubr.bf16.gmra.mrb[0].mxu0 %v1634
        %v1673 = vpop.f32.mrb[0].mxu0
        %v1674 = vadd.f32 %v1539, %v1673
        %v1675 = vpop.f32.mrb[0].mxu0
        %v1676 = vpop.f32.mrb[0].mxu0
        %v1677 = vpop.f32.mrb[0].mxu0
        %1678 = vdwg.mxu0
        %v1680 = vsel %vm1540, %v1526, 0
        %v1683 = vsel %vm1540, %v1534, 0
        %1685 = vmatprep.subr.bf16.mxu0 0
        %1686 = vmatpush1.bf16.xpose.msra.mxu0 %v1683
        %1687 = vmatprep.subr.bf16.mxu0 0
        %1688 = vmatpush1.bf16.xpose.msra.mxu0 0
        %1689 = vmatprep.subr.bf16.mxu0 0
        %1690 = vmatpush1.bf16.xpose.msra.mxu0 0
        %1691 = vmatprep.subr.bf16.mxu0 0
        %1692 = vmatpush1.bf16.xpose.msra.mxu0 0
        %1693 = vmatprep.subr.bf16.mxu0 0
        %1694 = vmatpush1.bf16.xpose.msra.mxu0 0
        %1695 = vmatprep.subr.bf16.mxu0 0
        %1696 = vmatpush1.bf16.xpose.msra.mxu0 0
        %1697 = vmatprep.subr.bf16.mxu0 0
        %1698 = vmatpush1.bf16.xpose.msra.mxu0 0
        %1699 = vmatprep.subr.bf16.mxu0 0
        %1700 = vmatpush1.bf16.xpose.msra.mxu0 0
        %1701 = vmatprep.subr.bf16.mxu0 0
        %1702 = vmatpush1.bf16.xpose.msra.mxu0 0
        %1703 = vmatprep.subr.bf16.mxu0 0
        %1704 = vmatpush1.bf16.xpose.msra.mxu0 0
        %1705 = vmatprep.subr.bf16.mxu0 0
        %1706 = vmatpush1.bf16.xpose.msra.mxu0 0
        %1707 = vmatprep.subr.bf16.mxu0 0
        %1708 = vmatpush1.bf16.xpose.msra.mxu0 0
        %1709 = vmatprep.subr.bf16.mxu0 0
        %1710 = vmatpush1.bf16.xpose.msra.mxu0 0
        %1711 = vmatprep.subr.bf16.mxu0 0
        %1712 = vmatpush1.bf16.xpose.msra.mxu0 0
        %1713 = vmatprep.subr.bf16.mxu0 0
        %1714 = vmatpush1.bf16.xpose.msra.mxu0 0
        %1715 = vmatprep.subr.bf16.mxu0 0
        %1716 = vmatpush1.bf16.xpose.msra.mxu0 0
        %1717 = vmatprep.mubr.bf16.mxu0 0
        %1718 = vmatmul.mubr.bf16.gmra.mrb[0].mxu0 %v1680
        %v1719 = vpop.f32.mrb[0].mxu0
        %v1720 = vadd.f32 %v1539, %v1719
        %v1721 = vpop.f32.mrb[0].mxu0
        %v1722 = vpop.f32.mrb[0].mxu0
        %v1723 = vpop.f32.mrb[0].mxu0
        %1724 = vdwg.mxu0
        %v1726 = vsel %vm1540, %v1527, 0
        %v1729 = vsel %vm1540, %v1535, 0
        %1731 = vmatprep.subr.bf16.mxu0 0
        %1732 = vmatpush1.bf16.xpose.msra.mxu0 %v1729
        %1733 = vmatprep.subr.bf16.mxu0 0
        %1734 = vmatpush1.bf16.xpose.msra.mxu0 0
        %1735 = vmatprep.subr.bf16.mxu0 0
        %1736 = vmatpush1.bf16.xpose.msra.mxu0 0
        %1737 = vmatprep.subr.bf16.mxu0 0
        %1738 = vmatpush1.bf16.xpose.msra.mxu0 0
        %1739 = vmatprep.subr.bf16.mxu0 0
        %1740 = vmatpush1.bf16.xpose.msra.mxu0 0
        %1741 = vmatprep.subr.bf16.mxu0 0
        %1742 = vmatpush1.bf16.xpose.msra.mxu0 0
        %1743 = vmatprep.subr.bf16.mxu0 0
        %1744 = vmatpush1.bf16.xpose.msra.mxu0 0
        %1745 = vmatprep.subr.bf16.mxu0 0
        %1746 = vmatpush1.bf16.xpose.msra.mxu0 0
        %1747 = vmatprep.subr.bf16.mxu0 0
        %1748 = vmatpush1.bf16.xpose.msra.mxu0 0
        %1749 = vmatprep.subr.bf16.mxu0 0
        %1750 = vmatpush1.bf16.xpose.msra.mxu0 0
        %1751 = vmatprep.subr.bf16.mxu0 0
        %1752 = vmatpush1.bf16.xpose.msra.mxu0 0
        %1753 = vmatprep.subr.bf16.mxu0 0
        %1754 = vmatpush1.bf16.xpose.msra.mxu0 0
        %1755 = vmatprep.subr.bf16.mxu0 0
        %1756 = vmatpush1.bf16.xpose.msra.mxu0 0
        %1757 = vmatprep.subr.bf16.mxu0 0
        %1758 = vmatpush1.bf16.xpose.msra.mxu0 0
        %1759 = vmatprep.subr.bf16.mxu0 0
        %1760 = vmatpush1.bf16.xpose.msra.mxu0 0
        %1761 = vmatprep.subr.bf16.mxu0 0
        %1762 = vmatpush1.bf16.xpose.msra.mxu0 0
        %1763 = vmatprep.mubr.bf16.mxu0 0
        %1764 = vmatmul.mubr.bf16.gmra.mrb[0].mxu0 %v1726
        %v1765 = vpop.f32.mrb[0].mxu0
        %v1766 = vadd.f32 %v1539, %v1765
        %v1767 = vpop.f32.mrb[0].mxu0
        %v1768 = vpop.f32.mrb[0].mxu0
        %v1769 = vpop.f32.mrb[0].mxu0
        %1770 = vdwg.mxu0
        %v1772 = vsel %vm1540, %v1528, 0
        %v1775 = vsel %vm1540, %v1536, 0
        %1777 = vmatprep.subr.bf16.mxu0 0
        %1778 = vmatpush1.bf16.xpose.msra.mxu0 %v1775
        %1779 = vmatprep.subr.bf16.mxu0 0
        %1780 = vmatpush1.bf16.xpose.msra.mxu0 0
        %1781 = vmatprep.subr.bf16.mxu0 0
        %1782 = vmatpush1.bf16.xpose.msra.mxu0 0
        %1783 = vmatprep.subr.bf16.mxu0 0
        %1784 = vmatpush1.bf16.xpose.msra.mxu0 0
        %1785 = vmatprep.subr.bf16.mxu0 0
        %1786 = vmatpush1.bf16.xpose.msra.mxu0 0
        %1787 = vmatprep.subr.bf16.mxu0 0
        %1788 = vmatpush1.bf16.xpose.msra.mxu0 0
        %1789 = vmatprep.subr.bf16.mxu0 0
        %1790 = vmatpush1.bf16.xpose.msra.mxu0 0
        %1791 = vmatprep.subr.bf16.mxu0 0
        %1792 = vmatpush1.bf16.xpose.msra.mxu0 0
        %1793 = vmatprep.subr.bf16.mxu0 0
        %1794 = vmatpush1.bf16.xpose.msra.mxu0 0
        %1795 = vmatprep.subr.bf16.mxu0 0
        %1796 = vmatpush1.bf16.xpose.msra.mxu0 0
        %1797 = vmatprep.subr.bf16.mxu0 0
        %1798 = vmatpush1.bf16.xpose.msra.mxu0 0
        %1799 = vmatprep.subr.bf16.mxu0 0
        %1800 = vmatpush1.bf16.xpose.msra.mxu0 0
        %1801 = vmatprep.subr.bf16.mxu0 0
        %1802 = vmatpush1.bf16.xpose.msra.mxu0 0
        %1803 = vmatprep.subr.bf16.mxu0 0
        %1804 = vmatpush1.bf16.xpose.msra.mxu0 0
        %1805 = vmatprep.subr.bf16.mxu0 0
        %1806 = vmatpush1.bf16.xpose.msra.mxu0 0
        %1807 = vmatprep.subr.bf16.mxu0 0
        %1808 = vmatpush1.bf16.xpose.msra.mxu0 0
        %1809 = vmatprep.mubr.bf16.mxu0 0
        %1810 = vmatmul.mubr.bf16.gmra.mrb[0].mxu0 %v1772
        %v1811 = vpop.f32.mrb[0].mxu0
        %v1812 = vadd.f32 %v1539, %v1811
        %v1813 = vpop.f32.mrb[0].mxu0
        %v1814 = vpop.f32.mrb[0].mxu0
        %v1815 = vpop.f32.mrb[0].mxu0
        %1816 = vdwg.mxu0
        %v1818 = vsel %vm1540, %v1529, 0
        %v1821 = vsel %vm1540, %v1537, 0
        %1823 = vmatprep.subr.bf16.mxu0 0
        %1824 = vmatpush1.bf16.xpose.msra.mxu0 %v1821
        %1825 = vmatprep.subr.bf16.mxu0 0
        %1826 = vmatpush1.bf16.xpose.msra.mxu0 0
        %1827 = vmatprep.subr.bf16.mxu0 0
        %1828 = vmatpush1.bf16.xpose.msra.mxu0 0
        %1829 = vmatprep.subr.bf16.mxu0 0
        %1830 = vmatpush1.bf16.xpose.msra.mxu0 0
        %1831 = vmatprep.subr.bf16.mxu0 0
        %1832 = vmatpush1.bf16.xpose.msra.mxu0 0
        %1833 = vmatprep.subr.bf16.mxu0 0
        %1834 = vmatpush1.bf16.xpose.msra.mxu0 0
        %1835 = vmatprep.subr.bf16.mxu0 0
        %1836 = vmatpush1.bf16.xpose.msra.mxu0 0
        %1837 = vmatprep.subr.bf16.mxu0 0
        %1838 = vmatpush1.bf16.xpose.msra.mxu0 0
        %1839 = vmatprep.subr.bf16.mxu0 0
        %1840 = vmatpush1.bf16.xpose.msra.mxu0 0
        %1841 = vmatprep.subr.bf16.mxu0 0
        %1842 = vmatpush1.bf16.xpose.msra.mxu0 0
        %1843 = vmatprep.subr.bf16.mxu0 0
        %1844 = vmatpush1.bf16.xpose.msra.mxu0 0
        %1845 = vmatprep.subr.bf16.mxu0 0
        %1846 = vmatpush1.bf16.xpose.msra.mxu0 0
        %1847 = vmatprep.subr.bf16.mxu0 0
        %1848 = vmatpush1.bf16.xpose.msra.mxu0 0
        %1849 = vmatprep.subr.bf16.mxu0 0
        %1850 = vmatpush1.bf16.xpose.msra.mxu0 0
        %1851 = vmatprep.subr.bf16.mxu0 0
        %1852 = vmatpush1.bf16.xpose.msra.mxu0 0
        %1853 = vmatprep.subr.bf16.mxu0 0
        %1854 = vmatpush1.bf16.xpose.msra.mxu0 0
        %1855 = vmatprep.mubr.bf16.mxu0 0
        %1856 = vmatmul.mubr.bf16.gmra.mrb[0].mxu0 %v1818
        %v1857 = vpop.f32.mrb[0].mxu0
        %v1858 = vadd.f32 %v1539, %v1857
        %v1859 = vpop.f32.mrb[0].mxu0
        %v1860 = vpop.f32.mrb[0].mxu0
        %v1861 = vpop.f32.mrb[0].mxu0
        %1862 = vdwg.mxu0
        %v1864 = vsel %vm1540, %v1530, 0
        %v1867 = vsel %vm1540, %v1538, 0
        %1869 = vmatprep.subr.bf16.mxu0 0
        %1870 = vmatpush1.bf16.xpose.msra.mxu0 %v1867
        %1871 = vmatprep.subr.bf16.mxu0 0
        %1872 = vmatpush1.bf16.xpose.msra.mxu0 0
        %1873 = vmatprep.subr.bf16.mxu0 0
        %1874 = vmatpush1.bf16.xpose.msra.mxu0 0
        %1875 = vmatprep.subr.bf16.mxu0 0
        %1876 = vmatpush1.bf16.xpose.msra.mxu0 0
        %1877 = vmatprep.subr.bf16.mxu0 0
        %1878 = vmatpush1.bf16.xpose.msra.mxu0 0
        %1879 = vmatprep.subr.bf16.mxu0 0
        %1880 = vmatpush1.bf16.xpose.msra.mxu0 0
        %1881 = vmatprep.subr.bf16.mxu0 0
        %1882 = vmatpush1.bf16.xpose.msra.mxu0 0
        %1883 = vmatprep.subr.bf16.mxu0 0
        %1884 = vmatpush1.bf16.xpose.msra.mxu0 0
        %1885 = vmatprep.subr.bf16.mxu0 0
        %1886 = vmatpush1.bf16.xpose.msra.mxu0 0
        %1887 = vmatprep.subr.bf16.mxu0 0
        %1888 = vmatpush1.bf16.xpose.msra.mxu0 0
        %1889 = vmatprep.subr.bf16.mxu0 0
        %1890 = vmatpush1.bf16.xpose.msra.mxu0 0
        %1891 = vmatprep.subr.bf16.mxu0 0
        %1892 = vmatpush1.bf16.xpose.msra.mxu0 0
        %1893 = vmatprep.subr.bf16.mxu0 0
        %1894 = vmatpush1.bf16.xpose.msra.mxu0 0
        %1895 = vmatprep.subr.bf16.mxu0 0
        %1896 = vmatpush1.bf16.xpose.msra.mxu0 0
        %1897 = vmatprep.subr.bf16.mxu0 0
        %1898 = vmatpush1.bf16.xpose.msra.mxu0 0
        %1899 = vmatprep.subr.bf16.mxu0 0
        %1900 = vmatpush1.bf16.xpose.msra.mxu0 0
        %1901 = vmatprep.mubr.bf16.mxu0 0
        %1902 = vmatmul.mubr.bf16.gmra.mrb[0].mxu0 %v1864
        %v1903 = vpop.f32.mrb[0].mxu0
        %v1904 = vadd.f32 %v1539, %v1903
        %v1905 = vpop.f32.mrb[0].mxu0
        %v1906 = vpop.f32.mrb[0].mxu0
        %v1907 = vpop.f32.mrb[0].mxu0
        %1908 = vdwg.mxu0
        %v1909 = vsel %vm1540, %v1582, -inf
        %1910 = vmax.xlane.f32.xlu0 %v1909
        %v1911 = vpop.xlane.xlu0 %1910
        %v1912 = vsel %vm1540, %v1628, -inf
        %1913 = vmax.xlane.f32.xlu0 %v1912
        %v1914 = vpop.xlane.xlu0 %1913
        %v1915 = vsel %vm1540, %v1674, -inf
        %1916 = vmax.xlane.f32.xlu0 %v1915
        %v1917 = vpop.xlane.xlu0 %1916
        %v1918 = vsel %vm1540, %v1720, -inf
        %1919 = vmax.xlane.f32.xlu0 %v1918
        %v1920 = vpop.xlane.xlu0 %1919
        %v1921 = vsel %vm1540, %v1766, -inf
        %1922 = vmax.xlane.f32.xlu0 %v1921
        %v1923 = vpop.xlane.xlu0 %1922
        %v1924 = vsel %vm1540, %v1812, -inf
        %1925 = vmax.xlane.f32.xlu0 %v1924
        %v1926 = vpop.xlane.xlu0 %1925
        %v1927 = vsel %vm1540, %v1858, -inf
        %1928 = vmax.xlane.f32.xlu0 %v1927
        %v1929 = vpop.xlane.xlu0 %1928
        %v1930 = vsel %vm1540, %v1904, -inf
        %1931 = vmax.xlane.f32.xlu0 %v1930
        %v1932 = vpop.xlane.xlu0 %1931
        %v1933 = vsub.f32 %v1582, %v1911
        %v1934 = vsub.f32 %v1628, %v1914
        %v1935 = vsub.f32 %v1674, %v1917
        %v1936 = vsub.f32 %v1720, %v1920
        %v1937 = vsub.f32 %v1766, %v1923
        %v1938 = vsub.f32 %v1812, %v1926
        %v1939 = vsub.f32 %v1858, %v1929
        %v1940 = vsub.f32 %v1904, %v1932
        %v1941 = vmul.f32 %v1933, 1.442695
        %v1942 = vpow.pop %v1941
        %v1943 = vmul.f32 %v1934, 1.442695
        %v1944 = vpow.pop %v1943
        %v1945 = vmul.f32 %v1935, 1.442695
        %v1946 = vpow.pop %v1945
        %v1947 = vmul.f32 %v1936, 1.442695
        %v1948 = vpow.pop %v1947
        %v1949 = vmul.f32 %v1937, 1.442695
        %v1950 = vpow.pop %v1949
        %v1951 = vmul.f32 %v1938, 1.442695
        %v1952 = vpow.pop %v1951
        %v1953 = vmul.f32 %v1939, 1.442695
        %v1954 = vpow.pop %v1953
        %v1955 = vmul.f32 %v1940, 1.442695
        %v1956 = vpow.pop %v1955
        %v1957 = vsel %vm1540, %v1942, 0.0
        %1958 = vadd.xlane.f32.xlu0 %v1957
        %v1959 = vpop.xlane.xlu0 %1958
        %v1960 = vsel %vm1540, %v1944, 0.0
        %1961 = vadd.xlane.f32.xlu0 %v1960
        %v1962 = vpop.xlane.xlu0 %1961
        %v1963 = vsel %vm1540, %v1946, 0.0
        %1964 = vadd.xlane.f32.xlu0 %v1963
        %v1965 = vpop.xlane.xlu0 %1964
        %v1966 = vsel %vm1540, %v1948, 0.0
        %1967 = vadd.xlane.f32.xlu0 %v1966
        %v1968 = vpop.xlane.xlu0 %1967
        %v1969 = vsel %vm1540, %v1950, 0.0
        %1970 = vadd.xlane.f32.xlu0 %v1969
        %v1971 = vpop.xlane.xlu0 %1970
        %v1972 = vsel %vm1540, %v1952, 0.0
        %1973 = vadd.xlane.f32.xlu0 %v1972
        %v1974 = vpop.xlane.xlu0 %1973
        %v1975 = vsel %vm1540, %v1954, 0.0
        %1976 = vadd.xlane.f32.xlu0 %v1975
        %v1977 = vpop.xlane.xlu0 %1976
        %v1978 = vsel %vm1540, %v1956, 0.0
        %1979 = vadd.xlane.f32.xlu0 %v1978
        %v1980 = vpop.xlane.xlu0 %1979
        %v1981 = vrcp.pop %v1959
        %v1982 = vrcp.pop %v1962
        %v1983 = vrcp.pop %v1965
        %v1984 = vrcp.pop %v1968
        %v1985 = vrcp.pop %v1971
        %v1986 = vrcp.pop %v1974
        %v1987 = vrcp.pop %v1977
        %v1988 = vrcp.pop %v1980
        %v1989 = vmul.f32 %v1942, %v1981
        %v1990 = vmul.f32 %v1944, %v1982
        %v1991 = vmul.f32 %v1946, %v1983
        %v1992 = vmul.f32 %v1948, %v1984
        %v1993 = vmul.f32 %v1950, %v1985
        %v1994 = vmul.f32 %v1952, %v1986
        %v1995 = vmul.f32 %v1954, %v1987
        %v1996 = vmul.f32 %v1956, %v1988
        %v1997 = vpack.c.bf16 %v1989, %v1989
        %v1998 = vpack.c.bf16 %v1990, %v1990
        %v1999 = vpack.c.bf16 %v1991, %v1991
        %v2000 = vpack.c.bf16 %v1992, %v1992
        %v2001 = vpack.c.bf16 %v1993, %v1993
        %v2002 = vpack.c.bf16 %v1994, %v1994
        %v2003 = vpack.c.bf16 %v1995, %v1995
        %v2004 = vpack.c.bf16 %v1996, %v1996
        %v2005 = vpack.c.bf16 %v1451, %v1451
        %v2006 = vpack.c.bf16 %v1452, %v1452
        %v2007 = vpack.c.bf16 %v1453, %v1453
        %v2008 = vpack.c.bf16 %v1454, %v1454
        %v2009 = vpack.c.bf16 %v1519, %v1519
        %v2010 = vpack.c.bf16 %v1520, %v1520
        %v2011 = vpack.c.bf16 %v1521, %v1521
        %v2012 = vpack.c.bf16 %v1522, %v1522
        %v2014 = vsel %vm1540, %v1997, 0
        %vm2016 = vcmask 1043456
        %v2018 = vsel %vm2016, %v2005, 0
        %2020 = vmatprep.subr.bf16.mxu0 0
        %2021 = vmatpush1.bf16.msra.mxu0 %v2018
        %2022 = vmatprep.subr.bf16.mxu0 0
        %2023 = vmatpush1.bf16.msra.mxu0 0
        %2024 = vmatprep.subr.bf16.mxu0 0
        %2025 = vmatpush1.bf16.msra.mxu0 0
        %2026 = vmatprep.subr.bf16.mxu0 0
        %2027 = vmatpush1.bf16.msra.mxu0 0
        %2028 = vmatprep.subr.bf16.mxu0 0
        %2029 = vmatpush1.bf16.msra.mxu0 0
        %2030 = vmatprep.subr.bf16.mxu0 0
        %2031 = vmatpush1.bf16.msra.mxu0 0
        %2032 = vmatprep.subr.bf16.mxu0 0
        %2033 = vmatpush1.bf16.msra.mxu0 0
        %2034 = vmatprep.subr.bf16.mxu0 0
        %2035 = vmatpush1.bf16.msra.mxu0 0
        %2036 = vmatprep.subr.bf16.mxu0 0
        %2037 = vmatpush1.bf16.msra.mxu0 0
        %2038 = vmatprep.subr.bf16.mxu0 0
        %2039 = vmatpush1.bf16.msra.mxu0 0
        %2040 = vmatprep.subr.bf16.mxu0 0
        %2041 = vmatpush1.bf16.msra.mxu0 0
        %2042 = vmatprep.subr.bf16.mxu0 0
        %2043 = vmatpush1.bf16.msra.mxu0 0
        %2044 = vmatprep.subr.bf16.mxu0 0
        %2045 = vmatpush1.bf16.msra.mxu0 0
        %2046 = vmatprep.subr.bf16.mxu0 0
        %2047 = vmatpush1.bf16.msra.mxu0 0
        %2048 = vmatprep.subr.bf16.mxu0 0
        %2049 = vmatpush1.bf16.msra.mxu0 0
        %2050 = vmatprep.subr.bf16.mxu0 0
        %2051 = vmatpush1.bf16.msra.mxu0 0
        %2052 = vmatprep.mubr.bf16.mxu0 0
        %2053 = vmatmul.mubr.bf16.gmra.mrb[0].mxu0 %v2014
        %v2054 = vpop.f32.mrb[0].mxu0
        %v2055 = vadd.f32 0.0, %v2054
        %v2056 = vpop.f32.mrb[0].mxu0
        %v2057 = vpop.f32.mrb[0].mxu0
        %v2058 = vpop.f32.mrb[0].mxu0
        %2059 = vdwg.mxu0
        %v2061 = vsel %vm1540, %v1998, 0
        %v2064 = vsel %vm2016, %v2006, 0
        %2066 = vmatprep.subr.bf16.mxu0 0
        %2067 = vmatpush1.bf16.msra.mxu0 %v2064
        %2068 = vmatprep.subr.bf16.mxu0 0
        %2069 = vmatpush1.bf16.msra.mxu0 0
        %2070 = vmatprep.subr.bf16.mxu0 0
        %2071 = vmatpush1.bf16.msra.mxu0 0
        %2072 = vmatprep.subr.bf16.mxu0 0
        %2073 = vmatpush1.bf16.msra.mxu0 0
        %2074 = vmatprep.subr.bf16.mxu0 0
        %2075 = vmatpush1.bf16.msra.mxu0 0
        %2076 = vmatprep.subr.bf16.mxu0 0
        %2077 = vmatpush1.bf16.msra.mxu0 0
        %2078 = vmatprep.subr.bf16.mxu0 0
        %2079 = vmatpush1.bf16.msra.mxu0 0
        %2080 = vmatprep.subr.bf16.mxu0 0
        %2081 = vmatpush1.bf16.msra.mxu0 0
        %2082 = vmatprep.subr.bf16.mxu0 0
        %2083 = vmatpush1.bf16.msra.mxu0 0
        %2084 = vmatprep.subr.bf16.mxu0 0
        %2085 = vmatpush1.bf16.msra.mxu0 0
        %2086 = vmatprep.subr.bf16.mxu0 0
        %2087 = vmatpush1.bf16.msra.mxu0 0
        %2088 = vmatprep.subr.bf16.mxu0 0
        %2089 = vmatpush1.bf16.msra.mxu0 0
        %2090 = vmatprep.subr.bf16.mxu0 0
        %2091 = vmatpush1.bf16.msra.mxu0 0
        %2092 = vmatprep.subr.bf16.mxu0 0
        %2093 = vmatpush1.bf16.msra.mxu0 0
        %2094 = vmatprep.subr.bf16.mxu0 0
        %2095 = vmatpush1.bf16.msra.mxu0 0
        %2096 = vmatprep.subr.bf16.mxu0 0
        %2097 = vmatpush1.bf16.msra.mxu0 0
        %2098 = vmatprep.mubr.bf16.mxu0 0
        %2099 = vmatmul.mubr.bf16.gmra.mrb[0].mxu0 %v2061
        %v2100 = vpop.f32.mrb[0].mxu0
        %v2101 = vadd.f32 0.0, %v2100
        %v2102 = vpop.f32.mrb[0].mxu0
        %v2103 = vpop.f32.mrb[0].mxu0
        %v2104 = vpop.f32.mrb[0].mxu0
        %2105 = vdwg.mxu0
        %v2107 = vsel %vm1540, %v1999, 0
        %v2110 = vsel %vm2016, %v2007, 0
        %2112 = vmatprep.subr.bf16.mxu0 0
        %2113 = vmatpush1.bf16.msra.mxu0 %v2110
        %2114 = vmatprep.subr.bf16.mxu0 0
        %2115 = vmatpush1.bf16.msra.mxu0 0
        %2116 = vmatprep.subr.bf16.mxu0 0
        %2117 = vmatpush1.bf16.msra.mxu0 0
        %2118 = vmatprep.subr.bf16.mxu0 0
        %2119 = vmatpush1.bf16.msra.mxu0 0
        %2120 = vmatprep.subr.bf16.mxu0 0
        %2121 = vmatpush1.bf16.msra.mxu0 0
        %2122 = vmatprep.subr.bf16.mxu0 0
        %2123 = vmatpush1.bf16.msra.mxu0 0
        %2124 = vmatprep.subr.bf16.mxu0 0
        %2125 = vmatpush1.bf16.msra.mxu0 0
        %2126 = vmatprep.subr.bf16.mxu0 0
        %2127 = vmatpush1.bf16.msra.mxu0 0
        %2128 = vmatprep.subr.bf16.mxu0 0
        %2129 = vmatpush1.bf16.msra.mxu0 0
        %2130 = vmatprep.subr.bf16.mxu0 0
        %2131 = vmatpush1.bf16.msra.mxu0 0
        %2132 = vmatprep.subr.bf16.mxu0 0
        %2133 = vmatpush1.bf16.msra.mxu0 0
        %2134 = vmatprep.subr.bf16.mxu0 0
        %2135 = vmatpush1.bf16.msra.mxu0 0
        %2136 = vmatprep.subr.bf16.mxu0 0
        %2137 = vmatpush1.bf16.msra.mxu0 0
        %2138 = vmatprep.subr.bf16.mxu0 0
        %2139 = vmatpush1.bf16.msra.mxu0 0
        %2140 = vmatprep.subr.bf16.mxu0 0
        %2141 = vmatpush1.bf16.msra.mxu0 0
        %2142 = vmatprep.subr.bf16.mxu0 0
        %2143 = vmatpush1.bf16.msra.mxu0 0
        %2144 = vmatprep.mubr.bf16.mxu0 0
        %2145 = vmatmul.mubr.bf16.gmra.mrb[0].mxu0 %v2107
        %v2146 = vpop.f32.mrb[0].mxu0
        %v2147 = vadd.f32 0.0, %v2146
        %v2148 = vpop.f32.mrb[0].mxu0
        %v2149 = vpop.f32.mrb[0].mxu0
        %v2150 = vpop.f32.mrb[0].mxu0
        %2151 = vdwg.mxu0
        %v2153 = vsel %vm1540, %v2000, 0
        %v2156 = vsel %vm2016, %v2008, 0
        %2158 = vmatprep.subr.bf16.mxu0 0
        %2159 = vmatpush1.bf16.msra.mxu0 %v2156
        %2160 = vmatprep.subr.bf16.mxu0 0
        %2161 = vmatpush1.bf16.msra.mxu0 0
        %2162 = vmatprep.subr.bf16.mxu0 0
        %2163 = vmatpush1.bf16.msra.mxu0 0
        %2164 = vmatprep.subr.bf16.mxu0 0
        %2165 = vmatpush1.bf16.msra.mxu0 0
        %2166 = vmatprep.subr.bf16.mxu0 0
        %2167 = vmatpush1.bf16.msra.mxu0 0
        %2168 = vmatprep.subr.bf16.mxu0 0
        %2169 = vmatpush1.bf16.msra.mxu0 0
        %2170 = vmatprep.subr.bf16.mxu0 0
        %2171 = vmatpush1.bf16.msra.mxu0 0
        %2172 = vmatprep.subr.bf16.mxu0 0
        %2173 = vmatpush1.bf16.msra.mxu0 0
        %2174 = vmatprep.subr.bf16.mxu0 0
        %2175 = vmatpush1.bf16.msra.mxu0 0
        %2176 = vmatprep.subr.bf16.mxu0 0
        %2177 = vmatpush1.bf16.msra.mxu0 0
        %2178 = vmatprep.subr.bf16.mxu0 0
        %2179 = vmatpush1.bf16.msra.mxu0 0
        %2180 = vmatprep.subr.bf16.mxu0 0
        %2181 = vmatpush1.bf16.msra.mxu0 0
        %2182 = vmatprep.subr.bf16.mxu0 0
        %2183 = vmatpush1.bf16.msra.mxu0 0
        %2184 = vmatprep.subr.bf16.mxu0 0
        %2185 = vmatpush1.bf16.msra.mxu0 0
        %2186 = vmatprep.subr.bf16.mxu0 0
        %2187 = vmatpush1.bf16.msra.mxu0 0
        %2188 = vmatprep.subr.bf16.mxu0 0
        %2189 = vmatpush1.bf16.msra.mxu0 0
        %2190 = vmatprep.mubr.bf16.mxu0 0
        %2191 = vmatmul.mubr.bf16.gmra.mrb[0].mxu0 %v2153
        %v2192 = vpop.f32.mrb[0].mxu0
        %v2193 = vadd.f32 0.0, %v2192
        %v2194 = vpop.f32.mrb[0].mxu0
        %v2195 = vpop.f32.mrb[0].mxu0
        %v2196 = vpop.f32.mrb[0].mxu0
        %2197 = vdwg.mxu0
        %v2199 = vsel %vm1540, %v2001, 0
        %v2202 = vsel %vm2016, %v2009, 0
        %2204 = vmatprep.subr.bf16.mxu0 0
        %2205 = vmatpush1.bf16.msra.mxu0 %v2202
        %2206 = vmatprep.subr.bf16.mxu0 0
        %2207 = vmatpush1.bf16.msra.mxu0 0
        %2208 = vmatprep.subr.bf16.mxu0 0
        %2209 = vmatpush1.bf16.msra.mxu0 0
        %2210 = vmatprep.subr.bf16.mxu0 0
        %2211 = vmatpush1.bf16.msra.mxu0 0
        %2212 = vmatprep.subr.bf16.mxu0 0
        %2213 = vmatpush1.bf16.msra.mxu0 0
        %2214 = vmatprep.subr.bf16.mxu0 0
        %2215 = vmatpush1.bf16.msra.mxu0 0
        %2216 = vmatprep.subr.bf16.mxu0 0
        %2217 = vmatpush1.bf16.msra.mxu0 0
        %2218 = vmatprep.subr.bf16.mxu0 0
        %2219 = vmatpush1.bf16.msra.mxu0 0
        %2220 = vmatprep.subr.bf16.mxu0 0
        %2221 = vmatpush1.bf16.msra.mxu0 0
        %2222 = vmatprep.subr.bf16.mxu0 0
        %2223 = vmatpush1.bf16.msra.mxu0 0
        %2224 = vmatprep.subr.bf16.mxu0 0
        %2225 = vmatpush1.bf16.msra.mxu0 0
        %2226 = vmatprep.subr.bf16.mxu0 0
        %2227 = vmatpush1.bf16.msra.mxu0 0
        %2228 = vmatprep.subr.bf16.mxu0 0
        %2229 = vmatpush1.bf16.msra.mxu0 0
        %2230 = vmatprep.subr.bf16.mxu0 0
        %2231 = vmatpush1.bf16.msra.mxu0 0
        %2232 = vmatprep.subr.bf16.mxu0 0
        %2233 = vmatpush1.bf16.msra.mxu0 0
        %2234 = vmatprep.subr.bf16.mxu0 0
        %2235 = vmatpush1.bf16.msra.mxu0 0
        %2236 = vmatprep.mubr.bf16.mxu0 0
        %2237 = vmatmul.mubr.bf16.gmra.mrb[0].mxu0 %v2199
        %v2238 = vpop.f32.mrb[0].mxu0
        %v2239 = vadd.f32 0.0, %v2238
        %v2240 = vpop.f32.mrb[0].mxu0
        %v2241 = vpop.f32.mrb[0].mxu0
        %v2242 = vpop.f32.mrb[0].mxu0
        %2243 = vdwg.mxu0
        %v2245 = vsel %vm1540, %v2002, 0
        %v2248 = vsel %vm2016, %v2010, 0
        %2250 = vmatprep.subr.bf16.mxu0 0
        %2251 = vmatpush1.bf16.msra.mxu0 %v2248
        %2252 = vmatprep.subr.bf16.mxu0 0
        %2253 = vmatpush1.bf16.msra.mxu0 0
        %2254 = vmatprep.subr.bf16.mxu0 0
        %2255 = vmatpush1.bf16.msra.mxu0 0
        %2256 = vmatprep.subr.bf16.mxu0 0
        %2257 = vmatpush1.bf16.msra.mxu0 0
        %2258 = vmatprep.subr.bf16.mxu0 0
        %2259 = vmatpush1.bf16.msra.mxu0 0
        %2260 = vmatprep.subr.bf16.mxu0 0
        %2261 = vmatpush1.bf16.msra.mxu0 0
        %2262 = vmatprep.subr.bf16.mxu0 0
        %2263 = vmatpush1.bf16.msra.mxu0 0
        %2264 = vmatprep.subr.bf16.mxu0 0
        %2265 = vmatpush1.bf16.msra.mxu0 0
        %2266 = vmatprep.subr.bf16.mxu0 0
        %2267 = vmatpush1.bf16.msra.mxu0 0
        %2268 = vmatprep.subr.bf16.mxu0 0
        %2269 = vmatpush1.bf16.msra.mxu0 0
        %2270 = vmatprep.subr.bf16.mxu0 0
        %2271 = vmatpush1.bf16.msra.mxu0 0
        %2272 = vmatprep.subr.bf16.mxu0 0
        %2273 = vmatpush1.bf16.msra.mxu0 0
        %2274 = vmatprep.subr.bf16.mxu0 0
        %2275 = vmatpush1.bf16.msra.mxu0 0
        %2276 = vmatprep.subr.bf16.mxu0 0
        %2277 = vmatpush1.bf16.msra.mxu0 0
        %2278 = vmatprep.subr.bf16.mxu0 0
        %2279 = vmatpush1.bf16.msra.mxu0 0
        %2280 = vmatprep.subr.bf16.mxu0 0
        %2281 = vmatpush1.bf16.msra.mxu0 0
        %2282 = vmatprep.mubr.bf16.mxu0 0
        %2283 = vmatmul.mubr.bf16.gmra.mrb[0].mxu0 %v2245
        %v2284 = vpop.f32.mrb[0].mxu0
        %v2285 = vadd.f32 0.0, %v2284
        %v2286 = vpop.f32.mrb[0].mxu0
        %v2287 = vpop.f32.mrb[0].mxu0
        %v2288 = vpop.f32.mrb[0].mxu0
        %2289 = vdwg.mxu0
        %v2291 = vsel %vm1540, %v2003, 0
        %v2294 = vsel %vm2016, %v2011, 0
        %2296 = vmatprep.subr.bf16.mxu0 0
        %2297 = vmatpush1.bf16.msra.mxu0 %v2294
        %2298 = vmatprep.subr.bf16.mxu0 0
        %2299 = vmatpush1.bf16.msra.mxu0 0
        %2300 = vmatprep.subr.bf16.mxu0 0
        %2301 = vmatpush1.bf16.msra.mxu0 0
        %2302 = vmatprep.subr.bf16.mxu0 0
        %2303 = vmatpush1.bf16.msra.mxu0 0
        %2304 = vmatprep.subr.bf16.mxu0 0
        %2305 = vmatpush1.bf16.msra.mxu0 0
        %2306 = vmatprep.subr.bf16.mxu0 0
        %2307 = vmatpush1.bf16.msra.mxu0 0
        %2308 = vmatprep.subr.bf16.mxu0 0
        %2309 = vmatpush1.bf16.msra.mxu0 0
        %2310 = vmatprep.subr.bf16.mxu0 0
        %2311 = vmatpush1.bf16.msra.mxu0 0
        %2312 = vmatprep.subr.bf16.mxu0 0
        %2313 = vmatpush1.bf16.msra.mxu0 0
        %2314 = vmatprep.subr.bf16.mxu0 0
        %2315 = vmatpush1.bf16.msra.mxu0 0
        %2316 = vmatprep.subr.bf16.mxu0 0
        %2317 = vmatpush1.bf16.msra.mxu0 0
        %2318 = vmatprep.subr.bf16.mxu0 0
        %2319 = vmatpush1.bf16.msra.mxu0 0
        %2320 = vmatprep.subr.bf16.mxu0 0
        %2321 = vmatpush1.bf16.msra.mxu0 0
        %2322 = vmatprep.subr.bf16.mxu0 0
        %2323 = vmatpush1.bf16.msra.mxu0 0
        %2324 = vmatprep.subr.bf16.mxu0 0
        %2325 = vmatpush1.bf16.msra.mxu0 0
        %2326 = vmatprep.subr.bf16.mxu0 0
        %2327 = vmatpush1.bf16.msra.mxu0 0
        %2328 = vmatprep.mubr.bf16.mxu0 0
        %2329 = vmatmul.mubr.bf16.gmra.mrb[0].mxu0 %v2291
        %v2330 = vpop.f32.mrb[0].mxu0
        %v2331 = vadd.f32 0.0, %v2330
        %v2332 = vpop.f32.mrb[0].mxu0
        %v2333 = vpop.f32.mrb[0].mxu0
        %v2334 = vpop.f32.mrb[0].mxu0
        %2335 = vdwg.mxu0
        %v2337 = vsel %vm1540, %v2004, 0
        %v2340 = vsel %vm2016, %v2012, 0
        %2342 = vmatprep.subr.bf16.mxu0 0
        %2343 = vmatpush1.bf16.msra.mxu0 %v2340
        %2344 = vmatprep.subr.bf16.mxu0 0
        %2345 = vmatpush1.bf16.msra.mxu0 0
        %2346 = vmatprep.subr.bf16.mxu0 0
        %2347 = vmatpush1.bf16.msra.mxu0 0
        %2348 = vmatprep.subr.bf16.mxu0 0
        %2349 = vmatpush1.bf16.msra.mxu0 0
        %2350 = vmatprep.subr.bf16.mxu0 0
        %2351 = vmatpush1.bf16.msra.mxu0 0
        %2352 = vmatprep.subr.bf16.mxu0 0
        %2353 = vmatpush1.bf16.msra.mxu0 0
        %2354 = vmatprep.subr.bf16.mxu0 0
        %2355 = vmatpush1.bf16.msra.mxu0 0
        %2356 = vmatprep.subr.bf16.mxu0 0
        %2357 = vmatpush1.bf16.msra.mxu0 0
        %2358 = vmatprep.subr.bf16.mxu0 0
        %2359 = vmatpush1.bf16.msra.mxu0 0
        %2360 = vmatprep.subr.bf16.mxu0 0
        %2361 = vmatpush1.bf16.msra.mxu0 0
        %2362 = vmatprep.subr.bf16.mxu0 0
        %2363 = vmatpush1.bf16.msra.mxu0 0
        %2364 = vmatprep.subr.bf16.mxu0 0
        %2365 = vmatpush1.bf16.msra.mxu0 0
        %2366 = vmatprep.subr.bf16.mxu0 0
        %2367 = vmatpush1.bf16.msra.mxu0 0
        %2368 = vmatprep.subr.bf16.mxu0 0
        %2369 = vmatpush1.bf16.msra.mxu0 0
        %2370 = vmatprep.subr.bf16.mxu0 0
        %2371 = vmatpush1.bf16.msra.mxu0 0
        %2372 = vmatprep.subr.bf16.mxu0 0
        %2373 = vmatpush1.bf16.msra.mxu0 0
        %2374 = vmatprep.mubr.bf16.mxu0 0
        %2375 = vmatmul.mubr.bf16.gmra.mrb[0].mxu0 %v2337
        %v2376 = vpop.f32.mrb[0].mxu0
        %v2377 = vadd.f32 0.0, %v2376
        %v2378 = vpop.f32.mrb[0].mxu0
        %v2379 = vpop.f32.mrb[0].mxu0
        %v2380 = vpop.f32.mrb[0].mxu0
        %2381 = vdwg.mxu0
        %v2382 = vcombine.low %v2055, %v2147
        %v2383 = vcombine.high %v2055, %v2147
        %v2385 = vunpack.c.l.s4 1983009808
        %v2386 = vunpack.c.0.s8 %v2385
        %v2387 = vlaneseq
        %v2388 = vshrl.u32 %v2387, 7
        %v2389 = vsub.s32 %v2386, %v2388
        %v2390 = vrot.slane %v2382, %v2389
        %v2392 = vunpack.c.l.s4 1983009808
        %v2393 = vunpack.c.0.s8 %v2392
        %v2394 = vlaneseq
        %v2395 = vshrl.u32 %v2394, 7
        %v2396 = vsub.s32 %v2393, %v2395
        %v2397 = vrot.slane %v2383, %v2396
        %v2398 = vcombine.low %v2101, %v2193
        %v2399 = vcombine.high %v2101, %v2193
        %v2401 = vunpack.c.l.s4 1983009808
        %v2402 = vunpack.c.0.s8 %v2401
        %v2403 = vlaneseq
        %v2404 = vshrl.u32 %v2403, 7
        %v2405 = vsub.s32 %v2402, %v2404
        %v2406 = vrot.slane %v2398, %v2405
        %v2408 = vunpack.c.l.s4 1983009808
        %v2409 = vunpack.c.0.s8 %v2408
        %v2410 = vlaneseq
        %v2411 = vshrl.u32 %v2410, 7
        %v2412 = vsub.s32 %v2409, %v2411
        %v2413 = vrot.slane %v2399, %v2412
        %v2414 = vcombine.low %v2390, %v2406
        %v2415 = vcombine.high %v2390, %v2406
        %v2417 = vunpack.c.l.s4 1934713408
        %v2418 = vunpack.c.0.s8 %v2417
        %v2419 = vlaneseq
        %v2420 = vshrl.u32 %v2419, 7
        %v2421 = vsub.s32 %v2418, %v2420
        %v2422 = vrot.slane %v2414, %v2421
        %v2424 = vunpack.c.l.s4 1934713408
        %v2425 = vunpack.c.0.s8 %v2424
        %v2426 = vlaneseq
        %v2427 = vshrl.u32 %v2426, 7
        %v2428 = vsub.s32 %v2425, %v2427
        %v2429 = vrot.slane %v2415, %v2428
        %v2430 = vcombine.low %v2397, %v2413
        %v2431 = vcombine.high %v2397, %v2413
        %v2433 = vunpack.c.l.s4 1934713408
        %v2434 = vunpack.c.0.s8 %v2433
        %v2435 = vlaneseq
        %v2436 = vshrl.u32 %v2435, 7
        %v2437 = vsub.s32 %v2434, %v2436
        %v2438 = vrot.slane %v2430, %v2437
        %v2440 = vunpack.c.l.s4 1934713408
        %v2441 = vunpack.c.0.s8 %v2440
        %v2442 = vlaneseq
        %v2443 = vshrl.u32 %v2442, 7
        %v2444 = vsub.s32 %v2441, %v2443
        %v2445 = vrot.slane %v2431, %v2444
        %v2446 = vcombine.high %v2422, 0.0
        %v2447 = vcombine.high %v2429, 0.0
        %v2448 = vcombine.high %v2438, 0.0
        %v2449 = vcombine.high %v2445, 0.0
        %v2450 = vcombine.low %v2239, %v2331
        %v2451 = vcombine.high %v2239, %v2331
        %v2453 = vunpack.c.l.s4 1983009808
        %v2454 = vunpack.c.0.s8 %v2453
        %v2455 = vlaneseq
        %v2456 = vshrl.u32 %v2455, 7
        %v2457 = vsub.s32 %v2454, %v2456
        %v2458 = vrot.slane %v2450, %v2457
        %v2460 = vunpack.c.l.s4 1983009808
        %v2461 = vunpack.c.0.s8 %v2460
        %v2462 = vlaneseq
        %v2463 = vshrl.u32 %v2462, 7
        %v2464 = vsub.s32 %v2461, %v2463
        %v2465 = vrot.slane %v2451, %v2464
        %v2466 = vcombine.low %v2285, %v2377
        %v2467 = vcombine.high %v2285, %v2377
        %v2469 = vunpack.c.l.s4 1983009808
        %v2470 = vunpack.c.0.s8 %v2469
        %v2471 = vlaneseq
        %v2472 = vshrl.u32 %v2471, 7
        %v2473 = vsub.s32 %v2470, %v2472
        %v2474 = vrot.slane %v2466, %v2473
        %v2476 = vunpack.c.l.s4 1983009808
        %v2477 = vunpack.c.0.s8 %v2476
        %v2478 = vlaneseq
        %v2479 = vshrl.u32 %v2478, 7
        %v2480 = vsub.s32 %v2477, %v2479
        %v2481 = vrot.slane %v2467, %v2480
        %v2482 = vcombine.low %v2458, %v2474
        %v2483 = vcombine.high %v2458, %v2474
        %v2485 = vunpack.c.l.s4 1934713408
        %v2486 = vunpack.c.0.s8 %v2485
        %v2487 = vlaneseq
        %v2488 = vshrl.u32 %v2487, 7
        %v2489 = vsub.s32 %v2486, %v2488
        %v2490 = vrot.slane %v2482, %v2489
        %v2492 = vunpack.c.l.s4 1934713408
        %v2493 = vunpack.c.0.s8 %v2492
        %v2494 = vlaneseq
        %v2495 = vshrl.u32 %v2494, 7
        %v2496 = vsub.s32 %v2493, %v2495
        %v2497 = vrot.slane %v2483, %v2496
        %v2498 = vcombine.low %v2465, %v2481
        %v2499 = vcombine.high %v2465, %v2481
        %v2501 = vunpack.c.l.s4 1934713408
        %v2502 = vunpack.c.0.s8 %v2501
        %v2503 = vlaneseq
        %v2504 = vshrl.u32 %v2503, 7
        %v2505 = vsub.s32 %v2502, %v2504
        %v2506 = vrot.slane %v2498, %v2505
        %v2508 = vunpack.c.l.s4 1934713408
        %v2509 = vunpack.c.0.s8 %v2508
        %v2510 = vlaneseq
        %v2511 = vshrl.u32 %v2510, 7
        %v2512 = vsub.s32 %v2509, %v2511
        %v2513 = vrot.slane %v2499, %v2512
        %v2514 = vcombine.high %v2490, 0.0
        %v2515 = vcombine.high %v2497, 0.0
        %v2516 = vcombine.high %v2506, 0.0
        %v2517 = vcombine.high %v2513, 0.0
        %v2518 = vcombine.low %v2422, %v2429
        %v2520 = vunpack.c.l.s4 1983009808
        %v2521 = vunpack.c.0.s8 %v2520
        %v2522 = vlaneseq
        %v2523 = vshrl.u32 %v2522, 7
        %v2524 = vsub.s32 %v2521, %v2523
        %v2525 = vrot.slane %v2518, %v2524
        %v2526 = vcombine.low %v2446, %v2447
        %v2528 = vunpack.c.l.s4 1983009808
        %v2529 = vunpack.c.0.s8 %v2528
        %v2530 = vlaneseq
        %v2531 = vshrl.u32 %v2530, 7
        %v2532 = vsub.s32 %v2529, %v2531
        %v2533 = vrot.slane %v2526, %v2532
        %v2534 = vcombine.low %v2438, %v2445
        %v2536 = vunpack.c.l.s4 1983009808
        %v2537 = vunpack.c.0.s8 %v2536
        %v2538 = vlaneseq
        %v2539 = vshrl.u32 %v2538, 7
        %v2540 = vsub.s32 %v2537, %v2539
        %v2541 = vrot.slane %v2534, %v2540
        %v2542 = vcombine.low %v2448, %v2449
        %v2544 = vunpack.c.l.s4 1983009808
        %v2545 = vunpack.c.0.s8 %v2544
        %v2546 = vlaneseq
        %v2547 = vshrl.u32 %v2546, 7
        %v2548 = vsub.s32 %v2545, %v2547
        %v2549 = vrot.slane %v2542, %v2548
        %v2550 = vcombine.low %v2525, %v2533
        %v2551 = vcombine.high %v2525, %v2533
        %v2553 = vunpack.c.l.s4 1934713408
        %v2554 = vunpack.c.0.s8 %v2553
        %v2555 = vlaneseq
        %v2556 = vshrl.u32 %v2555, 7
        %v2557 = vsub.s32 %v2554, %v2556
        %v2558 = vrot.slane %v2550, %v2557
        %v2560 = vunpack.c.l.s4 1934713408
        %v2561 = vunpack.c.0.s8 %v2560
        %v2562 = vlaneseq
        %v2563 = vshrl.u32 %v2562, 7
        %v2564 = vsub.s32 %v2561, %v2563
        %v2565 = vrot.slane %v2551, %v2564
        %v2566 = vcombine.low %v2541, %v2549
        %v2567 = vcombine.high %v2541, %v2549
        %v2569 = vunpack.c.l.s4 1934713408
        %v2570 = vunpack.c.0.s8 %v2569
        %v2571 = vlaneseq
        %v2572 = vshrl.u32 %v2571, 7
        %v2573 = vsub.s32 %v2570, %v2572
        %v2574 = vrot.slane %v2566, %v2573
        %v2576 = vunpack.c.l.s4 1934713408
        %v2577 = vunpack.c.0.s8 %v2576
        %v2578 = vlaneseq
        %v2579 = vshrl.u32 %v2578, 7
        %v2580 = vsub.s32 %v2577, %v2579
        %v2581 = vrot.slane %v2567, %v2580
        %v2582 = vcombine.low %v2558, %v2574
        %v2583 = vcombine.high %v2558, %v2574
        %v2584 = vcombine.low %v2565, %v2581
        %v2585 = vcombine.high %v2565, %v2581
        %v2586 = vcombine.low %v2490, %v2497
        %v2588 = vunpack.c.l.s4 1983009808
        %v2589 = vunpack.c.0.s8 %v2588
        %v2590 = vlaneseq
        %v2591 = vshrl.u32 %v2590, 7
        %v2592 = vsub.s32 %v2589, %v2591
        %v2593 = vrot.slane %v2586, %v2592
        %v2594 = vcombine.low %v2514, %v2515
        %v2596 = vunpack.c.l.s4 1983009808
        %v2597 = vunpack.c.0.s8 %v2596
        %v2598 = vlaneseq
        %v2599 = vshrl.u32 %v2598, 7
        %v2600 = vsub.s32 %v2597, %v2599
        %v2601 = vrot.slane %v2594, %v2600
        %v2602 = vcombine.low %v2506, %v2513
        %v2604 = vunpack.c.l.s4 1983009808
        %v2605 = vunpack.c.0.s8 %v2604
        %v2606 = vlaneseq
        %v2607 = vshrl.u32 %v2606, 7
        %v2608 = vsub.s32 %v2605, %v2607
        %v2609 = vrot.slane %v2602, %v2608
        %v2610 = vcombine.low %v2516, %v2517
        %v2612 = vunpack.c.l.s4 1983009808
        %v2613 = vunpack.c.0.s8 %v2612
        %v2614 = vlaneseq
        %v2615 = vshrl.u32 %v2614, 7
        %v2616 = vsub.s32 %v2613, %v2615
        %v2617 = vrot.slane %v2610, %v2616
        %v2618 = vcombine.low %v2593, %v2601
        %v2619 = vcombine.high %v2593, %v2601
        %v2621 = vunpack.c.l.s4 1934713408
        %v2622 = vunpack.c.0.s8 %v2621
        %v2623 = vlaneseq
        %v2624 = vshrl.u32 %v2623, 7
        %v2625 = vsub.s32 %v2622, %v2624
        %v2626 = vrot.slane %v2618, %v2625
        %v2628 = vunpack.c.l.s4 1934713408
        %v2629 = vunpack.c.0.s8 %v2628
        %v2630 = vlaneseq
        %v2631 = vshrl.u32 %v2630, 7
        %v2632 = vsub.s32 %v2629, %v2631
        %v2633 = vrot.slane %v2619, %v2632
        %v2634 = vcombine.low %v2609, %v2617
        %v2635 = vcombine.high %v2609, %v2617
        %v2637 = vunpack.c.l.s4 1934713408
        %v2638 = vunpack.c.0.s8 %v2637
        %v2639 = vlaneseq
        %v2640 = vshrl.u32 %v2639, 7
        %v2641 = vsub.s32 %v2638, %v2640
        %v2642 = vrot.slane %v2634, %v2641
        %v2644 = vunpack.c.l.s4 1934713408
        %v2645 = vunpack.c.0.s8 %v2644
        %v2646 = vlaneseq
        %v2647 = vshrl.u32 %v2646, 7
        %v2648 = vsub.s32 %v2645, %v2647
        %v2649 = vrot.slane %v2635, %v2648
        %v2650 = vcombine.low %v2626, %v2642
        %v2651 = vcombine.high %v2626, %v2642
        %v2652 = vcombine.low %v2633, %v2649
        %v2653 = vcombine.high %v2633, %v2649
        %2656 = vrot.lane.b32.xlu0 %v2583, 8
        %v2657 = vpop.permute.xlu0 %2656
        %2658 = vrot.lane.b32.xlu0 %v2651, 8
        %v2659 = vpop.permute.xlu0 %2658
        %2664 = vrot.lane.b32.xlu0 %v2584, 16
        %v2665 = vpop.permute.xlu0 %2664
        %2666 = vrot.lane.b32.xlu0 %v2652, 16
        %v2667 = vpop.permute.xlu0 %2666
        %2672 = vrot.lane.b32.xlu0 %v2585, 24
        %v2673 = vpop.permute.xlu0 %2672
        %2674 = vrot.lane.b32.xlu0 %v2653, 24
        %v2675 = vpop.permute.xlu0 %2674
        %v2678 = vsel %vm1540, %v2582, %v2657
        %v2679 = vsel %vm1540, %v2650, %v2659
        %vm2680 = vcmask 130048
        %v2681 = vsel %vm2680, %v2678, %v2665
        %v2682 = vsel %vm2680, %v2679, %v2667
        %vm2683 = vcmask 195584
        %v2684 = vsel %vm2683, %v2681, %v2673
        %v2685 = vsel %vm2683, %v2682, %v2675
        %v2686 = vpack.c.bf16 %v2685, %v2684
        %v2687 = vld [vmem:[%s506] sm:$0xf]
        %v2688 = vld [vmem:[%s506 + $0x4] sm:$0xf]
        %v2689 = vld [vmem:[%s506 + $0x8] sm:$0xf]
        %v2690 = vld [vmem:[%s506 + $0xc] sm:$0xf]
        %v2695 = vunpack.c.l.b16 %v2687
        %v2696 = vunpack.c.l.b16 %v2688
        %v2697 = vunpack.c.l.b16 %v2689
        %v2698 = vunpack.c.l.b16 %v2690
        %v2699 = vpack.c.b16 %v2696, %v2695
        %v2700 = vpack.c.b16 %v2698, %v2697
        %v2704 = vsel %vm531, %v2686, 0
        %2706 = vmatprep.subr.bf16.mxu0 0
        %2707 = vmatpush1.bf16.msra.mxu0 %v2699
        %2708 = vmatprep.subr.bf16.mxu0 0
        %2709 = vmatpush1.bf16.msra.mxu0 %v2700
        %2710 = vmatprep.subr.bf16.mxu0 0
        %2711 = vmatpush1.bf16.msra.mxu0 0
        %2712 = vmatprep.subr.bf16.mxu0 0
        %2713 = vmatpush1.bf16.msra.mxu0 0
        %2714 = vmatprep.subr.bf16.mxu0 0
        %2715 = vmatpush1.bf16.msra.mxu0 0
        %2716 = vmatprep.subr.bf16.mxu0 0
        %2717 = vmatpush1.bf16.msra.mxu0 0
        %2718 = vmatprep.subr.bf16.mxu0 0
        %2719 = vmatpush1.bf16.msra.mxu0 0
        %2720 = vmatprep.subr.bf16.mxu0 0
        %2721 = vmatpush1.bf16.msra.mxu0 0
        %2722 = vmatprep.subr.bf16.mxu0 0
        %2723 = vmatpush1.bf16.msra.mxu0 0
        %2724 = vmatprep.subr.bf16.mxu0 0
        %2725 = vmatpush1.bf16.msra.mxu0 0
        %2726 = vmatprep.subr.bf16.mxu0 0
        %2727 = vmatpush1.bf16.msra.mxu0 0
        %2728 = vmatprep.subr.bf16.mxu0 0
        %2729 = vmatpush1.bf16.msra.mxu0 0
        %2730 = vmatprep.subr.bf16.mxu0 0
        %2731 = vmatpush1.bf16.msra.mxu0 0
        %2732 = vmatprep.subr.bf16.mxu0 0
        %2733 = vmatpush1.bf16.msra.mxu0 0
        %2734 = vmatprep.subr.bf16.mxu0 0
        %2735 = vmatpush1.bf16.msra.mxu0 0
        %2736 = vmatprep.subr.bf16.mxu0 0
        %2737 = vmatpush1.bf16.msra.mxu0 0
        %2738 = vmatprep.mubr.bf16.mxu0 0
        %2739 = vmatmul.mubr.bf16.gmra.mrb[0].mxu0 %v2704
        %v2740 = vpop.f32.mrb[0].mxu0
        %v2741 = vadd.f32 0.0, %v2740
        %v2742 = vpop.f32.mrb[0].mxu0
        %v2743 = vpop.f32.mrb[0].mxu0
        %v2744 = vadd.f32 0.0, %v2743
        %v2745 = vpop.f32.mrb[0].mxu0
        %2746 = vdwg.mxu0
        %v2747 = vadd.f32 %v528, %v2741
        %v2748 = vadd.f32 %v529, %v2744
        %v2749 = vlaneseq
        %v2750 = vshrl.u32 %v2749, 7
        %v2751 = vsub.s32 4, %v2750
        %v2752 = vrot.slane %v530, %v2751
        %v2753 = vadd.f32 %v2747, %v2752
        %v2754 = vadd.f32 %v2748, %v2752
        %v2755 = vsel %vm531, %v2753, 0.0
        %2756 = vadd.xlane.f32.xlu0 %v2755
        %v2757 = vpop.xlane.xlu0 %2756
        %v2758 = vsel %vm531, %v2754, 0.0
        %2759 = vadd.xlane.f32.xlu0 %v2758
        %v2760 = vpop.xlane.xlu0 %2759
        %v2761 = vmul.f32 %v2757, %v538
        %v2762 = vmul.f32 %v2760, %v538
        %v2763 = vsub.f32 %v2753, %v2761
        %v2764 = vsub.f32 %v2754, %v2762
        %v2765 = vmul.f32 %v2763, %v2763
        %v2766 = vmul.f32 %v2764, %v2764
        %v2767 = vsel %vm531, %v2765, 0.0
        %2768 = vadd.xlane.f32.xlu0 %v2767
        %v2769 = vpop.xlane.xlu0 %2768
        %v2770 = vsel %vm531, %v2766, 0.0
        %2771 = vadd.xlane.f32.xlu0 %v2770
        %v2772 = vpop.xlane.xlu0 %2771
        %v2773 = vmul.f32 %v2769, %v538
        %v2774 = vmul.f32 %v2772, %v538
        %v2775 = vadd.f32 %v2773, 1e-05
        %v2776 = vadd.f32 %v2774, 1e-05
        %v2777 = vrsqrt.pop %v2775
        %v2778 = vrsqrt.pop %v2776
        %v2779 = vmul.f32 %v2763, %v2777
        %v2780 = vmul.f32 %v2764, %v2778
        %v2781 = vlaneseq
        %v2782 = vshrl.u32 %v2781, 7
        %v2783 = vsub.s32 2, %v2782
        %v2784 = vrot.slane %v530, %v2783
        %v2785 = vmul.f32 %v2779, %v2784
        %v2786 = vmul.f32 %v2780, %v2784
        %v2787 = vlaneseq
        %v2788 = vshrl.u32 %v2787, 7
        %v2789 = vsub.s32 3, %v2788
        %v2790 = vrot.slane %v530, %v2789
        %v2791 = vadd.f32 %v2785, %v2790
        %v2792 = vadd.f32 %v2786, %v2790
        %v2793 = vpack.c.bf16 %v2792, %v2791
        %v2794 = vld [vmem:[%s511] sm:$0xf]
        %v2795 = vld [vmem:[%s511 + $0x4] sm:$0xf]
        %v2796 = vld [vmem:[%s511 + $0x8] sm:$0xf]
        %v2797 = vld [vmem:[%s511 + $0xc] sm:$0xf]
        %v2798 = vld [vmem:[%s496] sm:$0x1]
        %v2800 = vlaneseq
        %v2801 = vshrl.u32 %v2800, 7
        %v2802 = vsub.s32 0, %v2801
        %v2803 = vrot.slane %v2798, %v2802
        %v2809 = vunpack.c.l.b16 %v2794
        %v2810 = vunpack.c.l.b16 %v2795
        %v2811 = vunpack.c.l.b16 %v2796
        %v2812 = vunpack.c.l.b16 %v2797
        %v2813 = vpack.c.b16 %v2810, %v2809
        %v2814 = vpack.c.b16 %v2812, %v2811
        %v2818 = vsel %vm531, %v2793, 0
        %2820 = vmatprep.subr.bf16.mxu0 0
        %2821 = vmatpush1.bf16.msra.mxu0 %v2813
        %2822 = vmatprep.subr.bf16.mxu0 0
        %2823 = vmatpush1.bf16.msra.mxu0 %v2814
        %2824 = vmatprep.subr.bf16.mxu0 0
        %2825 = vmatpush1.bf16.msra.mxu0 0
        %2826 = vmatprep.subr.bf16.mxu0 0
        %2827 = vmatpush1.bf16.msra.mxu0 0
        %2828 = vmatprep.subr.bf16.mxu0 0
        %2829 = vmatpush1.bf16.msra.mxu0 0
        %2830 = vmatprep.subr.bf16.mxu0 0
        %2831 = vmatpush1.bf16.msra.mxu0 0
        %2832 = vmatprep.subr.bf16.mxu0 0
        %2833 = vmatpush1.bf16.msra.mxu0 0
        %2834 = vmatprep.subr.bf16.mxu0 0
        %2835 = vmatpush1.bf16.msra.mxu0 0
        %2836 = vmatprep.subr.bf16.mxu0 0
        %2837 = vmatpush1.bf16.msra.mxu0 0
        %2838 = vmatprep.subr.bf16.mxu0 0
        %2839 = vmatpush1.bf16.msra.mxu0 0
        %2840 = vmatprep.subr.bf16.mxu0 0
        %2841 = vmatpush1.bf16.msra.mxu0 0
        %2842 = vmatprep.subr.bf16.mxu0 0
        %2843 = vmatpush1.bf16.msra.mxu0 0
        %2844 = vmatprep.subr.bf16.mxu0 0
        %2845 = vmatpush1.bf16.msra.mxu0 0
        %2846 = vmatprep.subr.bf16.mxu0 0
        %2847 = vmatpush1.bf16.msra.mxu0 0
        %2848 = vmatprep.subr.bf16.mxu0 0
        %2849 = vmatpush1.bf16.msra.mxu0 0
        %2850 = vmatprep.subr.bf16.mxu0 0
        %2851 = vmatpush1.bf16.msra.mxu0 0
        %2852 = vmatprep.mubr.bf16.mxu0 0
        %2853 = vmatmul.mubr.bf16.gmra.mrb[0].mxu0 %v2818
        %v2854 = vpop.f32.mrb[0].mxu0
        %v2855 = vadd.f32 %v2803, %v2854
        %v2856 = vpop.f32.mrb[0].mxu0
        %v2857 = vpop.f32.mrb[0].mxu0
        %v2858 = vadd.f32 %v2803, %v2857
        %v2859 = vpop.f32.mrb[0].mxu0
        %2860 = vdwg.mxu0
        %v2861 = vmul.f32 %v2855, 0.5
        %v2862 = vmul.f32 %v2858, 0.5
        %v2863 = vrcp.pop 1.4142135
        %v2864 = vmul.f32 %v2855, %v2863
        %v2865 = vmul.f32 %v2858, %v2863
        %v2866 = verf.f32.pop %v2864
        %v2867 = verf.f32.pop %v2865
        %v2868 = vadd.f32 %v2866, 1.0
        %v2869 = vadd.f32 %v2867, 1.0
        %v2870 = vmul.f32 %v2861, %v2868
        %v2871 = vmul.f32 %v2862, %v2869
        %v2872 = vpack.c.bf16 %v2871, %v2870
        %v2873 = vld [vmem:[%s516] sm:$0xf]
        %v2874 = vld [vmem:[%s516 + $0x4] sm:$0xf]
        %v2875 = vld [vmem:[%s516 + $0x8] sm:$0xf]
        %v2876 = vld [vmem:[%s516 + $0xc] sm:$0xf]
        %v2877 = vld [vmem:[%s516 + $0x10] sm:$0xf]
        %v2878 = vld [vmem:[%s516 + $0x14] sm:$0xf]
        %v2879 = vld [vmem:[%s516 + $0x18] sm:$0xf]
        %v2880 = vld [vmem:[%s516 + $0x1c] sm:$0xf]
        %v2881 = vld [vmem:[%s516 + $0x20] sm:$0xf]
        %v2882 = vld [vmem:[%s516 + $0x24] sm:$0xf]
        %v2883 = vld [vmem:[%s516 + $0x28] sm:$0xf]
        %v2884 = vld [vmem:[%s516 + $0x2c] sm:$0xf]
        %v2885 = vld [vmem:[%s516 + $0x30] sm:$0xf]
        %v2886 = vld [vmem:[%s516 + $0x34] sm:$0xf]
        %v2887 = vld [vmem:[%s516 + $0x38] sm:$0xf]
        %v2888 = vld [vmem:[%s516 + $0x3c] sm:$0xf]
        %v2905 = vunpack.c.l.b16 %v2873
        %v2906 = vunpack.c.l.b16 %v2874
        %v2907 = vunpack.c.l.b16 %v2875
        %v2908 = vunpack.c.l.b16 %v2876
        %v2909 = vunpack.c.l.b16 %v2877
        %v2910 = vunpack.c.l.b16 %v2878
        %v2911 = vunpack.c.l.b16 %v2879
        %v2912 = vunpack.c.l.b16 %v2880
        %v2913 = vunpack.c.l.b16 %v2881
        %v2914 = vunpack.c.l.b16 %v2882
        %v2915 = vunpack.c.l.b16 %v2883
        %v2916 = vunpack.c.l.b16 %v2884
        %v2917 = vunpack.c.l.b16 %v2885
        %v2918 = vunpack.c.l.b16 %v2886
        %v2919 = vunpack.c.l.b16 %v2887
        %v2920 = vunpack.c.l.b16 %v2888
        %v2921 = vpack.c.b16 %v2906, %v2905
        %v2922 = vpack.c.b16 %v2908, %v2907
        %v2923 = vpack.c.b16 %v2910, %v2909
        %v2924 = vpack.c.b16 %v2912, %v2911
        %v2925 = vpack.c.b16 %v2914, %v2913
        %v2926 = vpack.c.b16 %v2916, %v2915
        %v2927 = vpack.c.b16 %v2918, %v2917
        %v2928 = vpack.c.b16 %v2920, %v2919
        %2937 = vmatprep.subr.bf16.mxu0 0
        %2938 = vmatpush1.bf16.msra.mxu0 %v2921
        %2939 = vmatprep.subr.bf16.mxu0 0
        %2940 = vmatpush1.bf16.msra.mxu0 %v2922
        %2941 = vmatprep.subr.bf16.mxu0 0
        %2942 = vmatpush1.bf16.msra.mxu0 %v2923
        %2943 = vmatprep.subr.bf16.mxu0 0
        %2944 = vmatpush1.bf16.msra.mxu0 %v2924
        %2945 = vmatprep.subr.bf16.mxu0 0
        %2946 = vmatpush1.bf16.msra.mxu0 %v2925
        %2947 = vmatprep.subr.bf16.mxu0 0
        %2948 = vmatpush1.bf16.msra.mxu0 %v2926
        %2949 = vmatprep.subr.bf16.mxu0 0
        %2950 = vmatpush1.bf16.msra.mxu0 %v2927
        %2951 = vmatprep.subr.bf16.mxu0 0
        %2952 = vmatpush1.bf16.msra.mxu0 %v2928
        %2953 = vmatprep.subr.bf16.mxu0 0
        %2954 = vmatpush1.bf16.msra.mxu0 0
        %2955 = vmatprep.subr.bf16.mxu0 0
        %2956 = vmatpush1.bf16.msra.mxu0 0
        %2957 = vmatprep.subr.bf16.mxu0 0
        %2958 = vmatpush1.bf16.msra.mxu0 0
        %2959 = vmatprep.subr.bf16.mxu0 0
        %2960 = vmatpush1.bf16.msra.mxu0 0
        %2961 = vmatprep.subr.bf16.mxu0 0
        %2962 = vmatpush1.bf16.msra.mxu0 0
        %2963 = vmatprep.subr.bf16.mxu0 0
        %2964 = vmatpush1.bf16.msra.mxu0 0
        %2965 = vmatprep.subr.bf16.mxu0 0
        %2966 = vmatpush1.bf16.msra.mxu0 0
        %2967 = vmatprep.subr.bf16.mxu0 0
        %2968 = vmatpush1.bf16.msra.mxu0 0
        %2969 = vmatprep.mubr.bf16.mxu0 0
        %2970 = vmatmul.mubr.bf16.gmra.mrb[0].mxu0 %v2872
        %v2971 = vpop.f32.mrb[0].mxu0
        %v2972 = vadd.f32 0.0, %v2971
        %v2973 = vpop.f32.mrb[0].mxu0
        %v2974 = vpop.f32.mrb[0].mxu0
        %v2975 = vadd.f32 0.0, %v2974
        %v2976 = vpop.f32.mrb[0].mxu0
        %2977 = vdwg.mxu0
        %v2978 = vadd.f32 %v2753, %v2972
        %v2979 = vadd.f32 %v2754, %v2975
        %v2980 = vlaneseq
        %v2981 = vshrl.u32 %v2980, 7
        %v2982 = vsub.s32 5, %v2981
        %v2983 = vrot.slane %v530, %v2982
        %v2984 = vadd.f32 %v2978, %v2983
        %v2985 = vadd.f32 %v2979, %v2983
        %2986 = vst.msk [vmem:[#allocation2] sm:$0xff] %vm531, %v2984
        %2987 = vst.msk [vmem:[#allocation2 + $0x8] sm:$0xff] %vm531, %v2985
        %p2988 = scmp.eq.s32.totalorder %s28, 1
        // Predicated region
        $region69: #{tpu_custom_call.1} parent=63 // pred_check
          %p2989 = pneg %p2988
        $region70: #{tpu_custom_call.1} parent=63 // pred_check_branch
          %2991 = sbr.rel (%p2989) target = $region72
        $region71: #{tpu_custom_call.1} parent=63 // pred_region
          %v2992 = vld [vmem:[%s2] sm:$0x1]
          %v2993 = vld [vmem:[%s3] sm:$0x1]
          %vm2994 = vcmask 261127
          %v2995 = vsel %vm2994, %v2984, 0.0
          %2996 = vadd.xlane.f32.xlu0 %v2995
          %v2997 = vpop.xlane.xlu0 %2996
          %v2998 = vsel %vm2994, %v2985, 0.0
          %2999 = vadd.xlane.f32.xlu0 %v2998
          %v3000 = vpop.xlane.xlu0 %2999
          %v3001 = vmul.f32 %v2997, %v538
          %v3002 = vmul.f32 %v3000, %v538
          %v3003 = vsub.f32 %v2984, %v3001
          %v3004 = vsub.f32 %v2985, %v3002
          %v3005 = vmul.f32 %v3003, %v3003
          %v3006 = vmul.f32 %v3004, %v3004
          %v3007 = vsel %vm2994, %v3005, 0.0
          %3008 = vadd.xlane.f32.xlu0 %v3007
          %v3009 = vpop.xlane.xlu0 %3008
          %v3010 = vsel %vm2994, %v3006, 0.0
          %3011 = vadd.xlane.f32.xlu0 %v3010
          %v3012 = vpop.xlane.xlu0 %3011
          %v3013 = vmul.f32 %v3009, %v538
          %v3014 = vmul.f32 %v3012, %v538
          %v3015 = vadd.f32 %v3013, 1e-05
          %v3016 = vadd.f32 %v3014, 1e-05
          %v3017 = vrsqrt.pop %v3015
          %v3018 = vrsqrt.pop %v3016
          %v3019 = vmul.f32 %v3003, %v3017
          %v3020 = vmul.f32 %v3004, %v3018
          %v3022 = vlaneseq
          %v3023 = vshrl.u32 %v3022, 7
          %v3024 = vsub.s32 0, %v3023
          %v3025 = vrot.slane %v2992, %v3024
          %v3027 = vmul.f32 %v3019, %v3025
          %v3028 = vmul.f32 %v3020, %v3025
          %v3030 = vlaneseq
          %v3031 = vshrl.u32 %v3030, 7
          %v3032 = vsub.s32 0, %v3031
          %v3033 = vrot.slane %v2993, %v3032
          %v3035 = vadd.f32 %v3027, %v3033
          %v3036 = vadd.f32 %v3028, %v3033
          %3037 = vst.msk [vmem:[#allocation3 - $0x7] sm:$0x80] %vm2994, %v3035
          %3038 = vst.msk [vmem:[#allocation3 - $0x6] sm:$0x80] %vm2994, %v3036
        $region72: #{tpu_custom_call.1} parent=63 // pred_fallthru
          _
        // Predicated region
        $region73: #{tpu_custom_call.1} parent=63 // pred_check
          %p3039 = pneg %p324
        $region74: #{tpu_custom_call.1} parent=63 // pred_check_branch
          %3041 = sbr.rel (%p3039) target = $region76
        $region75: #{tpu_custom_call.1} parent=63 // pred_region
          %s3042 = smul.u32 2, %s27
          %s3044 = ssub.s32 32, 32
          %3045 = vsyncadd [#allocation4], %s3044
          %s3046 = smul.addr %s3042, 16
          %s3047 = scalar_lea.hbm %s11, %s3046
          %s3048 = sshll.u32 [#allocation3], 4
          %s3049 = int_to_ptr.vmem [resolvable:$true] %s3048
          %3054 = dma.vmem_to_hbm [thread:$0]  %s3049, 32, %s3047, [#allocation4], 16, 16, 1
        $region76: #{tpu_custom_call.1} parent=63 // pred_fallthru
          _
        // Predicated region
        $region77: #{tpu_custom_call.1} parent=63 // pred_check
          %p3055 = pneg %p324
        $region78: #{tpu_custom_call.1} parent=63 // pred_check_branch
          %3057 = sbr.rel (%p3055) target = $region80
        $region79: #{tpu_custom_call.1} parent=63 // pred_region
          %3058 = dma.done [#allocation4], 32
        $region80: #{tpu_custom_call.1} parent=63 // pred_fallthru
          _
      $region64: #{tpu_custom_call.1} parent=5 // pred_fallthru
        _
      %p3059 = scmp.le.s32.totalorder 2, %s18
      // Predicated region
      $region81: #{tpu_custom_call.1} parent=5 // pred_check
        %p3060 = pneg %p3059
      $region82: #{tpu_custom_call.1} parent=5 // pred_check_branch
        %3062 = sbr.rel (%p3060) target = $region84
      $region83: #{tpu_custom_call.1} parent=5 // pred_region
        %s3063 = ssub.s32 %s18, 2
      $region84: #{tpu_custom_call.1} parent=5 // pred_fallthru
        _
    $region6: #{tpu_custom_call.1} parent=1 // loop_footer
      %s22 = sadd.s32 1, %s18
    $region7: #{tpu_custom_call.1} parent=1 // loop_footer_branch
      %17 = sbr.rel target = $region3
    $region8: #{tpu_custom_call.1} parent=1 // loop_exit
      _
    %3064 = vsyncpa [#allocation4], 1
    %s3065 = scalar_lea.sflag [#allocation4], 1
    %3066 = vsyncpa %s3065, 1

</llo_original>
